<compile_context>
chip_gen: v7x
topology: tpu7x:2x2x1
jax: 0.10.0
libtpu: 0.0.40
codegen_flags: <defaults>
</compile_context>

<pallas_src>
import functools
import math

import jax
import jax.numpy as jnp
from jax.experimental import pallas as pl
from jax.experimental.pallas import tpu as pltpu


# ----------------------------------------------------------------------------
# Fused Pallas kernel: the whole GATNet forward
# ----------------------------------------------------------------------------
def _gatnet_kernel(x_ref, maskb_ref, maskd_ref,
                   w_in_ref, g_in_ref, be_in_ref,
                   w_hid_ref, g_hid_ref, be_hid_ref,
                   w_out_ref, b_out_ref, o_ref,
                   *, c_hid, c_out, alpha, eps, num_hidden):
    mask_b = maskb_ref[...]   # (BN, BN) additive mask: 0 on (same-batch & edge), -9e15 else
    mask_d = maskd_ref[...]   # (BN, 1)  diagonal of mask_b

    def leaky(v):
        return jnp.where(v > 0, v, alpha * v)

    def gat_conv(h_in, w_all, cout, bias=None):
        # h_in: (BN, Cin) ; w_all = [w0 | w1 | Wa] : (Cin, 2*cout + 2)
        hall = jnp.dot(h_in, w_all, preferred_element_type=jnp.float32)
        h0 = hall[:, :cout]                          # (BN, cout)
        h1 = hall[:, cout:2 * cout]                  # (BN, cout)
        fs = hall[:, 2 * cout:2 * cout + 1]          # (BN, 1) = (h0+h1) @ a[:cout]
        fd = hall[:, 2 * cout + 1:2 * cout + 2]      # (BN, 1) = (h0+h1) @ a[cout:]

        # e[i, j] = leakyrelu(fs[i] + fd[j]) + mask ; softmax over j
        e = leaky(fs + jnp.transpose(fd)) + mask_b   # (BN, BN)
        e_max = jnp.max(e, axis=-1, keepdims=True)
        p = jnp.exp(e - e_max)
        inv_z = pl.reciprocal(jnp.sum(p, axis=-1, keepdims=True), approx=True)
        att = p * inv_z                              # (BN, BN), ~0 off-block / non-edge

        # diag(att) in closed form (no iota / masked reduce); diagonal of e is
        # leaky(fs[i]+fd[i]) + mask_b[i,i].
        diag_att = jnp.exp(leaky(fs + fd) + mask_d - e_max) * inv_z   # (BN, 1)

        # (att*M)@h0 + (att*(1-M))@h1  ==  att@h1 + diag(att)*(h0 - h1)
        hp = jnp.dot(att, h1, preferred_element_type=jnp.float32)
        out = hp + diag_att * (h0 - h1)              # (BN, cout)
        if bias is not None:                         # only the output conv keeps its bias;
            out = out + bias                         # pre-BN biases are no-ops (mean-subtracted)
        return out

    def bn_relu(h, gamma, beta):
        # Training-mode BatchNorm1d per channel over all B*N samples, then ReLU.
        mean = jnp.mean(h, axis=0, keepdims=True)
        var = jnp.mean((h - mean) ** 2, axis=0, keepdims=True)
        scale = jax.lax.rsqrt(var + eps) * gamma     # fold rsqrt * gamma once per layer
        y = (h - mean) * scale + beta
        return jnp.maximum(y, jnp.float32(0.0))

    # Input GATBlock
    h = gat_conv(x_ref[...], w_in_ref[...], c_hid)
    h = bn_relu(h, g_in_ref[...], be_in_ref[...])

    # Residual GAT layers (2 GATBlocks per residual layer), statically unrolled so that
    # the stacked weight refs are sliced with static indices.
    for l in range(num_hidden):
        if l % 2 == 0:
            res = h
        h = gat_conv(h, w_hid_ref[l], c_hid)
        h = bn_relu(h, g_hid_ref[l], be_hid_ref[l])
        if l % 2 == 1:
            h = h + res   # identity shortcut (in_channels == out_channels)

    # Output GATConv (no BN / ReLU -> bias matters here)
    o_ref[...] = gat_conv(h, w_out_ref[...], c_out, bias=b_out_ref[...])


# ----------------------------------------------------------------------------
# Wrapper: parameter folding + single pallas_call
# ----------------------------------------------------------------------------
def _fold_conv(p):
    """[w0 | w1 | (w0+w1) @ [a_src a_dst]] : one projection matmul per conv."""
    w0, w1, a = p["w0"], p["w1"], p["a"]
    cout = w0.shape[1]
    wa = jnp.dot(w0 + w1, jnp.concatenate([a[:cout], a[cout:]], axis=1))  # (Cin, 2)
    return jnp.concatenate([w0, w1, wa], axis=1), p["bias"]


def gatnet_forward(x, params, adj, *, alpha=0.2, eps=1e-5):
    B, N, c_in = x.shape
    c_hid = params["input"]["conv"]["w0"].shape[1]
    c_out = params["out_conv"]["w0"].shape[1]
    BN = B * N
    num_hidden = 2 * len(params["layers"])

    # Additive block-diagonal mask: 0 where (same batch element AND adj>0), -9e15 else.
    bid = jnp.arange(BN) // N
    same = bid[:, None] == bid[None, :]
    adj_tiled = jnp.tile(adj, (B, B)) > 0
    mask_b = jnp.where(same & adj_tiled, 0.0, -9e15).astype(jnp.float32)   # (BN, BN)
    mask_d = jnp.diagonal(mask_b)[:, None]                                  # (BN, 1)

    w_in, _ = _fold_conv(params["input"]["conv"])          # pre-BN bias elided
    g_in, be_in = params["input"]["gamma"], params["input"]["beta"]

    w_h, g_h, be_h = [], [], []
    for lp in params["layers"]:
        for blk in (lp["block1"], lp["block2"]):
            w, _ = _fold_conv(blk["conv"])                  # pre-BN bias elided
            w_h.append(w)
            g_h.append(blk["gamma"])
            be_h.append(blk["beta"])
    w_h = jnp.stack(w_h)     # (L, c_hid, 2*c_hid+2)
    g_h = jnp.stack(g_h)     # (L, 1, c_hid)
    be_h = jnp.stack(be_h)   # (L, 1, c_hid)

    w_out, b_out = _fold_conv(params["out_conv"])

    kern = functools.partial(_gatnet_kernel, c_hid=c_hid, c_out=c_out,
                             alpha=alpha, eps=eps, num_hidden=num_hidden)
    # Single invocation (no grid): every operand is a whole-array VMEM block.
    # Note (v7x): with no grid the second TensorCore idles — acceptable here since the
    # net is launch/DMA-bound at this size; reintroduce a parallel batch/node grid
    # axis if B or N grows.
    out = pl.pallas_call(
        kern,
        out_shape=jax.ShapeDtypeStruct((BN, c_out), jnp.float32),
    )(x.reshape(BN, c_in), mask_b, mask_d,
      w_in, g_in, be_in,
      w_h, g_h, be_h,
      w_out, b_out)
    return out.reshape(B, N, c_out)


# ----------------------------------------------------------------------------
# Parameter init (deterministic, mirrors the PyTorch __init__ shapes)
# ----------------------------------------------------------------------------
def init_gat_conv_params(key, cin, cout):
    kw, ka, kb = jax.random.split(key, 3)
    gain = 1.414
    # xavier_uniform_ on W of shape (2, cin, cout): fan_in = cin*cout, fan_out = 2*cout
    bw = gain * math.sqrt(6.0 / (cin * cout + 2 * cout))
    W = jax.random.uniform(kw, (2, cin, cout), jnp.float32, -bw, bw)
    # xavier_uniform_ on a of shape (2*cout, 1): fan_in = 1, fan_out = 2*cout
    ba = gain * math.sqrt(6.0 / (1 + 2 * cout))
    a = jax.random.uniform(ka, (2 * cout, 1), jnp.float32, -ba, ba)
    stdv = 1.0 / math.sqrt(cout)
    bias = jax.random.uniform(kb, (1, cout), jnp.float32, -stdv, stdv)
    return {"w0": W[0], "w1": W[1], "a": a, "bias": bias}


def init_gat_block_params(key, cin, cout):
    return {
        "conv": init_gat_conv_params(key, cin, cout),
        "gamma": jnp.ones((1, cout), jnp.float32),
        "beta": jnp.zeros((1, cout), jnp.float32),
    }


def init_res_gat_block_params(key, cin, cout, chid):
    k1, k2 = jax.random.split(key)
    # in_channels == out_channels in GATNet -> no Conv1d shortcut
    return {
        "block1": init_gat_block_params(k1, cin, chid),
        "block2": init_gat_block_params(k2, chid, cout),
    }


def init_gatnet_params(key, cin, cout, chid, num_layers=4):
    keys = jax.random.split(key, num_layers + 2)
    return {
        "input": init_gat_block_params(keys[0], cin, chid),
        "layers": [init_res_gat_block_params(keys[1 + i], chid, chid, chid)
                   for i in range(num_layers)],
        "out_conv": init_gat_conv_params(keys[-1], chid, cout),
    }


# ----------------------------------------------------------------------------
# Plain-JAX reference (mirrors the PyTorch module exactly, incl. all biases)
# ----------------------------------------------------------------------------
def _gat_conv_ref(x, p, adj, alpha=0.2):
    h0 = x @ p["w0"]
    h1 = x @ p["w1"]
    h = h0 + h1
    cout = p["w0"].shape[1]
    f_src = h @ p["a"][:cout]                      # (B, N, 1)
    f_dst = h @ p["a"][cout:]                      # (B, N, 1)
    e = f_src + jnp.swapaxes(f_dst, 1, 2)          # (B, N, N)
    e = jnp.where(e > 0, e, alpha * e)
    e = jnp.where(adj[None] > 0, e, jnp.float32(-9e15))
    att = jax.nn.softmax(e, axis=-1)
    eye = jnp.eye(adj.shape[0], dtype=jnp.float32)
    hp = (att * eye) @ h0 + (att * (1.0 - eye)) @ h1
    return hp + p["bias"]


def _bn_relu_ref(x, gamma, beta, eps=1e-5):
    mean = x.mean(axis=(0, 1), keepdims=True)
    var = ((x - mean) ** 2).mean(axis=(0, 1), keepdims=True)
    y = (x - mean) / jnp.sqrt(var + eps) * gamma[None] + beta[None]
    return jnp.maximum(y, 0.0)


def gatnet_ref(x, params, adj):
    def block(h, bp):
        h = _gat_conv_ref(h, bp["conv"], adj)
        return _bn_relu_ref(h, bp["gamma"], bp["beta"])
    out = block(x, params["input"])
    for lp in params["layers"]:
        res = out
        out = block(out, lp["block1"])
        out = block(out, lp["block2"])
        out = out + res
    return _gat_conv_ref(out, params["out_conv"], adj)


# ----------------------------------------------------------------------------
# Main
# ----------------------------------------------------------------------------
if __name__ == "__main__":
    B, N = 2, 16                  # batch, number of graph nodes (adj is N x N)
    C_IN, C_HID, C_OUT = 4, 32, 8
    NUM_LAYERS = 4

    key = jax.random.PRNGKey(0)
    k_params, k_x = jax.random.split(key)

    # deterministic ring adjacency with self-loops
    idx = jnp.arange(N)
    d = (idx[:, None] - idx[None, :]) % N
    adj = ((d == 0) | (d == 1) | (d == N - 1)).astype(jnp.float32)  # (N, N)

    params = init_gatnet_params(k_params, C_IN, C_OUT, C_HID, NUM_LAYERS)
    x = jax.random.normal(k_x, (B, N, C_IN), jnp.float32)

    y = jax.jit(lambda xx: gatnet_forward(xx, params, adj))(x)
    jax.block_until_ready(y)

    assert y.shape == (B, N, C_OUT), y.shape
    assert jnp.all(jnp.isfinite(y))

    # Validate against the straightforward (unfused) reference.
    y_ref = gatnet_ref(x, params, adj)
    max_err = float(jnp.max(jnp.abs(y - y_ref)))
    scale = 1.0 + float(jnp.max(jnp.abs(y_ref)))
    assert max_err < 5e-2 * scale, (max_err, scale)

    print("KERNEL_OK")
</pallas_src>

<mosaic_0001>
module attributes {stable_mosaic.version = 11 : i64} {
  func.func @_gatnet_kernel(%arg0: memref<32x4xf32, #tpu.memory_space<vmem>>, %arg1: memref<32x32xf32, #tpu.memory_space<vmem>>, %arg2: memref<32x1xf32, #tpu.memory_space<vmem>>, %arg3: memref<4x66xf32, #tpu.memory_space<vmem>>, %arg4: memref<1x32xf32, #tpu.memory_space<vmem>>, %arg5: memref<1x32xf32, #tpu.memory_space<vmem>>, %arg6: memref<8x32x66xf32, #tpu.memory_space<vmem>>, %arg7: memref<8x1x32xf32, #tpu.memory_space<vmem>>, %arg8: memref<8x1x32xf32, #tpu.memory_space<vmem>>, %arg9: memref<32x18xf32, #tpu.memory_space<vmem>>, %arg10: memref<1x8xf32, #tpu.memory_space<vmem>>, %arg11: memref<32x8xf32, #tpu.memory_space<vmem>>) attributes {dimension_semantics = [], scalar_prefetch = 0 : i64, scratch_operands = 0 : i64, tpu.core_type = #tpu.core_type<tc>} {
    %c0 = arith.constant 0 : index
    %c0_0 = arith.constant 0 : index
    %0 = vector.load %arg1[%c0, %c0_0] : memref<32x32xf32, #tpu.memory_space<vmem>>, vector<32x32xf32>
    %c0_1 = arith.constant 0 : index
    %c0_2 = arith.constant 0 : index
    %1 = vector.load %arg2[%c0_1, %c0_2] : memref<32x1xf32, #tpu.memory_space<vmem>>, vector<32x1xf32>
    %c0_3 = arith.constant 0 : index
    %c0_4 = arith.constant 0 : index
    %2 = vector.load %arg0[%c0_3, %c0_4] : memref<32x4xf32, #tpu.memory_space<vmem>>, vector<32x4xf32>
    %c0_5 = arith.constant 0 : index
    %c0_6 = arith.constant 0 : index
    %3 = vector.load %arg3[%c0_5, %c0_6] : memref<4x66xf32, #tpu.memory_space<vmem>>, vector<4x66xf32>
    %cst = arith.constant dense<0.000000e+00> : vector<32x66xf32>
    %4 = tpu.matmul %2, %3, %cst {dimension_numbers = #tpu.dot_dimension_numbers<[1], [0], [0], [1], [0, 0, 1, 1], [], []>} : vector<32x4xf32>, vector<4x66xf32>, vector<32x66xf32> -> vector<32x66xf32>
    %5 = vector.extract_strided_slice %4 {offsets = [0, 0], sizes = [32, 32], strides = [1, 1]} : vector<32x66xf32> to vector<32x32xf32>
    %6 = vector.extract_strided_slice %4 {offsets = [0, 32], sizes = [32, 32], strides = [1, 1]} : vector<32x66xf32> to vector<32x32xf32>
    %7 = vector.extract_strided_slice %4 {offsets = [0, 64], sizes = [32, 1], strides = [1, 1]} : vector<32x66xf32> to vector<32x1xf32>
    %8 = vector.extract_strided_slice %4 {offsets = [0, 65], sizes = [32, 1], strides = [1, 1]} : vector<32x66xf32> to vector<32x1xf32>
    %9 = tpu.transpose %8, [1, 0] : vector<32x1xf32> -> vector<1x32xf32>
    %10 = vector.broadcast %7 : vector<32x1xf32> to vector<32x32xf32>
    %11 = vector.broadcast %9 : vector<1x32xf32> to vector<32x32xf32>
    %12 = arith.addf %10, %11 : vector<32x32xf32>
    %cst_7 = arith.constant 0.000000e+00 : f32
    %13 = vector.broadcast %cst_7 : f32 to vector<32x32xf32>
    %14 = arith.cmpf ogt, %12, %13 : vector<32x32xf32>
    %cst_8 = arith.constant 2.000000e-01 : f32
    %15 = vector.broadcast %cst_8 : f32 to vector<32x32xf32>
    %16 = arith.mulf %15, %12 : vector<32x32xf32>
    %17 = arith.select %14, %12, %16 : vector<32x32xi1>, vector<32x32xf32>
    %18 = arith.addf %17, %0 : vector<32x32xf32>
    %cst_9 = arith.constant dense<0xFF800000> : vector<32xf32>
    %19 = vector.multi_reduction <maximumf>, %18, %cst_9 [1] : vector<32x32xf32> to vector<32xf32>
    %20 = vector.shape_cast %19 : vector<32xf32> to vector<32x1xf32>
    %21 = vector.broadcast %20 : vector<32x1xf32> to vector<32x32xf32>
    %22 = arith.subf %18, %21 : vector<32x32xf32>
    %23 = math.exp %22 : vector<32x32xf32>
    %cst_10 = arith.constant dense<0.000000e+00> : vector<32xf32>
    %24 = vector.multi_reduction <add>, %23, %cst_10 [1] : vector<32x32xf32> to vector<32xf32>
    %25 = vector.shape_cast %24 : vector<32xf32> to vector<32x1xf32>
    %26 = tpu.reciprocal %25 {approx = true} : vector<32x1xf32> -> vector<32x1xf32>
    %27 = vector.broadcast %26 : vector<32x1xf32> to vector<32x32xf32>
    %28 = arith.mulf %23, %27 : vector<32x32xf32>
    %29 = arith.addf %7, %8 : vector<32x1xf32>
    %cst_11 = arith.constant 0.000000e+00 : f32
    %30 = vector.broadcast %cst_11 : f32 to vector<32x1xf32>
    %31 = arith.cmpf ogt, %29, %30 : vector<32x1xf32>
    %cst_12 = arith.constant 2.000000e-01 : f32
    %32 = vector.broadcast %cst_12 : f32 to vector<32x1xf32>
    %33 = arith.mulf %32, %29 : vector<32x1xf32>
    %34 = arith.select %31, %29, %33 : vector<32x1xi1>, vector<32x1xf32>
    %35 = arith.addf %34, %1 : vector<32x1xf32>
    %36 = arith.subf %35, %20 : vector<32x1xf32>
    %37 = math.exp %36 : vector<32x1xf32>
    %38 = arith.mulf %37, %26 : vector<32x1xf32>
    %cst_13 = arith.constant dense<0.000000e+00> : vector<32x32xf32>
    %39 = tpu.matmul %28, %6, %cst_13 {dimension_numbers = #tpu.dot_dimension_numbers<[1], [0], [0], [1], [0, 0, 1, 1], [], []>} : vector<32x32xf32>, vector<32x32xf32>, vector<32x32xf32> -> vector<32x32xf32>
    %40 = arith.subf %5, %6 : vector<32x32xf32>
    %41 = vector.broadcast %38 : vector<32x1xf32> to vector<32x32xf32>
    %42 = arith.mulf %41, %40 : vector<32x32xf32>
    %43 = arith.addf %39, %42 : vector<32x32xf32>
    %c0_14 = arith.constant 0 : index
    %c0_15 = arith.constant 0 : index
    %44 = vector.load %arg4[%c0_14, %c0_15] : memref<1x32xf32, #tpu.memory_space<vmem>>, vector<1x32xf32>
    %c0_16 = arith.constant 0 : index
    %c0_17 = arith.constant 0 : index
    %45 = vector.load %arg5[%c0_16, %c0_17] : memref<1x32xf32, #tpu.memory_space<vmem>>, vector<1x32xf32>
    %cst_18 = arith.constant dense<0.000000e+00> : vector<32xf32>
    %46 = vector.multi_reduction <add>, %43, %cst_18 [0] : vector<32x32xf32> to vector<32xf32>
    %47 = vector.shape_cast %46 : vector<32xf32> to vector<1x32xf32>
    %cst_19 = arith.constant 3.200000e+01 : f32
    %48 = vector.broadcast %cst_19 : f32 to vector<1x32xf32>
    %49 = arith.divf %47, %48 : vector<1x32xf32>
    %50 = vector.broadcast %49 : vector<1x32xf32> to vector<32x32xf32>
    %51 = arith.subf %43, %50 : vector<32x32xf32>
    %52 = arith.mulf %51, %51 : vector<32x32xf32>
    %cst_20 = arith.constant dense<0.000000e+00> : vector<32xf32>
    %53 = vector.multi_reduction <add>, %52, %cst_20 [0] : vector<32x32xf32> to vector<32xf32>
    %54 = vector.shape_cast %53 : vector<32xf32> to vector<1x32xf32>
    %cst_21 = arith.constant 3.200000e+01 : f32
    %55 = vector.broadcast %cst_21 : f32 to vector<1x32xf32>
    %56 = arith.divf %54, %55 : vector<1x32xf32>
    %cst_22 = arith.constant 9.99999974E-6 : f32
    %57 = vector.broadcast %cst_22 : f32 to vector<1x32xf32>
    %58 = arith.addf %56, %57 : vector<1x32xf32>
    %59 = math.rsqrt %58 : vector<1x32xf32>
    %60 = arith.mulf %59, %44 : vector<1x32xf32>
    %61 = vector.broadcast %49 : vector<1x32xf32> to vector<32x32xf32>
    %62 = arith.subf %43, %61 : vector<32x32xf32>
    %63 = vector.broadcast %60 : vector<1x32xf32> to vector<32x32xf32>
    %64 = arith.mulf %62, %63 : vector<32x32xf32>
    %65 = vector.broadcast %45 : vector<1x32xf32> to vector<32x32xf32>
    %66 = arith.addf %64, %65 : vector<32x32xf32>
    %cst_23 = arith.constant 0.000000e+00 : f32
    %67 = vector.broadcast %cst_23 : f32 to vector<32x32xf32>
    %68 = arith.maximumf %66, %67 : vector<32x32xf32>
    %c0_24 = arith.constant 0 : index
    %c0_25 = arith.constant 0 : index
    %c0_26 = arith.constant 0 : index
    %69 = vector.load %arg6[%c0_24, %c0_25, %c0_26] : memref<8x32x66xf32, #tpu.memory_space<vmem>>, vector<1x32x66xf32>
    %70 = vector.shape_cast %69 : vector<1x32x66xf32> to vector<32x66xf32>
    %cst_27 = arith.constant dense<0.000000e+00> : vector<32x66xf32>
    %71 = tpu.matmul %68, %70, %cst_27 {dimension_numbers = #tpu.dot_dimension_numbers<[1], [0], [0], [1], [0, 0, 1, 1], [], []>} : vector<32x32xf32>, vector<32x66xf32>, vector<32x66xf32> -> vector<32x66xf32>
    %72 = vector.extract_strided_slice %71 {offsets = [0, 0], sizes = [32, 32], strides = [1, 1]} : vector<32x66xf32> to vector<32x32xf32>
    %73 = vector.extract_strided_slice %71 {offsets = [0, 32], sizes = [32, 32], strides = [1, 1]} : vector<32x66xf32> to vector<32x32xf32>
    %74 = vector.extract_strided_slice %71 {offsets = [0, 64], sizes = [32, 1], strides = [1, 1]} : vector<32x66xf32> to vector<32x1xf32>
    %75 = vector.extract_strided_slice %71 {offsets = [0, 65], sizes = [32, 1], strides = [1, 1]} : vector<32x66xf32> to vector<32x1xf32>
    %76 = tpu.transpose %75, [1, 0] : vector<32x1xf32> -> vector<1x32xf32>
    %77 = vector.broadcast %74 : vector<32x1xf32> to vector<32x32xf32>
    %78 = vector.broadcast %76 : vector<1x32xf32> to vector<32x32xf32>
    %79 = arith.addf %77, %78 : vector<32x32xf32>
    %cst_28 = arith.constant 0.000000e+00 : f32
    %80 = vector.broadcast %cst_28 : f32 to vector<32x32xf32>
    %81 = arith.cmpf ogt, %79, %80 : vector<32x32xf32>
    %cst_29 = arith.constant 2.000000e-01 : f32
    %82 = vector.broadcast %cst_29 : f32 to vector<32x32xf32>
    %83 = arith.mulf %82, %79 : vector<32x32xf32>
    %84 = arith.select %81, %79, %83 : vector<32x32xi1>, vector<32x32xf32>
    %85 = arith.addf %84, %0 : vector<32x32xf32>
    %cst_30 = arith.constant dense<0xFF800000> : vector<32xf32>
    %86 = vector.multi_reduction <maximumf>, %85, %cst_30 [1] : vector<32x32xf32> to vector<32xf32>
    %87 = vector.shape_cast %86 : vector<32xf32> to vector<32x1xf32>
    %88 = vector.broadcast %87 : vector<32x1xf32> to vector<32x32xf32>
    %89 = arith.subf %85, %88 : vector<32x32xf32>
    %90 = math.exp %89 : vector<32x32xf32>
    %cst_31 = arith.constant dense<0.000000e+00> : vector<32xf32>
    %91 = vector.multi_reduction <add>, %90, %cst_31 [1] : vector<32x32xf32> to vector<32xf32>
    %92 = vector.shape_cast %91 : vector<32xf32> to vector<32x1xf32>
    %93 = tpu.reciprocal %92 {approx = true} : vector<32x1xf32> -> vector<32x1xf32>
    %94 = vector.broadcast %93 : vector<32x1xf32> to vector<32x32xf32>
    %95 = arith.mulf %90, %94 : vector<32x32xf32>
    %96 = arith.addf %74, %75 : vector<32x1xf32>
    %cst_32 = arith.constant 0.000000e+00 : f32
    %97 = vector.broadcast %cst_32 : f32 to vector<32x1xf32>
    %98 = arith.cmpf ogt, %96, %97 : vector<32x1xf32>
    %cst_33 = arith.constant 2.000000e-01 : f32
    %99 = vector.broadcast %cst_33 : f32 to vector<32x1xf32>
    %100 = arith.mulf %99, %96 : vector<32x1xf32>
    %101 = arith.select %98, %96, %100 : vector<32x1xi1>, vector<32x1xf32>
    %102 = arith.addf %101, %1 : vector<32x1xf32>
    %103 = arith.subf %102, %87 : vector<32x1xf32>
    %104 = math.exp %103 : vector<32x1xf32>
    %105 = arith.mulf %104, %93 : vector<32x1xf32>
    %cst_34 = arith.constant dense<0.000000e+00> : vector<32x32xf32>
    %106 = tpu.matmul %95, %73, %cst_34 {dimension_numbers = #tpu.dot_dimension_numbers<[1], [0], [0], [1], [0, 0, 1, 1], [], []>} : vector<32x32xf32>, vector<32x32xf32>, vector<32x32xf32> -> vector<32x32xf32>
    %107 = arith.subf %72, %73 : vector<32x32xf32>
    %108 = vector.broadcast %105 : vector<32x1xf32> to vector<32x32xf32>
    %109 = arith.mulf %108, %107 : vector<32x32xf32>
    %110 = arith.addf %106, %109 : vector<32x32xf32>
    %c0_35 = arith.constant 0 : index
    %c0_36 = arith.constant 0 : index
    %c0_37 = arith.constant 0 : index
    %111 = vector.load %arg7[%c0_35, %c0_36, %c0_37] : memref<8x1x32xf32, #tpu.memory_space<vmem>>, vector<1x1x32xf32>
    %112 = vector.shape_cast %111 : vector<1x1x32xf32> to vector<1x32xf32>
    %c0_38 = arith.constant 0 : index
    %c0_39 = arith.constant 0 : index
    %c0_40 = arith.constant 0 : index
    %113 = vector.load %arg8[%c0_38, %c0_39, %c0_40] : memref<8x1x32xf32, #tpu.memory_space<vmem>>, vector<1x1x32xf32>
    %114 = vector.shape_cast %113 : vector<1x1x32xf32> to vector<1x32xf32>
    %cst_41 = arith.constant dense<0.000000e+00> : vector<32xf32>
    %115 = vector.multi_reduction <add>, %110, %cst_41 [0] : vector<32x32xf32> to vector<32xf32>
    %116 = vector.shape_cast %115 : vector<32xf32> to vector<1x32xf32>
    %cst_42 = arith.constant 3.200000e+01 : f32
    %117 = vector.broadcast %cst_42 : f32 to vector<1x32xf32>
    %118 = arith.divf %116, %117 : vector<1x32xf32>
    %119 = vector.broadcast %118 : vector<1x32xf32> to vector<32x32xf32>
    %120 = arith.subf %110, %119 : vector<32x32xf32>
    %121 = arith.mulf %120, %120 : vector<32x32xf32>
    %cst_43 = arith.constant dense<0.000000e+00> : vector<32xf32>
    %122 = vector.multi_reduction <add>, %121, %cst_43 [0] : vector<32x32xf32> to vector<32xf32>
    %123 = vector.shape_cast %122 : vector<32xf32> to vector<1x32xf32>
    %cst_44 = arith.constant 3.200000e+01 : f32
    %124 = vector.broadcast %cst_44 : f32 to vector<1x32xf32>
    %125 = arith.divf %123, %124 : vector<1x32xf32>
    %cst_45 = arith.constant 9.99999974E-6 : f32
    %126 = vector.broadcast %cst_45 : f32 to vector<1x32xf32>
    %127 = arith.addf %125, %126 : vector<1x32xf32>
    %128 = math.rsqrt %127 : vector<1x32xf32>
    %129 = arith.mulf %128, %112 : vector<1x32xf32>
    %130 = vector.broadcast %118 : vector<1x32xf32> to vector<32x32xf32>
    %131 = arith.subf %110, %130 : vector<32x32xf32>
    %132 = vector.broadcast %129 : vector<1x32xf32> to vector<32x32xf32>
    %133 = arith.mulf %131, %132 : vector<32x32xf32>
    %134 = vector.broadcast %114 : vector<1x32xf32> to vector<32x32xf32>
    %135 = arith.addf %133, %134 : vector<32x32xf32>
    %cst_46 = arith.constant 0.000000e+00 : f32
    %136 = vector.broadcast %cst_46 : f32 to vector<32x32xf32>
    %137 = arith.maximumf %135, %136 : vector<32x32xf32>
    %c1 = arith.constant 1 : index
    %c0_47 = arith.constant 0 : index
    %c0_48 = arith.constant 0 : index
    %138 = vector.load %arg6[%c1, %c0_47, %c0_48] : memref<8x32x66xf32, #tpu.memory_space<vmem>>, vector<1x32x66xf32>
    %139 = vector.shape_cast %138 : vector<1x32x66xf32> to vector<32x66xf32>
    %cst_49 = arith.constant dense<0.000000e+00> : vector<32x66xf32>
    %140 = tpu.matmul %137, %139, %cst_49 {dimension_numbers = #tpu.dot_dimension_numbers<[1], [0], [0], [1], [0, 0, 1, 1], [], []>} : vector<32x32xf32>, vector<32x66xf32>, vector<32x66xf32> -> vector<32x66xf32>
    %141 = vector.extract_strided_slice %140 {offsets = [0, 0], sizes = [32, 32], strides = [1, 1]} : vector<32x66xf32> to vector<32x32xf32>
    %142 = vector.extract_strided_slice %140 {offsets = [0, 32], sizes = [32, 32], strides = [1, 1]} : vector<32x66xf32> to vector<32x32xf32>
    %143 = vector.extract_strided_slice %140 {offsets = [0, 64], sizes = [32, 1], strides = [1, 1]} : vector<32x66xf32> to vector<32x1xf32>
    %144 = vector.extract_strided_slice %140 {offsets = [0, 65], sizes = [32, 1], strides = [1, 1]} : vector<32x66xf32> to vector<32x1xf32>
    %145 = tpu.transpose %144, [1, 0] : vector<32x1xf32> -> vector<1x32xf32>
    %146 = vector.broadcast %143 : vector<32x1xf32> to vector<32x32xf32>
    %147 = vector.broadcast %145 : vector<1x32xf32> to vector<32x32xf32>
    %148 = arith.addf %146, %147 : vector<32x32xf32>
    %cst_50 = arith.constant 0.000000e+00 : f32
    %149 = vector.broadcast %cst_50 : f32 to vector<32x32xf32>
    %150 = arith.cmpf ogt, %148, %149 : vector<32x32xf32>
    %cst_51 = arith.constant 2.000000e-01 : f32
    %151 = vector.broadcast %cst_51 : f32 to vector<32x32xf32>
    %152 = arith.mulf %151, %148 : vector<32x32xf32>
    %153 = arith.select %150, %148, %152 : vector<32x32xi1>, vector<32x32xf32>
    %154 = arith.addf %153, %0 : vector<32x32xf32>
    %cst_52 = arith.constant dense<0xFF800000> : vector<32xf32>
    %155 = vector.multi_reduction <maximumf>, %154, %cst_52 [1] : vector<32x32xf32> to vector<32xf32>
    %156 = vector.shape_cast %155 : vector<32xf32> to vector<32x1xf32>
    %157 = vector.broadcast %156 : vector<32x1xf32> to vector<32x32xf32>
    %158 = arith.subf %154, %157 : vector<32x32xf32>
    %159 = math.exp %158 : vector<32x32xf32>
    %cst_53 = arith.constant dense<0.000000e+00> : vector<32xf32>
    %160 = vector.multi_reduction <add>, %159, %cst_53 [1] : vector<32x32xf32> to vector<32xf32>
    %161 = vector.shape_cast %160 : vector<32xf32> to vector<32x1xf32>
    %162 = tpu.reciprocal %161 {approx = true} : vector<32x1xf32> -> vector<32x1xf32>
    %163 = vector.broadcast %162 : vector<32x1xf32> to vector<32x32xf32>
    %164 = arith.mulf %159, %163 : vector<32x32xf32>
    %165 = arith.addf %143, %144 : vector<32x1xf32>
    %cst_54 = arith.constant 0.000000e+00 : f32
    %166 = vector.broadcast %cst_54 : f32 to vector<32x1xf32>
    %167 = arith.cmpf ogt, %165, %166 : vector<32x1xf32>
    %cst_55 = arith.constant 2.000000e-01 : f32
    %168 = vector.broadcast %cst_55 : f32 to vector<32x1xf32>
    %169 = arith.mulf %168, %165 : vector<32x1xf32>
    %170 = arith.select %167, %165, %169 : vector<32x1xi1>, vector<32x1xf32>
    %171 = arith.addf %170, %1 : vector<32x1xf32>
    %172 = arith.subf %171, %156 : vector<32x1xf32>
    %173 = math.exp %172 : vector<32x1xf32>
    %174 = arith.mulf %173, %162 : vector<32x1xf32>
    %cst_56 = arith.constant dense<0.000000e+00> : vector<32x32xf32>
    %175 = tpu.matmul %164, %142, %cst_56 {dimension_numbers = #tpu.dot_dimension_numbers<[1], [0], [0], [1], [0, 0, 1, 1], [], []>} : vector<32x32xf32>, vector<32x32xf32>, vector<32x32xf32> -> vector<32x32xf32>
    %176 = arith.subf %141, %142 : vector<32x32xf32>
    %177 = vector.broadcast %174 : vector<32x1xf32> to vector<32x32xf32>
    %178 = arith.mulf %177, %176 : vector<32x32xf32>
    %179 = arith.addf %175, %178 : vector<32x32xf32>
    %c1_57 = arith.constant 1 : index
    %c0_58 = arith.constant 0 : index
    %c0_59 = arith.constant 0 : index
    %180 = vector.load %arg7[%c1_57, %c0_58, %c0_59] : memref<8x1x32xf32, #tpu.memory_space<vmem>>, vector<1x1x32xf32>
    %181 = vector.shape_cast %180 : vector<1x1x32xf32> to vector<1x32xf32>
    %c1_60 = arith.constant 1 : index
    %c0_61 = arith.constant 0 : index
    %c0_62 = arith.constant 0 : index
    %182 = vector.load %arg8[%c1_60, %c0_61, %c0_62] : memref<8x1x32xf32, #tpu.memory_space<vmem>>, vector<1x1x32xf32>
    %183 = vector.shape_cast %182 : vector<1x1x32xf32> to vector<1x32xf32>
    %cst_63 = arith.constant dense<0.000000e+00> : vector<32xf32>
    %184 = vector.multi_reduction <add>, %179, %cst_63 [0] : vector<32x32xf32> to vector<32xf32>
    %185 = vector.shape_cast %184 : vector<32xf32> to vector<1x32xf32>
    %cst_64 = arith.constant 3.200000e+01 : f32
    %186 = vector.broadcast %cst_64 : f32 to vector<1x32xf32>
    %187 = arith.divf %185, %186 : vector<1x32xf32>
    %188 = vector.broadcast %187 : vector<1x32xf32> to vector<32x32xf32>
    %189 = arith.subf %179, %188 : vector<32x32xf32>
    %190 = arith.mulf %189, %189 : vector<32x32xf32>
    %cst_65 = arith.constant dense<0.000000e+00> : vector<32xf32>
    %191 = vector.multi_reduction <add>, %190, %cst_65 [0] : vector<32x32xf32> to vector<32xf32>
    %192 = vector.shape_cast %191 : vector<32xf32> to vector<1x32xf32>
    %cst_66 = arith.constant 3.200000e+01 : f32
    %193 = vector.broadcast %cst_66 : f32 to vector<1x32xf32>
    %194 = arith.divf %192, %193 : vector<1x32xf32>
    %cst_67 = arith.constant 9.99999974E-6 : f32
    %195 = vector.broadcast %cst_67 : f32 to vector<1x32xf32>
    %196 = arith.addf %194, %195 : vector<1x32xf32>
    %197 = math.rsqrt %196 : vector<1x32xf32>
    %198 = arith.mulf %197, %181 : vector<1x32xf32>
    %199 = vector.broadcast %187 : vector<1x32xf32> to vector<32x32xf32>
    %200 = arith.subf %179, %199 : vector<32x32xf32>
    %201 = vector.broadcast %198 : vector<1x32xf32> to vector<32x32xf32>
    %202 = arith.mulf %200, %201 : vector<32x32xf32>
    %203 = vector.broadcast %183 : vector<1x32xf32> to vector<32x32xf32>
    %204 = arith.addf %202, %203 : vector<32x32xf32>
    %cst_68 = arith.constant 0.000000e+00 : f32
    %205 = vector.broadcast %cst_68 : f32 to vector<32x32xf32>
    %206 = arith.maximumf %204, %205 : vector<32x32xf32>
    %207 = arith.addf %206, %68 : vector<32x32xf32>
    %c2 = arith.constant 2 : index
    %c0_69 = arith.constant 0 : index
    %c0_70 = arith.constant 0 : index
    %208 = vector.load %arg6[%c2, %c0_69, %c0_70] : memref<8x32x66xf32, #tpu.memory_space<vmem>>, vector<1x32x66xf32>
    %209 = vector.shape_cast %208 : vector<1x32x66xf32> to vector<32x66xf32>
    %cst_71 = arith.constant dense<0.000000e+00> : vector<32x66xf32>
    %210 = tpu.matmul %207, %209, %cst_71 {dimension_numbers = #tpu.dot_dimension_numbers<[1], [0], [0], [1], [0, 0, 1, 1], [], []>} : vector<32x32xf32>, vector<32x66xf32>, vector<32x66xf32> -> vector<32x66xf32>
    %211 = vector.extract_strided_slice %210 {offsets = [0, 0], sizes = [32, 32], strides = [1, 1]} : vector<32x66xf32> to vector<32x32xf32>
    %212 = vector.extract_strided_slice %210 {offsets = [0, 32], sizes = [32, 32], strides = [1, 1]} : vector<32x66xf32> to vector<32x32xf32>
    %213 = vector.extract_strided_slice %210 {offsets = [0, 64], sizes = [32, 1], strides = [1, 1]} : vector<32x66xf32> to vector<32x1xf32>
    %214 = vector.extract_strided_slice %210 {offsets = [0, 65], sizes = [32, 1], strides = [1, 1]} : vector<32x66xf32> to vector<32x1xf32>
    %215 = tpu.transpose %214, [1, 0] : vector<32x1xf32> -> vector<1x32xf32>
    %216 = vector.broadcast %213 : vector<32x1xf32> to vector<32x32xf32>
    %217 = vector.broadcast %215 : vector<1x32xf32> to vector<32x32xf32>
    %218 = arith.addf %216, %217 : vector<32x32xf32>
    %cst_72 = arith.constant 0.000000e+00 : f32
    %219 = vector.broadcast %cst_72 : f32 to vector<32x32xf32>
    %220 = arith.cmpf ogt, %218, %219 : vector<32x32xf32>
    %cst_73 = arith.constant 2.000000e-01 : f32
    %221 = vector.broadcast %cst_73 : f32 to vector<32x32xf32>
    %222 = arith.mulf %221, %218 : vector<32x32xf32>
    %223 = arith.select %220, %218, %222 : vector<32x32xi1>, vector<32x32xf32>
    %224 = arith.addf %223, %0 : vector<32x32xf32>
    %cst_74 = arith.constant dense<0xFF800000> : vector<32xf32>
    %225 = vector.multi_reduction <maximumf>, %224, %cst_74 [1] : vector<32x32xf32> to vector<32xf32>
    %226 = vector.shape_cast %225 : vector<32xf32> to vector<32x1xf32>
    %227 = vector.broadcast %226 : vector<32x1xf32> to vector<32x32xf32>
    %228 = arith.subf %224, %227 : vector<32x32xf32>
    %229 = math.exp %228 : vector<32x32xf32>
    %cst_75 = arith.constant dense<0.000000e+00> : vector<32xf32>
    %230 = vector.multi_reduction <add>, %229, %cst_75 [1] : vector<32x32xf32> to vector<32xf32>
    %231 = vector.shape_cast %230 : vector<32xf32> to vector<32x1xf32>
    %232 = tpu.reciprocal %231 {approx = true} : vector<32x1xf32> -> vector<32x1xf32>
    %233 = vector.broadcast %232 : vector<32x1xf32> to vector<32x32xf32>
    %234 = arith.mulf %229, %233 : vector<32x32xf32>
    %235 = arith.addf %213, %214 : vector<32x1xf32>
    %cst_76 = arith.constant 0.000000e+00 : f32
    %236 = vector.broadcast %cst_76 : f32 to vector<32x1xf32>
    %237 = arith.cmpf ogt, %235, %236 : vector<32x1xf32>
    %cst_77 = arith.constant 2.000000e-01 : f32
    %238 = vector.broadcast %cst_77 : f32 to vector<32x1xf32>
    %239 = arith.mulf %238, %235 : vector<32x1xf32>
    %240 = arith.select %237, %235, %239 : vector<32x1xi1>, vector<32x1xf32>
    %241 = arith.addf %240, %1 : vector<32x1xf32>
    %242 = arith.subf %241, %226 : vector<32x1xf32>
    %243 = math.exp %242 : vector<32x1xf32>
    %244 = arith.mulf %243, %232 : vector<32x1xf32>
    %cst_78 = arith.constant dense<0.000000e+00> : vector<32x32xf32>
    %245 = tpu.matmul %234, %212, %cst_78 {dimension_numbers = #tpu.dot_dimension_numbers<[1], [0], [0], [1], [0, 0, 1, 1], [], []>} : vector<32x32xf32>, vector<32x32xf32>, vector<32x32xf32> -> vector<32x32xf32>
    %246 = arith.subf %211, %212 : vector<32x32xf32>
    %247 = vector.broadcast %244 : vector<32x1xf32> to vector<32x32xf32>
    %248 = arith.mulf %247, %246 : vector<32x32xf32>
    %249 = arith.addf %245, %248 : vector<32x32xf32>
    %c2_79 = arith.constant 2 : index
    %c0_80 = arith.constant 0 : index
    %c0_81 = arith.constant 0 : index
    %250 = vector.load %arg7[%c2_79, %c0_80, %c0_81] : memref<8x1x32xf32, #tpu.memory_space<vmem>>, vector<1x1x32xf32>
    %251 = vector.shape_cast %250 : vector<1x1x32xf32> to vector<1x32xf32>
    %c2_82 = arith.constant 2 : index
    %c0_83 = arith.constant 0 : index
    %c0_84 = arith.constant 0 : index
    %252 = vector.load %arg8[%c2_82, %c0_83, %c0_84] : memref<8x1x32xf32, #tpu.memory_space<vmem>>, vector<1x1x32xf32>
    %253 = vector.shape_cast %252 : vector<1x1x32xf32> to vector<1x32xf32>
    %cst_85 = arith.constant dense<0.000000e+00> : vector<32xf32>
    %254 = vector.multi_reduction <add>, %249, %cst_85 [0] : vector<32x32xf32> to vector<32xf32>
    %255 = vector.shape_cast %254 : vector<32xf32> to vector<1x32xf32>
    %cst_86 = arith.constant 3.200000e+01 : f32
    %256 = vector.broadcast %cst_86 : f32 to vector<1x32xf32>
    %257 = arith.divf %255, %256 : vector<1x32xf32>
    %258 = vector.broadcast %257 : vector<1x32xf32> to vector<32x32xf32>
    %259 = arith.subf %249, %258 : vector<32x32xf32>
    %260 = arith.mulf %259, %259 : vector<32x32xf32>
    %cst_87 = arith.constant dense<0.000000e+00> : vector<32xf32>
    %261 = vector.multi_reduction <add>, %260, %cst_87 [0] : vector<32x32xf32> to vector<32xf32>
    %262 = vector.shape_cast %261 : vector<32xf32> to vector<1x32xf32>
    %cst_88 = arith.constant 3.200000e+01 : f32
    %263 = vector.broadcast %cst_88 : f32 to vector<1x32xf32>
    %264 = arith.divf %262, %263 : vector<1x32xf32>
    %cst_89 = arith.constant 9.99999974E-6 : f32
    %265 = vector.broadcast %cst_89 : f32 to vector<1x32xf32>
    %266 = arith.addf %264, %265 : vector<1x32xf32>
    %267 = math.rsqrt %266 : vector<1x32xf32>
    %268 = arith.mulf %267, %251 : vector<1x32xf32>
    %269 = vector.broadcast %257 : vector<1x32xf32> to vector<32x32xf32>
    %270 = arith.subf %249, %269 : vector<32x32xf32>
    %271 = vector.broadcast %268 : vector<1x32xf32> to vector<32x32xf32>
    %272 = arith.mulf %270, %271 : vector<32x32xf32>
    %273 = vector.broadcast %253 : vector<1x32xf32> to vector<32x32xf32>
    %274 = arith.addf %272, %273 : vector<32x32xf32>
    %cst_90 = arith.constant 0.000000e+00 : f32
    %275 = vector.broadcast %cst_90 : f32 to vector<32x32xf32>
    %276 = arith.maximumf %274, %275 : vector<32x32xf32>
    %c3 = arith.constant 3 : index
    %c0_91 = arith.constant 0 : index
    %c0_92 = arith.constant 0 : index
    %277 = vector.load %arg6[%c3, %c0_91, %c0_92] : memref<8x32x66xf32, #tpu.memory_space<vmem>>, vector<1x32x66xf32>
    %278 = vector.shape_cast %277 : vector<1x32x66xf32> to vector<32x66xf32>
    %cst_93 = arith.constant dense<0.000000e+00> : vector<32x66xf32>
    %279 = tpu.matmul %276, %278, %cst_93 {dimension_numbers = #tpu.dot_dimension_numbers<[1], [0], [0], [1], [0, 0, 1, 1], [], []>} : vector<32x32xf32>, vector<32x66xf32>, vector<32x66xf32> -> vector<32x66xf32>
    %280 = vector.extract_strided_slice %279 {offsets = [0, 0], sizes = [32, 32], strides = [1, 1]} : vector<32x66xf32> to vector<32x32xf32>
    %281 = vector.extract_strided_slice %279 {offsets = [0, 32], sizes = [32, 32], strides = [1, 1]} : vector<32x66xf32> to vector<32x32xf32>
    %282 = vector.extract_strided_slice %279 {offsets = [0, 64], sizes = [32, 1], strides = [1, 1]} : vector<32x66xf32> to vector<32x1xf32>
    %283 = vector.extract_strided_slice %279 {offsets = [0, 65], sizes = [32, 1], strides = [1, 1]} : vector<32x66xf32> to vector<32x1xf32>
    %284 = tpu.transpose %283, [1, 0] : vector<32x1xf32> -> vector<1x32xf32>
    %285 = vector.broadcast %282 : vector<32x1xf32> to vector<32x32xf32>
    %286 = vector.broadcast %284 : vector<1x32xf32> to vector<32x32xf32>
    %287 = arith.addf %285, %286 : vector<32x32xf32>
    %cst_94 = arith.constant 0.000000e+00 : f32
    %288 = vector.broadcast %cst_94 : f32 to vector<32x32xf32>
    %289 = arith.cmpf ogt, %287, %288 : vector<32x32xf32>
    %cst_95 = arith.constant 2.000000e-01 : f32
    %290 = vector.broadcast %cst_95 : f32 to vector<32x32xf32>
    %291 = arith.mulf %290, %287 : vector<32x32xf32>
    %292 = arith.select %289, %287, %291 : vector<32x32xi1>, vector<32x32xf32>
    %293 = arith.addf %292, %0 : vector<32x32xf32>
    %cst_96 = arith.constant dense<0xFF800000> : vector<32xf32>
    %294 = vector.multi_reduction <maximumf>, %293, %cst_96 [1] : vector<32x32xf32> to vector<32xf32>
    %295 = vector.shape_cast %294 : vector<32xf32> to vector<32x1xf32>
    %296 = vector.broadcast %295 : vector<32x1xf32> to vector<32x32xf32>
    %297 = arith.subf %293, %296 : vector<32x32xf32>
    %298 = math.exp %297 : vector<32x32xf32>
    %cst_97 = arith.constant dense<0.000000e+00> : vector<32xf32>
    %299 = vector.multi_reduction <add>, %298, %cst_97 [1] : vector<32x32xf32> to vector<32xf32>
    %300 = vector.shape_cast %299 : vector<32xf32> to vector<32x1xf32>
    %301 = tpu.reciprocal %300 {approx = true} : vector<32x1xf32> -> vector<32x1xf32>
    %302 = vector.broadcast %301 : vector<32x1xf32> to vector<32x32xf32>
    %303 = arith.mulf %298, %302 : vector<32x32xf32>
    %304 = arith.addf %282, %283 : vector<32x1xf32>
    %cst_98 = arith.constant 0.000000e+00 : f32
    %305 = vector.broadcast %cst_98 : f32 to vector<32x1xf32>
    %306 = arith.cmpf ogt, %304, %305 : vector<32x1xf32>
    %cst_99 = arith.constant 2.000000e-01 : f32
    %307 = vector.broadcast %cst_99 : f32 to vector<32x1xf32>
    %308 = arith.mulf %307, %304 : vector<32x1xf32>
    %309 = arith.select %306, %304, %308 : vector<32x1xi1>, vector<32x1xf32>
    %310 = arith.addf %309, %1 : vector<32x1xf32>
    %311 = arith.subf %310, %295 : vector<32x1xf32>
    %312 = math.exp %311 : vector<32x1xf32>
    %313 = arith.mulf %312, %301 : vector<32x1xf32>
    %cst_100 = arith.constant dense<0.000000e+00> : vector<32x32xf32>
    %314 = tpu.matmul %303, %281, %cst_100 {dimension_numbers = #tpu.dot_dimension_numbers<[1], [0], [0], [1], [0, 0, 1, 1], [], []>} : vector<32x32xf32>, vector<32x32xf32>, vector<32x32xf32> -> vector<32x32xf32>
    %315 = arith.subf %280, %281 : vector<32x32xf32>
    %316 = vector.broadcast %313 : vector<32x1xf32> to vector<32x32xf32>
    %317 = arith.mulf %316, %315 : vector<32x32xf32>
    %318 = arith.addf %314, %317 : vector<32x32xf32>
    %c3_101 = arith.constant 3 : index
    %c0_102 = arith.constant 0 : index
    %c0_103 = arith.constant 0 : index
    %319 = vector.load %arg7[%c3_101, %c0_102, %c0_103] : memref<8x1x32xf32, #tpu.memory_space<vmem>>, vector<1x1x32xf32>
    %320 = vector.shape_cast %319 : vector<1x1x32xf32> to vector<1x32xf32>
    %c3_104 = arith.constant 3 : index
    %c0_105 = arith.constant 0 : index
    %c0_106 = arith.constant 0 : index
    %321 = vector.load %arg8[%c3_104, %c0_105, %c0_106] : memref<8x1x32xf32, #tpu.memory_space<vmem>>, vector<1x1x32xf32>
    %322 = vector.shape_cast %321 : vector<1x1x32xf32> to vector<1x32xf32>
    %cst_107 = arith.constant dense<0.000000e+00> : vector<32xf32>
    %323 = vector.multi_reduction <add>, %318, %cst_107 [0] : vector<32x32xf32> to vector<32xf32>
    %324 = vector.shape_cast %323 : vector<32xf32> to vector<1x32xf32>
    %cst_108 = arith.constant 3.200000e+01 : f32
    %325 = vector.broadcast %cst_108 : f32 to vector<1x32xf32>
    %326 = arith.divf %324, %325 : vector<1x32xf32>
    %327 = vector.broadcast %326 : vector<1x32xf32> to vector<32x32xf32>
    %328 = arith.subf %318, %327 : vector<32x32xf32>
    %329 = arith.mulf %328, %328 : vector<32x32xf32>
    %cst_109 = arith.constant dense<0.000000e+00> : vector<32xf32>
    %330 = vector.multi_reduction <add>, %329, %cst_109 [0] : vector<32x32xf32> to vector<32xf32>
    %331 = vector.shape_cast %330 : vector<32xf32> to vector<1x32xf32>
    %cst_110 = arith.constant 3.200000e+01 : f32
    %332 = vector.broadcast %cst_110 : f32 to vector<1x32xf32>
    %333 = arith.divf %331, %332 : vector<1x32xf32>
    %cst_111 = arith.constant 9.99999974E-6 : f32
    %334 = vector.broadcast %cst_111 : f32 to vector<1x32xf32>
    %335 = arith.addf %333, %334 : vector<1x32xf32>
    %336 = math.rsqrt %335 : vector<1x32xf32>
    %337 = arith.mulf %336, %320 : vector<1x32xf32>
    %338 = vector.broadcast %326 : vector<1x32xf32> to vector<32x32xf32>
    %339 = arith.subf %318, %338 : vector<32x32xf32>
    %340 = vector.broadcast %337 : vector<1x32xf32> to vector<32x32xf32>
    %341 = arith.mulf %339, %340 : vector<32x32xf32>
    %342 = vector.broadcast %322 : vector<1x32xf32> to vector<32x32xf32>
    %343 = arith.addf %341, %342 : vector<32x32xf32>
    %cst_112 = arith.constant 0.000000e+00 : f32
    %344 = vector.broadcast %cst_112 : f32 to vector<32x32xf32>
    %345 = arith.maximumf %343, %344 : vector<32x32xf32>
    %346 = arith.addf %345, %207 : vector<32x32xf32>
    %c4 = arith.constant 4 : index
    %c0_113 = arith.constant 0 : index
    %c0_114 = arith.constant 0 : index
    %347 = vector.load %arg6[%c4, %c0_113, %c0_114] : memref<8x32x66xf32, #tpu.memory_space<vmem>>, vector<1x32x66xf32>
    %348 = vector.shape_cast %347 : vector<1x32x66xf32> to vector<32x66xf32>
    %cst_115 = arith.constant dense<0.000000e+00> : vector<32x66xf32>
    %349 = tpu.matmul %346, %348, %cst_115 {dimension_numbers = #tpu.dot_dimension_numbers<[1], [0], [0], [1], [0, 0, 1, 1], [], []>} : vector<32x32xf32>, vector<32x66xf32>, vector<32x66xf32> -> vector<32x66xf32>
    %350 = vector.extract_strided_slice %349 {offsets = [0, 0], sizes = [32, 32], strides = [1, 1]} : vector<32x66xf32> to vector<32x32xf32>
    %351 = vector.extract_strided_slice %349 {offsets = [0, 32], sizes = [32, 32], strides = [1, 1]} : vector<32x66xf32> to vector<32x32xf32>
    %352 = vector.extract_strided_slice %349 {offsets = [0, 64], sizes = [32, 1], strides = [1, 1]} : vector<32x66xf32> to vector<32x1xf32>
    %353 = vector.extract_strided_slice %349 {offsets = [0, 65], sizes = [32, 1], strides = [1, 1]} : vector<32x66xf32> to vector<32x1xf32>
    %354 = tpu.transpose %353, [1, 0] : vector<32x1xf32> -> vector<1x32xf32>
    %355 = vector.broadcast %352 : vector<32x1xf32> to vector<32x32xf32>
    %356 = vector.broadcast %354 : vector<1x32xf32> to vector<32x32xf32>
    %357 = arith.addf %355, %356 : vector<32x32xf32>
    %cst_116 = arith.constant 0.000000e+00 : f32
    %358 = vector.broadcast %cst_116 : f32 to vector<32x32xf32>
    %359 = arith.cmpf ogt, %357, %358 : vector<32x32xf32>
    %cst_117 = arith.constant 2.000000e-01 : f32
    %360 = vector.broadcast %cst_117 : f32 to vector<32x32xf32>
    %361 = arith.mulf %360, %357 : vector<32x32xf32>
    %362 = arith.select %359, %357, %361 : vector<32x32xi1>, vector<32x32xf32>
    %363 = arith.addf %362, %0 : vector<32x32xf32>
    %cst_118 = arith.constant dense<0xFF800000> : vector<32xf32>
    %364 = vector.multi_reduction <maximumf>, %363, %cst_118 [1] : vector<32x32xf32> to vector<32xf32>
    %365 = vector.shape_cast %364 : vector<32xf32> to vector<32x1xf32>
    %366 = vector.broadcast %365 : vector<32x1xf32> to vector<32x32xf32>
    %367 = arith.subf %363, %366 : vector<32x32xf32>
    %368 = math.exp %367 : vector<32x32xf32>
    %cst_119 = arith.constant dense<0.000000e+00> : vector<32xf32>
    %369 = vector.multi_reduction <add>, %368, %cst_119 [1] : vector<32x32xf32> to vector<32xf32>
    %370 = vector.shape_cast %369 : vector<32xf32> to vector<32x1xf32>
    %371 = tpu.reciprocal %370 {approx = true} : vector<32x1xf32> -> vector<32x1xf32>
    %372 = vector.broadcast %371 : vector<32x1xf32> to vector<32x32xf32>
    %373 = arith.mulf %368, %372 : vector<32x32xf32>
    %374 = arith.addf %352, %353 : vector<32x1xf32>
    %cst_120 = arith.constant 0.000000e+00 : f32
    %375 = vector.broadcast %cst_120 : f32 to vector<32x1xf32>
    %376 = arith.cmpf ogt, %374, %375 : vector<32x1xf32>
    %cst_121 = arith.constant 2.000000e-01 : f32
    %377 = vector.broadcast %cst_121 : f32 to vector<32x1xf32>
    %378 = arith.mulf %377, %374 : vector<32x1xf32>
    %379 = arith.select %376, %374, %378 : vector<32x1xi1>, vector<32x1xf32>
    %380 = arith.addf %379, %1 : vector<32x1xf32>
    %381 = arith.subf %380, %365 : vector<32x1xf32>
    %382 = math.exp %381 : vector<32x1xf32>
    %383 = arith.mulf %382, %371 : vector<32x1xf32>
    %cst_122 = arith.constant dense<0.000000e+00> : vector<32x32xf32>
    %384 = tpu.matmul %373, %351, %cst_122 {dimension_numbers = #tpu.dot_dimension_numbers<[1], [0], [0], [1], [0, 0, 1, 1], [], []>} : vector<32x32xf32>, vector<32x32xf32>, vector<32x32xf32> -> vector<32x32xf32>
    %385 = arith.subf %350, %351 : vector<32x32xf32>
    %386 = vector.broadcast %383 : vector<32x1xf32> to vector<32x32xf32>
    %387 = arith.mulf %386, %385 : vector<32x32xf32>
    %388 = arith.addf %384, %387 : vector<32x32xf32>
    %c4_123 = arith.constant 4 : index
    %c0_124 = arith.constant 0 : index
    %c0_125 = arith.constant 0 : index
    %389 = vector.load %arg7[%c4_123, %c0_124, %c0_125] : memref<8x1x32xf32, #tpu.memory_space<vmem>>, vector<1x1x32xf32>
    %390 = vector.shape_cast %389 : vector<1x1x32xf32> to vector<1x32xf32>
    %c4_126 = arith.constant 4 : index
    %c0_127 = arith.constant 0 : index
    %c0_128 = arith.constant 0 : index
    %391 = vector.load %arg8[%c4_126, %c0_127, %c0_128] : memref<8x1x32xf32, #tpu.memory_space<vmem>>, vector<1x1x32xf32>
    %392 = vector.shape_cast %391 : vector<1x1x32xf32> to vector<1x32xf32>
    %cst_129 = arith.constant dense<0.000000e+00> : vector<32xf32>
    %393 = vector.multi_reduction <add>, %388, %cst_129 [0] : vector<32x32xf32> to vector<32xf32>
    %394 = vector.shape_cast %393 : vector<32xf32> to vector<1x32xf32>
    %cst_130 = arith.constant 3.200000e+01 : f32
    %395 = vector.broadcast %cst_130 : f32 to vector<1x32xf32>
    %396 = arith.divf %394, %395 : vector<1x32xf32>
    %397 = vector.broadcast %396 : vector<1x32xf32> to vector<32x32xf32>
    %398 = arith.subf %388, %397 : vector<32x32xf32>
    %399 = arith.mulf %398, %398 : vector<32x32xf32>
    %cst_131 = arith.constant dense<0.000000e+00> : vector<32xf32>
    %400 = vector.multi_reduction <add>, %399, %cst_131 [0] : vector<32x32xf32> to vector<32xf32>
    %401 = vector.shape_cast %400 : vector<32xf32> to vector<1x32xf32>
    %cst_132 = arith.constant 3.200000e+01 : f32
    %402 = vector.broadcast %cst_132 : f32 to vector<1x32xf32>
    %403 = arith.divf %401, %402 : vector<1x32xf32>
    %cst_133 = arith.constant 9.99999974E-6 : f32
    %404 = vector.broadcast %cst_133 : f32 to vector<1x32xf32>
    %405 = arith.addf %403, %404 : vector<1x32xf32>
    %406 = math.rsqrt %405 : vector<1x32xf32>
    %407 = arith.mulf %406, %390 : vector<1x32xf32>
    %408 = vector.broadcast %396 : vector<1x32xf32> to vector<32x32xf32>
    %409 = arith.subf %388, %408 : vector<32x32xf32>
    %410 = vector.broadcast %407 : vector<1x32xf32> to vector<32x32xf32>
    %411 = arith.mulf %409, %410 : vector<32x32xf32>
    %412 = vector.broadcast %392 : vector<1x32xf32> to vector<32x32xf32>
    %413 = arith.addf %411, %412 : vector<32x32xf32>
    %cst_134 = arith.constant 0.000000e+00 : f32
    %414 = vector.broadcast %cst_134 : f32 to vector<32x32xf32>
    %415 = arith.maximumf %413, %414 : vector<32x32xf32>
    %c5 = arith.constant 5 : index
    %c0_135 = arith.constant 0 : index
    %c0_136 = arith.constant 0 : index
    %416 = vector.load %arg6[%c5, %c0_135, %c0_136] : memref<8x32x66xf32, #tpu.memory_space<vmem>>, vector<1x32x66xf32>
    %417 = vector.shape_cast %416 : vector<1x32x66xf32> to vector<32x66xf32>
    %cst_137 = arith.constant dense<0.000000e+00> : vector<32x66xf32>
    %418 = tpu.matmul %415, %417, %cst_137 {dimension_numbers = #tpu.dot_dimension_numbers<[1], [0], [0], [1], [0, 0, 1, 1], [], []>} : vector<32x32xf32>, vector<32x66xf32>, vector<32x66xf32> -> vector<32x66xf32>
    %419 = vector.extract_strided_slice %418 {offsets = [0, 0], sizes = [32, 32], strides = [1, 1]} : vector<32x66xf32> to vector<32x32xf32>
    %420 = vector.extract_strided_slice %418 {offsets = [0, 32], sizes = [32, 32], strides = [1, 1]} : vector<32x66xf32> to vector<32x32xf32>
    %421 = vector.extract_strided_slice %418 {offsets = [0, 64], sizes = [32, 1], strides = [1, 1]} : vector<32x66xf32> to vector<32x1xf32>
    %422 = vector.extract_strided_slice %418 {offsets = [0, 65], sizes = [32, 1], strides = [1, 1]} : vector<32x66xf32> to vector<32x1xf32>
    %423 = tpu.transpose %422, [1, 0] : vector<32x1xf32> -> vector<1x32xf32>
    %424 = vector.broadcast %421 : vector<32x1xf32> to vector<32x32xf32>
    %425 = vector.broadcast %423 : vector<1x32xf32> to vector<32x32xf32>
    %426 = arith.addf %424, %425 : vector<32x32xf32>
    %cst_138 = arith.constant 0.000000e+00 : f32
    %427 = vector.broadcast %cst_138 : f32 to vector<32x32xf32>
    %428 = arith.cmpf ogt, %426, %427 : vector<32x32xf32>
    %cst_139 = arith.constant 2.000000e-01 : f32
    %429 = vector.broadcast %cst_139 : f32 to vector<32x32xf32>
    %430 = arith.mulf %429, %426 : vector<32x32xf32>
    %431 = arith.select %428, %426, %430 : vector<32x32xi1>, vector<32x32xf32>
    %432 = arith.addf %431, %0 : vector<32x32xf32>
    %cst_140 = arith.constant dense<0xFF800000> : vector<32xf32>
    %433 = vector.multi_reduction <maximumf>, %432, %cst_140 [1] : vector<32x32xf32> to vector<32xf32>
    %434 = vector.shape_cast %433 : vector<32xf32> to vector<32x1xf32>
    %435 = vector.broadcast %434 : vector<32x1xf32> to vector<32x32xf32>
    %436 = arith.subf %432, %435 : vector<32x32xf32>
    %437 = math.exp %436 : vector<32x32xf32>
    %cst_141 = arith.constant dense<0.000000e+00> : vector<32xf32>
    %438 = vector.multi_reduction <add>, %437, %cst_141 [1] : vector<32x32xf32> to vector<32xf32>
    %439 = vector.shape_cast %438 : vector<32xf32> to vector<32x1xf32>
    %440 = tpu.reciprocal %439 {approx = true} : vector<32x1xf32> -> vector<32x1xf32>
    %441 = vector.broadcast %440 : vector<32x1xf32> to vector<32x32xf32>
    %442 = arith.mulf %437, %441 : vector<32x32xf32>
    %443 = arith.addf %421, %422 : vector<32x1xf32>
    %cst_142 = arith.constant 0.000000e+00 : f32
    %444 = vector.broadcast %cst_142 : f32 to vector<32x1xf32>
    %445 = arith.cmpf ogt, %443, %444 : vector<32x1xf32>
    %cst_143 = arith.constant 2.000000e-01 : f32
    %446 = vector.broadcast %cst_143 : f32 to vector<32x1xf32>
    %447 = arith.mulf %446, %443 : vector<32x1xf32>
    %448 = arith.select %445, %443, %447 : vector<32x1xi1>, vector<32x1xf32>
    %449 = arith.addf %448, %1 : vector<32x1xf32>
    %450 = arith.subf %449, %434 : vector<32x1xf32>
    %451 = math.exp %450 : vector<32x1xf32>
    %452 = arith.mulf %451, %440 : vector<32x1xf32>
    %cst_144 = arith.constant dense<0.000000e+00> : vector<32x32xf32>
    %453 = tpu.matmul %442, %420, %cst_144 {dimension_numbers = #tpu.dot_dimension_numbers<[1], [0], [0], [1], [0, 0, 1, 1], [], []>} : vector<32x32xf32>, vector<32x32xf32>, vector<32x32xf32> -> vector<32x32xf32>
    %454 = arith.subf %419, %420 : vector<32x32xf32>
    %455 = vector.broadcast %452 : vector<32x1xf32> to vector<32x32xf32>
    %456 = arith.mulf %455, %454 : vector<32x32xf32>
    %457 = arith.addf %453, %456 : vector<32x32xf32>
    %c5_145 = arith.constant 5 : index
    %c0_146 = arith.constant 0 : index
    %c0_147 = arith.constant 0 : index
    %458 = vector.load %arg7[%c5_145, %c0_146, %c0_147] : memref<8x1x32xf32, #tpu.memory_space<vmem>>, vector<1x1x32xf32>
    %459 = vector.shape_cast %458 : vector<1x1x32xf32> to vector<1x32xf32>
    %c5_148 = arith.constant 5 : index
    %c0_149 = arith.constant 0 : index
    %c0_150 = arith.constant 0 : index
    %460 = vector.load %arg8[%c5_148, %c0_149, %c0_150] : memref<8x1x32xf32, #tpu.memory_space<vmem>>, vector<1x1x32xf32>
    %461 = vector.shape_cast %460 : vector<1x1x32xf32> to vector<1x32xf32>
    %cst_151 = arith.constant dense<0.000000e+00> : vector<32xf32>
    %462 = vector.multi_reduction <add>, %457, %cst_151 [0] : vector<32x32xf32> to vector<32xf32>
    %463 = vector.shape_cast %462 : vector<32xf32> to vector<1x32xf32>
    %cst_152 = arith.constant 3.200000e+01 : f32
    %464 = vector.broadcast %cst_152 : f32 to vector<1x32xf32>
    %465 = arith.divf %463, %464 : vector<1x32xf32>
    %466 = vector.broadcast %465 : vector<1x32xf32> to vector<32x32xf32>
    %467 = arith.subf %457, %466 : vector<32x32xf32>
    %468 = arith.mulf %467, %467 : vector<32x32xf32>
    %cst_153 = arith.constant dense<0.000000e+00> : vector<32xf32>
    %469 = vector.multi_reduction <add>, %468, %cst_153 [0] : vector<32x32xf32> to vector<32xf32>
    %470 = vector.shape_cast %469 : vector<32xf32> to vector<1x32xf32>
    %cst_154 = arith.constant 3.200000e+01 : f32
    %471 = vector.broadcast %cst_154 : f32 to vector<1x32xf32>
    %472 = arith.divf %470, %471 : vector<1x32xf32>
    %cst_155 = arith.constant 9.99999974E-6 : f32
    %473 = vector.broadcast %cst_155 : f32 to vector<1x32xf32>
    %474 = arith.addf %472, %473 : vector<1x32xf32>
    %475 = math.rsqrt %474 : vector<1x32xf32>
    %476 = arith.mulf %475, %459 : vector<1x32xf32>
    %477 = vector.broadcast %465 : vector<1x32xf32> to vector<32x32xf32>
    %478 = arith.subf %457, %477 : vector<32x32xf32>
    %479 = vector.broadcast %476 : vector<1x32xf32> to vector<32x32xf32>
    %480 = arith.mulf %478, %479 : vector<32x32xf32>
    %481 = vector.broadcast %461 : vector<1x32xf32> to vector<32x32xf32>
    %482 = arith.addf %480, %481 : vector<32x32xf32>
    %cst_156 = arith.constant 0.000000e+00 : f32
    %483 = vector.broadcast %cst_156 : f32 to vector<32x32xf32>
    %484 = arith.maximumf %482, %483 : vector<32x32xf32>
    %485 = arith.addf %484, %346 : vector<32x32xf32>
    %c6 = arith.constant 6 : index
    %c0_157 = arith.constant 0 : index
    %c0_158 = arith.constant 0 : index
    %486 = vector.load %arg6[%c6, %c0_157, %c0_158] : memref<8x32x66xf32, #tpu.memory_space<vmem>>, vector<1x32x66xf32>
    %487 = vector.shape_cast %486 : vector<1x32x66xf32> to vector<32x66xf32>
    %cst_159 = arith.constant dense<0.000000e+00> : vector<32x66xf32>
    %488 = tpu.matmul %485, %487, %cst_159 {dimension_numbers = #tpu.dot_dimension_numbers<[1], [0], [0], [1], [0, 0, 1, 1], [], []>} : vector<32x32xf32>, vector<32x66xf32>, vector<32x66xf32> -> vector<32x66xf32>
    %489 = vector.extract_strided_slice %488 {offsets = [0, 0], sizes = [32, 32], strides = [1, 1]} : vector<32x66xf32> to vector<32x32xf32>
    %490 = vector.extract_strided_slice %488 {offsets = [0, 32], sizes = [32, 32], strides = [1, 1]} : vector<32x66xf32> to vector<32x32xf32>
    %491 = vector.extract_strided_slice %488 {offsets = [0, 64], sizes = [32, 1], strides = [1, 1]} : vector<32x66xf32> to vector<32x1xf32>
    %492 = vector.extract_strided_slice %488 {offsets = [0, 65], sizes = [32, 1], strides = [1, 1]} : vector<32x66xf32> to vector<32x1xf32>
    %493 = tpu.transpose %492, [1, 0] : vector<32x1xf32> -> vector<1x32xf32>
    %494 = vector.broadcast %491 : vector<32x1xf32> to vector<32x32xf32>
    %495 = vector.broadcast %493 : vector<1x32xf32> to vector<32x32xf32>
    %496 = arith.addf %494, %495 : vector<32x32xf32>
    %cst_160 = arith.constant 0.000000e+00 : f32
    %497 = vector.broadcast %cst_160 : f32 to vector<32x32xf32>
    %498 = arith.cmpf ogt, %496, %497 : vector<32x32xf32>
    %cst_161 = arith.constant 2.000000e-01 : f32
    %499 = vector.broadcast %cst_161 : f32 to vector<32x32xf32>
    %500 = arith.mulf %499, %496 : vector<32x32xf32>
    %501 = arith.select %498, %496, %500 : vector<32x32xi1>, vector<32x32xf32>
    %502 = arith.addf %501, %0 : vector<32x32xf32>
    %cst_162 = arith.constant dense<0xFF800000> : vector<32xf32>
    %503 = vector.multi_reduction <maximumf>, %502, %cst_162 [1] : vector<32x32xf32> to vector<32xf32>
    %504 = vector.shape_cast %503 : vector<32xf32> to vector<32x1xf32>
    %505 = vector.broadcast %504 : vector<32x1xf32> to vector<32x32xf32>
    %506 = arith.subf %502, %505 : vector<32x32xf32>
    %507 = math.exp %506 : vector<32x32xf32>
    %cst_163 = arith.constant dense<0.000000e+00> : vector<32xf32>
    %508 = vector.multi_reduction <add>, %507, %cst_163 [1] : vector<32x32xf32> to vector<32xf32>
    %509 = vector.shape_cast %508 : vector<32xf32> to vector<32x1xf32>
    %510 = tpu.reciprocal %509 {approx = true} : vector<32x1xf32> -> vector<32x1xf32>
    %511 = vector.broadcast %510 : vector<32x1xf32> to vector<32x32xf32>
    %512 = arith.mulf %507, %511 : vector<32x32xf32>
    %513 = arith.addf %491, %492 : vector<32x1xf32>
    %cst_164 = arith.constant 0.000000e+00 : f32
    %514 = vector.broadcast %cst_164 : f32 to vector<32x1xf32>
    %515 = arith.cmpf ogt, %513, %514 : vector<32x1xf32>
    %cst_165 = arith.constant 2.000000e-01 : f32
    %516 = vector.broadcast %cst_165 : f32 to vector<32x1xf32>
    %517 = arith.mulf %516, %513 : vector<32x1xf32>
    %518 = arith.select %515, %513, %517 : vector<32x1xi1>, vector<32x1xf32>
    %519 = arith.addf %518, %1 : vector<32x1xf32>
    %520 = arith.subf %519, %504 : vector<32x1xf32>
    %521 = math.exp %520 : vector<32x1xf32>
    %522 = arith.mulf %521, %510 : vector<32x1xf32>
    %cst_166 = arith.constant dense<0.000000e+00> : vector<32x32xf32>
    %523 = tpu.matmul %512, %490, %cst_166 {dimension_numbers = #tpu.dot_dimension_numbers<[1], [0], [0], [1], [0, 0, 1, 1], [], []>} : vector<32x32xf32>, vector<32x32xf32>, vector<32x32xf32> -> vector<32x32xf32>
    %524 = arith.subf %489, %490 : vector<32x32xf32>
    %525 = vector.broadcast %522 : vector<32x1xf32> to vector<32x32xf32>
    %526 = arith.mulf %525, %524 : vector<32x32xf32>
    %527 = arith.addf %523, %526 : vector<32x32xf32>
    %c6_167 = arith.constant 6 : index
    %c0_168 = arith.constant 0 : index
    %c0_169 = arith.constant 0 : index
    %528 = vector.load %arg7[%c6_167, %c0_168, %c0_169] : memref<8x1x32xf32, #tpu.memory_space<vmem>>, vector<1x1x32xf32>
    %529 = vector.shape_cast %528 : vector<1x1x32xf32> to vector<1x32xf32>
    %c6_170 = arith.constant 6 : index
    %c0_171 = arith.constant 0 : index
    %c0_172 = arith.constant 0 : index
    %530 = vector.load %arg8[%c6_170, %c0_171, %c0_172] : memref<8x1x32xf32, #tpu.memory_space<vmem>>, vector<1x1x32xf32>
    %531 = vector.shape_cast %530 : vector<1x1x32xf32> to vector<1x32xf32>
    %cst_173 = arith.constant dense<0.000000e+00> : vector<32xf32>
    %532 = vector.multi_reduction <add>, %527, %cst_173 [0] : vector<32x32xf32> to vector<32xf32>
    %533 = vector.shape_cast %532 : vector<32xf32> to vector<1x32xf32>
    %cst_174 = arith.constant 3.200000e+01 : f32
    %534 = vector.broadcast %cst_174 : f32 to vector<1x32xf32>
    %535 = arith.divf %533, %534 : vector<1x32xf32>
    %536 = vector.broadcast %535 : vector<1x32xf32> to vector<32x32xf32>
    %537 = arith.subf %527, %536 : vector<32x32xf32>
    %538 = arith.mulf %537, %537 : vector<32x32xf32>
    %cst_175 = arith.constant dense<0.000000e+00> : vector<32xf32>
    %539 = vector.multi_reduction <add>, %538, %cst_175 [0] : vector<32x32xf32> to vector<32xf32>
    %540 = vector.shape_cast %539 : vector<32xf32> to vector<1x32xf32>
    %cst_176 = arith.constant 3.200000e+01 : f32
    %541 = vector.broadcast %cst_176 : f32 to vector<1x32xf32>
    %542 = arith.divf %540, %541 : vector<1x32xf32>
    %cst_177 = arith.constant 9.99999974E-6 : f32
    %543 = vector.broadcast %cst_177 : f32 to vector<1x32xf32>
    %544 = arith.addf %542, %543 : vector<1x32xf32>
    %545 = math.rsqrt %544 : vector<1x32xf32>
    %546 = arith.mulf %545, %529 : vector<1x32xf32>
    %547 = vector.broadcast %535 : vector<1x32xf32> to vector<32x32xf32>
    %548 = arith.subf %527, %547 : vector<32x32xf32>
    %549 = vector.broadcast %546 : vector<1x32xf32> to vector<32x32xf32>
    %550 = arith.mulf %548, %549 : vector<32x32xf32>
    %551 = vector.broadcast %531 : vector<1x32xf32> to vector<32x32xf32>
    %552 = arith.addf %550, %551 : vector<32x32xf32>
    %cst_178 = arith.constant 0.000000e+00 : f32
    %553 = vector.broadcast %cst_178 : f32 to vector<32x32xf32>
    %554 = arith.maximumf %552, %553 : vector<32x32xf32>
    %c7 = arith.constant 7 : index
    %c0_179 = arith.constant 0 : index
    %c0_180 = arith.constant 0 : index
    %555 = vector.load %arg6[%c7, %c0_179, %c0_180] : memref<8x32x66xf32, #tpu.memory_space<vmem>>, vector<1x32x66xf32>
    %556 = vector.shape_cast %555 : vector<1x32x66xf32> to vector<32x66xf32>
    %cst_181 = arith.constant dense<0.000000e+00> : vector<32x66xf32>
    %557 = tpu.matmul %554, %556, %cst_181 {dimension_numbers = #tpu.dot_dimension_numbers<[1], [0], [0], [1], [0, 0, 1, 1], [], []>} : vector<32x32xf32>, vector<32x66xf32>, vector<32x66xf32> -> vector<32x66xf32>
    %558 = vector.extract_strided_slice %557 {offsets = [0, 0], sizes = [32, 32], strides = [1, 1]} : vector<32x66xf32> to vector<32x32xf32>
    %559 = vector.extract_strided_slice %557 {offsets = [0, 32], sizes = [32, 32], strides = [1, 1]} : vector<32x66xf32> to vector<32x32xf32>
    %560 = vector.extract_strided_slice %557 {offsets = [0, 64], sizes = [32, 1], strides = [1, 1]} : vector<32x66xf32> to vector<32x1xf32>
    %561 = vector.extract_strided_slice %557 {offsets = [0, 65], sizes = [32, 1], strides = [1, 1]} : vector<32x66xf32> to vector<32x1xf32>
    %562 = tpu.transpose %561, [1, 0] : vector<32x1xf32> -> vector<1x32xf32>
    %563 = vector.broadcast %560 : vector<32x1xf32> to vector<32x32xf32>
    %564 = vector.broadcast %562 : vector<1x32xf32> to vector<32x32xf32>
    %565 = arith.addf %563, %564 : vector<32x32xf32>
    %cst_182 = arith.constant 0.000000e+00 : f32
    %566 = vector.broadcast %cst_182 : f32 to vector<32x32xf32>
    %567 = arith.cmpf ogt, %565, %566 : vector<32x32xf32>
    %cst_183 = arith.constant 2.000000e-01 : f32
    %568 = vector.broadcast %cst_183 : f32 to vector<32x32xf32>
    %569 = arith.mulf %568, %565 : vector<32x32xf32>
    %570 = arith.select %567, %565, %569 : vector<32x32xi1>, vector<32x32xf32>
    %571 = arith.addf %570, %0 : vector<32x32xf32>
    %cst_184 = arith.constant dense<0xFF800000> : vector<32xf32>
    %572 = vector.multi_reduction <maximumf>, %571, %cst_184 [1] : vector<32x32xf32> to vector<32xf32>
    %573 = vector.shape_cast %572 : vector<32xf32> to vector<32x1xf32>
    %574 = vector.broadcast %573 : vector<32x1xf32> to vector<32x32xf32>
    %575 = arith.subf %571, %574 : vector<32x32xf32>
    %576 = math.exp %575 : vector<32x32xf32>
    %cst_185 = arith.constant dense<0.000000e+00> : vector<32xf32>
    %577 = vector.multi_reduction <add>, %576, %cst_185 [1] : vector<32x32xf32> to vector<32xf32>
    %578 = vector.shape_cast %577 : vector<32xf32> to vector<32x1xf32>
    %579 = tpu.reciprocal %578 {approx = true} : vector<32x1xf32> -> vector<32x1xf32>
    %580 = vector.broadcast %579 : vector<32x1xf32> to vector<32x32xf32>
    %581 = arith.mulf %576, %580 : vector<32x32xf32>
    %582 = arith.addf %560, %561 : vector<32x1xf32>
    %cst_186 = arith.constant 0.000000e+00 : f32
    %583 = vector.broadcast %cst_186 : f32 to vector<32x1xf32>
    %584 = arith.cmpf ogt, %582, %583 : vector<32x1xf32>
    %cst_187 = arith.constant 2.000000e-01 : f32
    %585 = vector.broadcast %cst_187 : f32 to vector<32x1xf32>
    %586 = arith.mulf %585, %582 : vector<32x1xf32>
    %587 = arith.select %584, %582, %586 : vector<32x1xi1>, vector<32x1xf32>
    %588 = arith.addf %587, %1 : vector<32x1xf32>
    %589 = arith.subf %588, %573 : vector<32x1xf32>
    %590 = math.exp %589 : vector<32x1xf32>
    %591 = arith.mulf %590, %579 : vector<32x1xf32>
    %cst_188 = arith.constant dense<0.000000e+00> : vector<32x32xf32>
    %592 = tpu.matmul %581, %559, %cst_188 {dimension_numbers = #tpu.dot_dimension_numbers<[1], [0], [0], [1], [0, 0, 1, 1], [], []>} : vector<32x32xf32>, vector<32x32xf32>, vector<32x32xf32> -> vector<32x32xf32>
    %593 = arith.subf %558, %559 : vector<32x32xf32>
    %594 = vector.broadcast %591 : vector<32x1xf32> to vector<32x32xf32>
    %595 = arith.mulf %594, %593 : vector<32x32xf32>
    %596 = arith.addf %592, %595 : vector<32x32xf32>
    %c7_189 = arith.constant 7 : index
    %c0_190 = arith.constant 0 : index
    %c0_191 = arith.constant 0 : index
    %597 = vector.load %arg7[%c7_189, %c0_190, %c0_191] : memref<8x1x32xf32, #tpu.memory_space<vmem>>, vector<1x1x32xf32>
    %598 = vector.shape_cast %597 : vector<1x1x32xf32> to vector<1x32xf32>
    %c7_192 = arith.constant 7 : index
    %c0_193 = arith.constant 0 : index
    %c0_194 = arith.constant 0 : index
    %599 = vector.load %arg8[%c7_192, %c0_193, %c0_194] : memref<8x1x32xf32, #tpu.memory_space<vmem>>, vector<1x1x32xf32>
    %600 = vector.shape_cast %599 : vector<1x1x32xf32> to vector<1x32xf32>
    %cst_195 = arith.constant dense<0.000000e+00> : vector<32xf32>
    %601 = vector.multi_reduction <add>, %596, %cst_195 [0] : vector<32x32xf32> to vector<32xf32>
    %602 = vector.shape_cast %601 : vector<32xf32> to vector<1x32xf32>
    %cst_196 = arith.constant 3.200000e+01 : f32
    %603 = vector.broadcast %cst_196 : f32 to vector<1x32xf32>
    %604 = arith.divf %602, %603 : vector<1x32xf32>
    %605 = vector.broadcast %604 : vector<1x32xf32> to vector<32x32xf32>
    %606 = arith.subf %596, %605 : vector<32x32xf32>
    %607 = arith.mulf %606, %606 : vector<32x32xf32>
    %cst_197 = arith.constant dense<0.000000e+00> : vector<32xf32>
    %608 = vector.multi_reduction <add>, %607, %cst_197 [0] : vector<32x32xf32> to vector<32xf32>
    %609 = vector.shape_cast %608 : vector<32xf32> to vector<1x32xf32>
    %cst_198 = arith.constant 3.200000e+01 : f32
    %610 = vector.broadcast %cst_198 : f32 to vector<1x32xf32>
    %611 = arith.divf %609, %610 : vector<1x32xf32>
    %cst_199 = arith.constant 9.99999974E-6 : f32
    %612 = vector.broadcast %cst_199 : f32 to vector<1x32xf32>
    %613 = arith.addf %611, %612 : vector<1x32xf32>
    %614 = math.rsqrt %613 : vector<1x32xf32>
    %615 = arith.mulf %614, %598 : vector<1x32xf32>
    %616 = vector.broadcast %604 : vector<1x32xf32> to vector<32x32xf32>
    %617 = arith.subf %596, %616 : vector<32x32xf32>
    %618 = vector.broadcast %615 : vector<1x32xf32> to vector<32x32xf32>
    %619 = arith.mulf %617, %618 : vector<32x32xf32>
    %620 = vector.broadcast %600 : vector<1x32xf32> to vector<32x32xf32>
    %621 = arith.addf %619, %620 : vector<32x32xf32>
    %cst_200 = arith.constant 0.000000e+00 : f32
    %622 = vector.broadcast %cst_200 : f32 to vector<32x32xf32>
    %623 = arith.maximumf %621, %622 : vector<32x32xf32>
    %624 = arith.addf %623, %485 : vector<32x32xf32>
    %c0_201 = arith.constant 0 : index
    %c0_202 = arith.constant 0 : index
    %625 = vector.load %arg9[%c0_201, %c0_202] : memref<32x18xf32, #tpu.memory_space<vmem>>, vector<32x18xf32>
    %c0_203 = arith.constant 0 : index
    %c0_204 = arith.constant 0 : index
    %626 = vector.load %arg10[%c0_203, %c0_204] : memref<1x8xf32, #tpu.memory_space<vmem>>, vector<1x8xf32>
    %cst_205 = arith.constant dense<0.000000e+00> : vector<32x18xf32>
    %627 = tpu.matmul %624, %625, %cst_205 {dimension_numbers = #tpu.dot_dimension_numbers<[1], [0], [0], [1], [0, 0, 1, 1], [], []>} : vector<32x32xf32>, vector<32x18xf32>, vector<32x18xf32> -> vector<32x18xf32>
    %628 = vector.extract_strided_slice %627 {offsets = [0, 0], sizes = [32, 8], strides = [1, 1]} : vector<32x18xf32> to vector<32x8xf32>
    %629 = vector.extract_strided_slice %627 {offsets = [0, 8], sizes = [32, 8], strides = [1, 1]} : vector<32x18xf32> to vector<32x8xf32>
    %630 = vector.extract_strided_slice %627 {offsets = [0, 16], sizes = [32, 1], strides = [1, 1]} : vector<32x18xf32> to vector<32x1xf32>
    %631 = vector.extract_strided_slice %627 {offsets = [0, 17], sizes = [32, 1], strides = [1, 1]} : vector<32x18xf32> to vector<32x1xf32>
    %632 = tpu.transpose %631, [1, 0] : vector<32x1xf32> -> vector<1x32xf32>
    %633 = vector.broadcast %630 : vector<32x1xf32> to vector<32x32xf32>
    %634 = vector.broadcast %632 : vector<1x32xf32> to vector<32x32xf32>
    %635 = arith.addf %633, %634 : vector<32x32xf32>
    %cst_206 = arith.constant 0.000000e+00 : f32
    %636 = vector.broadcast %cst_206 : f32 to vector<32x32xf32>
    %637 = arith.cmpf ogt, %635, %636 : vector<32x32xf32>
    %cst_207 = arith.constant 2.000000e-01 : f32
    %638 = vector.broadcast %cst_207 : f32 to vector<32x32xf32>
    %639 = arith.mulf %638, %635 : vector<32x32xf32>
    %640 = arith.select %637, %635, %639 : vector<32x32xi1>, vector<32x32xf32>
    %641 = arith.addf %640, %0 : vector<32x32xf32>
    %cst_208 = arith.constant dense<0xFF800000> : vector<32xf32>
    %642 = vector.multi_reduction <maximumf>, %641, %cst_208 [1] : vector<32x32xf32> to vector<32xf32>
    %643 = vector.shape_cast %642 : vector<32xf32> to vector<32x1xf32>
    %644 = vector.broadcast %643 : vector<32x1xf32> to vector<32x32xf32>
    %645 = arith.subf %641, %644 : vector<32x32xf32>
    %646 = math.exp %645 : vector<32x32xf32>
    %cst_209 = arith.constant dense<0.000000e+00> : vector<32xf32>
    %647 = vector.multi_reduction <add>, %646, %cst_209 [1] : vector<32x32xf32> to vector<32xf32>
    %648 = vector.shape_cast %647 : vector<32xf32> to vector<32x1xf32>
    %649 = tpu.reciprocal %648 {approx = true} : vector<32x1xf32> -> vector<32x1xf32>
    %650 = vector.broadcast %649 : vector<32x1xf32> to vector<32x32xf32>
    %651 = arith.mulf %646, %650 : vector<32x32xf32>
    %652 = arith.addf %630, %631 : vector<32x1xf32>
    %cst_210 = arith.constant 0.000000e+00 : f32
    %653 = vector.broadcast %cst_210 : f32 to vector<32x1xf32>
    %654 = arith.cmpf ogt, %652, %653 : vector<32x1xf32>
    %cst_211 = arith.constant 2.000000e-01 : f32
    %655 = vector.broadcast %cst_211 : f32 to vector<32x1xf32>
    %656 = arith.mulf %655, %652 : vector<32x1xf32>
    %657 = arith.select %654, %652, %656 : vector<32x1xi1>, vector<32x1xf32>
    %658 = arith.addf %657, %1 : vector<32x1xf32>
    %659 = arith.subf %658, %643 : vector<32x1xf32>
    %660 = math.exp %659 : vector<32x1xf32>
    %661 = arith.mulf %660, %649 : vector<32x1xf32>
    %cst_212 = arith.constant dense<0.000000e+00> : vector<32x8xf32>
    %662 = tpu.matmul %651, %629, %cst_212 {dimension_numbers = #tpu.dot_dimension_numbers<[1], [0], [0], [1], [0, 0, 1, 1], [], []>} : vector<32x32xf32>, vector<32x8xf32>, vector<32x8xf32> -> vector<32x8xf32>
    %663 = arith.subf %628, %629 : vector<32x8xf32>
    %664 = vector.broadcast %661 : vector<32x1xf32> to vector<32x8xf32>
    %665 = arith.mulf %664, %663 : vector<32x8xf32>
    %666 = arith.addf %662, %665 : vector<32x8xf32>
    %667 = vector.broadcast %626 : vector<1x8xf32> to vector<32x8xf32>
    %668 = arith.addf %666, %667 : vector<32x8xf32>
    %c0_213 = arith.constant 0 : index
    %c0_214 = arith.constant 0 : index
    %669 = vector.load %arg11[%c0_213, %c0_214] : memref<32x8xf32, #tpu.memory_space<vmem>>, vector<32x8xf32>
    tpu.vector_store %arg11[%c0_213, %c0_214], %668 {strides = array<i32>} : memref<32x8xf32, #tpu.memory_space<vmem>>, vector<32x8xf32>,
    return
  }
}

</mosaic_0001>

<llo_original>
// kernel: _lambda_.1
$region0: #{_lambda_.1}
  #allocation0 [shape = 'u32[]', space=smem, size = 0x4, offset = 0x4, fixed_abs, tag = 'smem constant byte address 0x4 - core index']
  #allocation1 [shape = 'u32[144,128]{1,0:T(1,128)}', space=vmem, size = 0x12000, scoped, tag = 'internal scratch']
  %s0 = inlined_call_operand.vmem [shape: f32[32,4], index: 0, kind: input, shape index: {}]
  %s1 = inlined_call_operand.vmem [shape: f32[32,32], index: 1, kind: input, shape index: {}]
  %s2 = inlined_call_operand.vmem [shape: f32[32,1], index: 2, kind: input, shape index: {}]
  %s3 = inlined_call_operand.vmem [shape: f32[4,66], index: 3, kind: input, shape index: {}]
  %s4 = inlined_call_operand.vmem [shape: f32[1,32], index: 4, kind: input, shape index: {}]
  %s5 = inlined_call_operand.vmem [shape: f32[1,32], index: 5, kind: input, shape index: {}]
  %s6 = inlined_call_operand.vmem [shape: f32[8,32,66], index: 6, kind: input, shape index: {}]
  %s7 = inlined_call_operand.vmem [shape: f32[8,1,32], index: 7, kind: input, shape index: {}]
  %s8 = inlined_call_operand.vmem [shape: f32[8,1,32], index: 8, kind: input, shape index: {}]
  %s9 = inlined_call_operand.vmem [shape: f32[32,18], index: 9, kind: input, shape index: {}]
  %s10 = inlined_call_operand.vmem [shape: f32[1,8], index: 10, kind: input, shape index: {}]
  %s11 = inlined_call_operand.vmem [shape: f32[32,8], index: 11, kind: output, shape index: {}]
  %s12 = sld [smem:[#allocation0]]
  $region54: #{_lambda_.1} parent=0
    _
  %s14 = ssub.s32 1, %s12
  %s15 = scalar_select 0, %s14, %s12
  // Predicated region
  $region2: #{_lambda_.1} parent=0 // pred_check
    _
  $region3: #{_lambda_.1} parent=0 // pred_check_branch
    %17 = sbr.rel (0) target = $region5
  $region4: #{_lambda_.1} parent=0 // pred_region
    _
  $region5: #{_lambda_.1} parent=0 // pred_fallthru
    _
  // Predicated region
  $region6: #{_lambda_.1} parent=0 // pred_check
    _
  $region7: #{_lambda_.1} parent=0 // pred_check_branch
    %19 = sbr.rel (0) target = $region9
  $region8: #{_lambda_.1} parent=0 // pred_region
    _
  $region9: #{_lambda_.1} parent=0 // pred_fallthru
    _
  // Predicated region
  $region10: #{_lambda_.1} parent=0 // pred_check
    _
  $region11: #{_lambda_.1} parent=0 // pred_check_branch
    %21 = sbr.rel (0) target = $region13
  $region12: #{_lambda_.1} parent=0 // pred_region
    _
  $region13: #{_lambda_.1} parent=0 // pred_fallthru
    _
  // Predicated region
  $region14: #{_lambda_.1} parent=0 // pred_check
    _
  $region15: #{_lambda_.1} parent=0 // pred_check_branch
    %23 = sbr.rel (0) target = $region17
  $region16: #{_lambda_.1} parent=0 // pred_region
    _
  $region17: #{_lambda_.1} parent=0 // pred_fallthru
    _
  // Predicated region
  $region18: #{_lambda_.1} parent=0 // pred_check
    _
  $region19: #{_lambda_.1} parent=0 // pred_check_branch
    %25 = sbr.rel (0) target = $region21
  $region20: #{_lambda_.1} parent=0 // pred_region
    _
  $region21: #{_lambda_.1} parent=0 // pred_fallthru
    _
  // Predicated region
  $region22: #{_lambda_.1} parent=0 // pred_check
    _
  $region23: #{_lambda_.1} parent=0 // pred_check_branch
    %27 = sbr.rel (0) target = $region25
  $region24: #{_lambda_.1} parent=0 // pred_region
    _
  $region25: #{_lambda_.1} parent=0 // pred_fallthru
    _
  // Predicated region
  $region26: #{_lambda_.1} parent=0 // pred_check
    _
  $region27: #{_lambda_.1} parent=0 // pred_check_branch
    %29 = sbr.rel (0) target = $region29
  $region28: #{_lambda_.1} parent=0 // pred_region
    _
  $region29: #{_lambda_.1} parent=0 // pred_fallthru
    _
  // Predicated region
  $region30: #{_lambda_.1} parent=0 // pred_check
    _
  $region31: #{_lambda_.1} parent=0 // pred_check_branch
    %31 = sbr.rel (0) target = $region33
  $region32: #{_lambda_.1} parent=0 // pred_region
    _
  $region33: #{_lambda_.1} parent=0 // pred_fallthru
    _
  // Predicated region
  $region34: #{_lambda_.1} parent=0 // pred_check
    _
  $region35: #{_lambda_.1} parent=0 // pred_check_branch
    %33 = sbr.rel (0) target = $region37
  $region36: #{_lambda_.1} parent=0 // pred_region
    _
  $region37: #{_lambda_.1} parent=0 // pred_fallthru
    _
  // Predicated region
  $region38: #{_lambda_.1} parent=0 // pred_check
    _
  $region39: #{_lambda_.1} parent=0 // pred_check_branch
    %35 = sbr.rel (0) target = $region41
  $region40: #{_lambda_.1} parent=0 // pred_region
    _
  $region41: #{_lambda_.1} parent=0 // pred_fallthru
    _
  // Predicated region
  $region42: #{_lambda_.1} parent=0 // pred_check
    _
  $region43: #{_lambda_.1} parent=0 // pred_check_branch
    %37 = sbr.rel (0) target = $region45
  $region44: #{_lambda_.1} parent=0 // pred_region
    _
  $region45: #{_lambda_.1} parent=0 // pred_fallthru
    _
  %v38 = vld [vmem:[%s1] sm:$0xff]
  %v39 = vld [vmem:[%s1 + $0x8] sm:$0xff]
  %v40 = vld [vmem:[%s1 + $0x10] sm:$0xff]
  %v41 = vld [vmem:[%s1 + $0x18] sm:$0xff]
  %v42 = vld [vmem:[%s2] sm:$0xff]
  %v43 = vld [vmem:[%s2 + $0x8] sm:$0xff]
  %v44 = vld [vmem:[%s2 + $0x10] sm:$0xff]
  %v45 = vld [vmem:[%s2 + $0x18] sm:$0xff]
  %v46 = vld [vmem:[%s0] sm:$0xff]
  %v47 = vld [vmem:[%s0 + $0x8] sm:$0xff]
  %v48 = vld [vmem:[%s0 + $0x10] sm:$0xff]
  %v49 = vld [vmem:[%s0 + $0x18] sm:$0xff]
  %v50 = vld [vmem:[%s3] sm:$0xf]
  %vm51 = vcmask 31744
  %v53 = vsel %vm51, %v46, 0
  %v56 = vsel %vm51, %v47, 0
  %v59 = vsel %vm51, %v48, 0
  %v62 = vsel %vm51, %v49, 0
  %vm64 = vcmask 1043456
  %v66 = vsel %vm64, %v50, 0
  %68 = vmatprep.subr.mxu0 0.0
  %69 = vmatpush1.msra.mxu0 %v66
  %70 = vmatprep.subr.mxu0 0.0
  %71 = vmatpush1.msra.mxu0 0.0
  %72 = vmatprep.subr.mxu0 0.0
  %73 = vmatpush1.msra.mxu0 0.0
  %74 = vmatprep.subr.mxu0 0.0
  %75 = vmatpush1.msra.mxu0 0.0
  %76 = vmatprep.subr.mxu0 0.0
  %77 = vmatpush1.msra.mxu0 0.0
  %78 = vmatprep.subr.mxu0 0.0
  %79 = vmatpush1.msra.mxu0 0.0
  %80 = vmatprep.subr.mxu0 0.0
  %81 = vmatpush1.msra.mxu0 0.0
  %82 = vmatprep.subr.mxu0 0.0
  %83 = vmatpush1.msra.mxu0 0.0
  %84 = vmatprep.subr.mxu0 0.0
  %85 = vmatpush1.msra.mxu0 0.0
  %86 = vmatprep.subr.mxu0 0.0
  %87 = vmatpush1.msra.mxu0 0.0
  %88 = vmatprep.subr.mxu0 0.0
  %89 = vmatpush1.msra.mxu0 0.0
  %90 = vmatprep.subr.mxu0 0.0
  %91 = vmatpush1.msra.mxu0 0.0
  %92 = vmatprep.subr.mxu0 0.0
  %93 = vmatpush1.msra.mxu0 0.0
  %94 = vmatprep.subr.mxu0 0.0
  %95 = vmatpush1.msra.mxu0 0.0
  %96 = vmatprep.subr.mxu0 0.0
  %97 = vmatpush1.msra.mxu0 0.0
  %98 = vmatprep.subr.mxu0 0.0
  %99 = vmatpush1.msra.mxu0 0.0
  %100 = vmatprep.subr.mxu0 0.0
  %101 = vmatpush1.msra.mxu0 0.0
  %102 = vmatprep.subr.mxu0 0.0
  %103 = vmatpush1.msra.mxu0 0.0
  %104 = vmatprep.subr.mxu0 0.0
  %105 = vmatpush1.msra.mxu0 0.0
  %106 = vmatprep.subr.mxu0 0.0
  %107 = vmatpush1.msra.mxu0 0.0
  %108 = vmatprep.subr.mxu0 0.0
  %109 = vmatpush1.msra.mxu0 0.0
  %110 = vmatprep.subr.mxu0 0.0
  %111 = vmatpush1.msra.mxu0 0.0
  %112 = vmatprep.subr.mxu0 0.0
  %113 = vmatpush1.msra.mxu0 0.0
  %114 = vmatprep.subr.mxu0 0.0
  %115 = vmatpush1.msra.mxu0 0.0
  %116 = vmatprep.subr.mxu0 0.0
  %117 = vmatpush1.msra.mxu0 0.0
  %118 = vmatprep.subr.mxu0 0.0
  %119 = vmatpush1.msra.mxu0 0.0
  %120 = vmatprep.subr.mxu0 0.0
  %121 = vmatpush1.msra.mxu0 0.0
  %122 = vmatprep.subr.mxu0 0.0
  %123 = vmatpush1.msra.mxu0 0.0
  %124 = vmatprep.subr.mxu0 0.0
  %125 = vmatpush1.msra.mxu0 0.0
  %126 = vmatprep.subr.mxu0 0.0
  %127 = vmatpush1.msra.mxu0 0.0
  %128 = vmatprep.subr.mxu0 0.0
  %129 = vmatpush1.msra.mxu0 0.0
  %130 = vmatprep.subr.mxu0 0.0
  %131 = vmatpush1.msra.mxu0 0.0
  %132 = vmatprep.mubr.f32.mxu0 0.0
  %133 = vmatmul.mubr.f32.gmra.mrb[0].mxu0 %v53
  %v134 = vpop.f32.mrb[0].mxu0
  %v135 = vadd.f32 0.0, %v134
  %v136 = vpop.f32.mrb[0].mxu0
  %137 = vmatprep.mubr.f32.mxu0 0.0
  %138 = vmatmul.mubr.f32.gmra.mrb[0].mxu0 %v56
  %v139 = vpop.f32.mrb[0].mxu0
  %v140 = vadd.f32 0.0, %v139
  %v141 = vpop.f32.mrb[0].mxu0
  %142 = vmatprep.mubr.f32.mxu0 0.0
  %143 = vmatmul.mubr.f32.gmra.mrb[0].mxu0 %v59
  %v144 = vpop.f32.mrb[0].mxu0
  %v145 = vadd.f32 0.0, %v144
  %v146 = vpop.f32.mrb[0].mxu0
  %147 = vmatprep.mubr.f32.mxu0 0.0
  %148 = vmatmul.mubr.f32.gmra.mrb[0].mxu0 %v62
  %v149 = vpop.f32.mrb[0].mxu0
  %v150 = vadd.f32 0.0, %v149
  %v151 = vpop.f32.mrb[0].mxu0
  %152 = vdwg.mxu0
  %157 = vrot.lane.b32.xlu0 %v135, 63
  %v158 = vpop.permute.xlu0 %157
  %159 = vrot.lane.b32.xlu0 %v140, 63
  %v160 = vpop.permute.xlu0 %159
  %161 = vrot.lane.b32.xlu0 %v145, 63
  %v162 = vpop.permute.xlu0 %161
  %163 = vrot.lane.b32.xlu0 %v150, 63
  %v164 = vpop.permute.xlu0 %163
  %169 = vxpose.xlu0.b32.start [1/16] %v158, 128
  %170 = vxpose.xlu0.b32.cont [2/16] %v160, 128
  %171 = vxpose.xlu0.b32.cont [3/16] %v162, 128
  %172 = vxpose.xlu0.b32.cont [4/16] %v164, 128
  %173 = vxpose.xlu0.b32.cont [5/16] 0.0, 128
  %174 = vxpose.xlu0.b32.cont [6/16] 0.0, 128
  %175 = vxpose.xlu0.b32.cont [7/16] 0.0, 128
  %176 = vxpose.xlu0.b32.cont [8/16] 0.0, 128
  %177 = vxpose.xlu0.b32.cont [9/16] 0.0, 128
  %178 = vxpose.xlu0.b32.cont [10/16] 0.0, 128
  %179 = vxpose.xlu0.b32.cont [11/16] 0.0, 128
  %180 = vxpose.xlu0.b32.cont [12/16] 0.0, 128
  %181 = vxpose.xlu0.b32.cont [13/16] 0.0, 128
  %182 = vxpose.xlu0.b32.cont [14/16] 0.0, 128
  %183 = vxpose.xlu0.b32.cont [15/16] 0.0, 128
  %184 = vxpose.xlu0.b32.end [16/16] 0.0, 128
  %v185 = vpop.trf.xlu0
  %v186 = vpop.trf.xlu0
  %v187 = vpop.trf.xlu0
  %v188 = vpop.trf.xlu0
  %v189 = vpop.trf.xlu0
  %v190 = vpop.trf.xlu0
  %v191 = vpop.trf.xlu0
  %v192 = vpop.trf.xlu0
  %v193 = vpop.trf.xlu0
  %v194 = vpop.trf.xlu0
  %v195 = vpop.trf.xlu0
  %v196 = vpop.trf.xlu0
  %v197 = vpop.trf.xlu0
  %v198 = vpop.trf.xlu0
  %v199 = vpop.trf.xlu0
  %v200 = vpop.trf.xlu0
  %201 = vset.pattern.permute.xlu0 64
  %202 = vperm.xlu0 %201, %v135
  %v203 = vpop.permute.xlu0 %202
  %205 = vset.pattern.permute.xlu0 64
  %206 = vperm.xlu0 %205, %v140
  %v207 = vpop.permute.xlu0 %206
  %209 = vset.pattern.permute.xlu0 64
  %210 = vperm.xlu0 %209, %v145
  %v211 = vpop.permute.xlu0 %210
  %213 = vset.pattern.permute.xlu0 64
  %214 = vperm.xlu0 %213, %v150
  %v215 = vpop.permute.xlu0 %214
  %v217 = vlaneseq
  %v218 = vshrl.u32 %v217, 7
  %v219 = vsub.s32 0, %v218
  %v220 = vrot.slane %v185, %v219
  %v221 = vadd.f32 %v203, %v220
  %v222 = vadd.f32 %v207, %v220
  %v223 = vadd.f32 %v211, %v220
  %v224 = vadd.f32 %v215, %v220
  %vm225 = vcmp.gt.f32.partialorder %v221, 0.0
  %vm226 = vcmp.gt.f32.partialorder %v222, 0.0
  %vm227 = vcmp.gt.f32.partialorder %v223, 0.0
  %vm228 = vcmp.gt.f32.partialorder %v224, 0.0
  %v229 = vmul.f32 %v221, 0.2
  %v230 = vmul.f32 %v222, 0.2
  %v231 = vmul.f32 %v223, 0.2
  %v232 = vmul.f32 %v224, 0.2
  %v233 = vsel %vm225, %v221, %v229
  %v234 = vsel %vm226, %v222, %v230
  %v235 = vsel %vm227, %v223, %v231
  %v236 = vsel %vm228, %v224, %v232
  %v237 = vadd.f32 %v233, %v38
  %v238 = vadd.f32 %v234, %v39
  %v239 = vadd.f32 %v235, %v40
  %v240 = vadd.f32 %v236, %v41
  %vm241 = vcmask 261120
  %v242 = vsel %vm241, %v237, -inf
  %243 = vmax.xlane.f32.xlu0 %v242
  %v244 = vpop.xlane.xlu0 %243
  %v245 = vsel %vm241, %v238, -inf
  %246 = vmax.xlane.f32.xlu0 %v245
  %v247 = vpop.xlane.xlu0 %246
  %v248 = vsel %vm241, %v239, -inf
  %249 = vmax.xlane.f32.xlu0 %v248
  %v250 = vpop.xlane.xlu0 %249
  %v251 = vsel %vm241, %v240, -inf
  %252 = vmax.xlane.f32.xlu0 %v251
  %v253 = vpop.xlane.xlu0 %252
  %v254 = vsub.f32 %v237, %v244
  %v255 = vsub.f32 %v238, %v247
  %v256 = vsub.f32 %v239, %v250
  %v257 = vsub.f32 %v240, %v253
  %v258 = vmul.f32 %v254, 1.442695
  %v259 = vpow.pop %v258
  %v260 = vmul.f32 %v255, 1.442695
  %v261 = vpow.pop %v260
  %v262 = vmul.f32 %v256, 1.442695
  %v263 = vpow.pop %v262
  %v264 = vmul.f32 %v257, 1.442695
  %v265 = vpow.pop %v264
  %v266 = vsel %vm241, %v259, 0.0
  %267 = vadd.xlane.f32.xlu0 %v266
  %v268 = vpop.xlane.xlu0 %267
  %v269 = vsel %vm241, %v261, 0.0
  %270 = vadd.xlane.f32.xlu0 %v269
  %v271 = vpop.xlane.xlu0 %270
  %v272 = vsel %vm241, %v263, 0.0
  %273 = vadd.xlane.f32.xlu0 %v272
  %v274 = vpop.xlane.xlu0 %273
  %v275 = vsel %vm241, %v265, 0.0
  %276 = vadd.xlane.f32.xlu0 %v275
  %v277 = vpop.xlane.xlu0 %276
  %v278 = vrcp.pop %v268
  %v279 = vrcp.pop %v271
  %v280 = vrcp.pop %v274
  %v281 = vrcp.pop %v277
  %v282 = vmul.f32 %v259, %v278
  %v283 = vmul.f32 %v261, %v279
  %v284 = vmul.f32 %v263, %v280
  %v285 = vmul.f32 %v265, %v281
  %286 = vrot.lane.b32.xlu0 %v135, 127
  %v287 = vpop.permute.xlu0 %286
  %288 = vrot.lane.b32.xlu0 %v140, 127
  %v289 = vpop.permute.xlu0 %288
  %290 = vrot.lane.b32.xlu0 %v145, 127
  %v291 = vpop.permute.xlu0 %290
  %292 = vrot.lane.b32.xlu0 %v150, 127
  %v293 = vpop.permute.xlu0 %292
  %v298 = vadd.f32 %v135, %v287
  %v299 = vadd.f32 %v140, %v289
  %v300 = vadd.f32 %v145, %v291
  %v301 = vadd.f32 %v150, %v293
  %vm302 = vcmp.gt.f32.partialorder %v298, 0.0
  %vm303 = vcmp.gt.f32.partialorder %v299, 0.0
  %vm304 = vcmp.gt.f32.partialorder %v300, 0.0
  %vm305 = vcmp.gt.f32.partialorder %v301, 0.0
  %v306 = vmul.f32 %v298, 0.2
  %v307 = vmul.f32 %v299, 0.2
  %v308 = vmul.f32 %v300, 0.2
  %v309 = vmul.f32 %v301, 0.2
  %v310 = vsel %vm302, %v298, %v306
  %v311 = vsel %vm303, %v299, %v307
  %v312 = vsel %vm304, %v300, %v308
  %v313 = vsel %vm305, %v301, %v309
  %318 = vrot.lane.b32.xlu0 %v42, 64
  %v319 = vpop.permute.xlu0 %318
  %320 = vrot.lane.b32.xlu0 %v43, 64
  %v321 = vpop.permute.xlu0 %320
  %322 = vrot.lane.b32.xlu0 %v44, 64
  %v323 = vpop.permute.xlu0 %322
  %324 = vrot.lane.b32.xlu0 %v45, 64
  %v325 = vpop.permute.xlu0 %324
  %v330 = vadd.f32 %v310, %v319
  %v331 = vadd.f32 %v311, %v321
  %v332 = vadd.f32 %v312, %v323
  %v333 = vadd.f32 %v313, %v325
  %v334 = vsub.f32 %v330, %v244
  %v335 = vsub.f32 %v331, %v247
  %v336 = vsub.f32 %v332, %v250
  %v337 = vsub.f32 %v333, %v253
  %v338 = vmul.f32 %v334, 1.442695
  %v339 = vpow.pop %v338
  %v340 = vmul.f32 %v335, 1.442695
  %v341 = vpow.pop %v340
  %v342 = vmul.f32 %v336, 1.442695
  %v343 = vpow.pop %v342
  %v344 = vmul.f32 %v337, 1.442695
  %v345 = vpow.pop %v344
  %v346 = vmul.f32 %v339, %v278
  %v347 = vmul.f32 %v341, %v279
  %v348 = vmul.f32 %v343, %v280
  %v349 = vmul.f32 %v345, %v281
  %350 = vrot.lane.b32.xlu0 %v135, 96
  %v351 = vpop.permute.xlu0 %350
  %352 = vrot.lane.b32.xlu0 %v140, 96
  %v353 = vpop.permute.xlu0 %352
  %354 = vrot.lane.b32.xlu0 %v145, 96
  %v355 = vpop.permute.xlu0 %354
  %356 = vrot.lane.b32.xlu0 %v150, 96
  %v357 = vpop.permute.xlu0 %356
  %v362 = vsub.f32 %v135, %v351
  %v363 = vsub.f32 %v140, %v353
  %v364 = vsub.f32 %v145, %v355
  %v365 = vsub.f32 %v150, %v357
  %367 = vset.pattern.permute.xlu0 64
  %368 = vperm.xlu0 %367, %v346
  %v369 = vpop.permute.xlu0 %368
  %372 = vset.pattern.permute.xlu0 64
  %373 = vperm.xlu0 %372, %v347
  %v374 = vpop.permute.xlu0 %373
  %377 = vset.pattern.permute.xlu0 64
  %378 = vperm.xlu0 %377, %v348
  %v379 = vpop.permute.xlu0 %378
  %382 = vset.pattern.permute.xlu0 64
  %383 = vperm.xlu0 %382, %v349
  %v384 = vpop.permute.xlu0 %383
  %v386 = vmul.f32 %v369, %v362
  %v387 = vmul.f32 %v374, %v363
  %v388 = vmul.f32 %v379, %v364
  %v389 = vmul.f32 %v384, %v365
  %v391 = vsel %vm241, %v282, 0
  %v394 = vsel %vm241, %v283, 0
  %v397 = vsel %vm241, %v284, 0
  %v400 = vsel %vm241, %v285, 0
  %402 = vmatprep.subr.mxu0 0.0
  %403 = vmatpush1.msra.mxu0 %v351
  %404 = vmatprep.subr.mxu0 0.0
  %405 = vmatpush1.msra.mxu0 %v353
  %406 = vmatprep.subr.mxu0 0.0
  %407 = vmatpush1.msra.mxu0 %v355
  %408 = vmatprep.subr.mxu0 0.0
  %409 = vmatpush1.msra.mxu0 %v357
  %410 = vmatprep.subr.mxu0 0.0
  %411 = vmatpush1.msra.mxu0 0.0
  %412 = vmatprep.subr.mxu0 0.0
  %413 = vmatpush1.msra.mxu0 0.0
  %414 = vmatprep.subr.mxu0 0.0
  %415 = vmatpush1.msra.mxu0 0.0
  %416 = vmatprep.subr.mxu0 0.0
  %417 = vmatpush1.msra.mxu0 0.0
  %418 = vmatprep.subr.mxu0 0.0
  %419 = vmatpush1.msra.mxu0 0.0
  %420 = vmatprep.subr.mxu0 0.0
  %421 = vmatpush1.msra.mxu0 0.0
  %422 = vmatprep.subr.mxu0 0.0
  %423 = vmatpush1.msra.mxu0 0.0
  %424 = vmatprep.subr.mxu0 0.0
  %425 = vmatpush1.msra.mxu0 0.0
  %426 = vmatprep.subr.mxu0 0.0
  %427 = vmatpush1.msra.mxu0 0.0
  %428 = vmatprep.subr.mxu0 0.0
  %429 = vmatpush1.msra.mxu0 0.0
  %430 = vmatprep.subr.mxu0 0.0
  %431 = vmatpush1.msra.mxu0 0.0
  %432 = vmatprep.subr.mxu0 0.0
  %433 = vmatpush1.msra.mxu0 0.0
  %434 = vmatprep.subr.mxu0 0.0
  %435 = vmatpush1.msra.mxu0 0.0
  %436 = vmatprep.subr.mxu0 0.0
  %437 = vmatpush1.msra.mxu0 0.0
  %438 = vmatprep.subr.mxu0 0.0
  %439 = vmatpush1.msra.mxu0 0.0
  %440 = vmatprep.subr.mxu0 0.0
  %441 = vmatpush1.msra.mxu0 0.0
  %442 = vmatprep.subr.mxu0 0.0
  %443 = vmatpush1.msra.mxu0 0.0
  %444 = vmatprep.subr.mxu0 0.0
  %445 = vmatpush1.msra.mxu0 0.0
  %446 = vmatprep.subr.mxu0 0.0
  %447 = vmatpush1.msra.mxu0 0.0
  %448 = vmatprep.subr.mxu0 0.0
  %449 = vmatpush1.msra.mxu0 0.0
  %450 = vmatprep.subr.mxu0 0.0
  %451 = vmatpush1.msra.mxu0 0.0
  %452 = vmatprep.subr.mxu0 0.0
  %453 = vmatpush1.msra.mxu0 0.0
  %454 = vmatprep.subr.mxu0 0.0
  %455 = vmatpush1.msra.mxu0 0.0
  %456 = vmatprep.subr.mxu0 0.0
  %457 = vmatpush1.msra.mxu0 0.0
  %458 = vmatprep.subr.mxu0 0.0
  %459 = vmatpush1.msra.mxu0 0.0
  %460 = vmatprep.subr.mxu0 0.0
  %461 = vmatpush1.msra.mxu0 0.0
  %462 = vmatprep.subr.mxu0 0.0
  %463 = vmatpush1.msra.mxu0 0.0
  %464 = vmatprep.subr.mxu0 0.0
  %465 = vmatpush1.msra.mxu0 0.0
  %466 = vmatprep.mubr.f32.mxu0 0.0
  %467 = vmatmul.mubr.f32.gmra.mrb[0].mxu0 %v391
  %v468 = vpop.f32.mrb[0].mxu0
  %v469 = vadd.f32 %v386, %v468
  %v470 = vpop.f32.mrb[0].mxu0
  %471 = vmatprep.mubr.f32.mxu0 0.0
  %472 = vmatmul.mubr.f32.gmra.mrb[0].mxu0 %v394
  %v473 = vpop.f32.mrb[0].mxu0
  %v474 = vadd.f32 %v387, %v473
  %v475 = vpop.f32.mrb[0].mxu0
  %476 = vmatprep.mubr.f32.mxu0 0.0
  %477 = vmatmul.mubr.f32.gmra.mrb[0].mxu0 %v397
  %v478 = vpop.f32.mrb[0].mxu0
  %v479 = vadd.f32 %v388, %v478
  %v480 = vpop.f32.mrb[0].mxu0
  %481 = vmatprep.mubr.f32.mxu0 0.0
  %482 = vmatmul.mubr.f32.gmra.mrb[0].mxu0 %v400
  %v483 = vpop.f32.mrb[0].mxu0
  %v484 = vadd.f32 %v389, %v483
  %v485 = vpop.f32.mrb[0].mxu0
  %486 = vdwg.mxu0
  %v487 = vld [vmem:[%s4] sm:$0x1]
  %v488 = vld [vmem:[%s5] sm:$0x1]
  %v489 = vsel %vm241, %v469, 0.0
  %v490 = vsel %vm241, %v474, 0.0
  %v491 = vadd.f32 %v489, %v490
  %v492 = vsel %vm241, %v479, 0.0
  %v493 = vadd.f32 %v491, %v492
  %v494 = vsel %vm241, %v484, 0.0
  %v495 = vadd.f32 %v493, %v494
  %v496 = vrot.slane %v495, 4
  %v497 = vadd.f32 %v495, %v496
  %v498 = vrot.slane %v497, 2
  %v499 = vadd.f32 %v497, %v498
  %v500 = vrot.slane %v499, 1
  %v501 = vadd.f32 %v499, %v500
  %v502 = vrcp.pop 32.0
  %v503 = vmul.f32 %v501, %v502
  %v504 = vsub.f32 %v469, %v503
  %v505 = vsub.f32 %v474, %v503
  %v506 = vsub.f32 %v479, %v503
  %v507 = vsub.f32 %v484, %v503
  %v508 = vmul.f32 %v504, %v504
  %v509 = vmul.f32 %v505, %v505
  %v510 = vmul.f32 %v506, %v506
  %v511 = vmul.f32 %v507, %v507
  %v512 = vsel %vm241, %v508, 0.0
  %v513 = vsel %vm241, %v509, 0.0
  %v514 = vadd.f32 %v512, %v513
  %v515 = vsel %vm241, %v510, 0.0
  %v516 = vadd.f32 %v514, %v515
  %v517 = vsel %vm241, %v511, 0.0
  %v518 = vadd.f32 %v516, %v517
  %v519 = vrot.slane %v518, 4
  %v520 = vadd.f32 %v518, %v519
  %v521 = vrot.slane %v520, 2
  %v522 = vadd.f32 %v520, %v521
  %v523 = vrot.slane %v522, 1
  %v524 = vadd.f32 %v522, %v523
  %v525 = vmul.f32 %v524, %v502
  %v526 = vadd.f32 %v525, 1e-05
  %v527 = vrsqrt.pop %v526
  %v528 = vmul.f32 %v527, %v487
  %v529 = vlaneseq
  %v530 = vshrl.u32 %v529, 7
  %v531 = vsub.s32 0, %v530
  %v532 = vrot.slane %v528, %v531
  %v533 = vmul.f32 %v504, %v532
  %v534 = vmul.f32 %v505, %v532
  %v535 = vmul.f32 %v506, %v532
  %v536 = vmul.f32 %v507, %v532
  %v538 = vlaneseq
  %v539 = vshrl.u32 %v538, 7
  %v540 = vsub.s32 0, %v539
  %v541 = vrot.slane %v488, %v540
  %v543 = vadd.f32 %v533, %v541
  %v544 = vadd.f32 %v534, %v541
  %v545 = vadd.f32 %v535, %v541
  %v546 = vadd.f32 %v536, %v541
  %v547 = vmax.f32 %v543, 0.0
  %v548 = vmax.f32 %v544, 0.0
  %v549 = vmax.f32 %v545, 0.0
  %v550 = vmax.f32 %v546, 0.0
  %v551 = vld [vmem:[%s6] sm:$0xff]
  %v552 = vld [vmem:[%s6 + $0x8] sm:$0xff]
  %v553 = vld [vmem:[%s6 + $0x10] sm:$0xff]
  %v554 = vld [vmem:[%s6 + $0x18] sm:$0xff]
  %v556 = vsel %vm241, %v547, 0
  %v559 = vsel %vm241, %v548, 0
  %v562 = vsel %vm241, %v549, 0
  %v565 = vsel %vm241, %v550, 0
  %567 = vmatprep.subr.mxu0 0.0
  %568 = vmatpush1.msra.mxu0 %v551
  %569 = vmatprep.subr.mxu0 0.0
  %570 = vmatpush1.msra.mxu0 %v552
  %571 = vmatprep.subr.mxu0 0.0
  %572 = vmatpush1.msra.mxu0 %v553
  %573 = vmatprep.subr.mxu0 0.0
  %574 = vmatpush1.msra.mxu0 %v554
  %575 = vmatprep.subr.mxu0 0.0
  %576 = vmatpush1.msra.mxu0 0.0
  %577 = vmatprep.subr.mxu0 0.0
  %578 = vmatpush1.msra.mxu0 0.0
  %579 = vmatprep.subr.mxu0 0.0
  %580 = vmatpush1.msra.mxu0 0.0
  %581 = vmatprep.subr.mxu0 0.0
  %582 = vmatpush1.msra.mxu0 0.0
  %583 = vmatprep.subr.mxu0 0.0
  %584 = vmatpush1.msra.mxu0 0.0
  %585 = vmatprep.subr.mxu0 0.0
  %586 = vmatpush1.msra.mxu0 0.0
  %587 = vmatprep.subr.mxu0 0.0
  %588 = vmatpush1.msra.mxu0 0.0
  %589 = vmatprep.subr.mxu0 0.0
  %590 = vmatpush1.msra.mxu0 0.0
  %591 = vmatprep.subr.mxu0 0.0
  %592 = vmatpush1.msra.mxu0 0.0
  %593 = vmatprep.subr.mxu0 0.0
  %594 = vmatpush1.msra.mxu0 0.0
  %595 = vmatprep.subr.mxu0 0.0
  %596 = vmatpush1.msra.mxu0 0.0
  %597 = vmatprep.subr.mxu0 0.0
  %598 = vmatpush1.msra.mxu0 0.0
  %599 = vmatprep.subr.mxu0 0.0
  %600 = vmatpush1.msra.mxu0 0.0
  %601 = vmatprep.subr.mxu0 0.0
  %602 = vmatpush1.msra.mxu0 0.0
  %603 = vmatprep.subr.mxu0 0.0
  %604 = vmatpush1.msra.mxu0 0.0
  %605 = vmatprep.subr.mxu0 0.0
  %606 = vmatpush1.msra.mxu0 0.0
  %607 = vmatprep.subr.mxu0 0.0
  %608 = vmatpush1.msra.mxu0 0.0
  %609 = vmatprep.subr.mxu0 0.0
  %610 = vmatpush1.msra.mxu0 0.0
  %611 = vmatprep.subr.mxu0 0.0
  %612 = vmatpush1.msra.mxu0 0.0
  %613 = vmatprep.subr.mxu0 0.0
  %614 = vmatpush1.msra.mxu0 0.0
  %615 = vmatprep.subr.mxu0 0.0
  %616 = vmatpush1.msra.mxu0 0.0
  %617 = vmatprep.subr.mxu0 0.0
  %618 = vmatpush1.msra.mxu0 0.0
  %619 = vmatprep.subr.mxu0 0.0
  %620 = vmatpush1.msra.mxu0 0.0
  %621 = vmatprep.subr.mxu0 0.0
  %622 = vmatpush1.msra.mxu0 0.0
  %623 = vmatprep.subr.mxu0 0.0
  %624 = vmatpush1.msra.mxu0 0.0
  %625 = vmatprep.subr.mxu0 0.0
  %626 = vmatpush1.msra.mxu0 0.0
  %627 = vmatprep.subr.mxu0 0.0
  %628 = vmatpush1.msra.mxu0 0.0
  %629 = vmatprep.subr.mxu0 0.0
  %630 = vmatpush1.msra.mxu0 0.0
  %631 = vmatprep.mubr.f32.mxu0 0.0
  %632 = vmatmul.mubr.f32.gmra.mrb[0].mxu0 %v556
  %v633 = vpop.f32.mrb[0].mxu0
  %v634 = vadd.f32 0.0, %v633
  %v635 = vpop.f32.mrb[0].mxu0
  %636 = vmatprep.mubr.f32.mxu0 0.0
  %637 = vmatmul.mubr.f32.gmra.mrb[0].mxu0 %v559
  %v638 = vpop.f32.mrb[0].mxu0
  %v639 = vadd.f32 0.0, %v638
  %v640 = vpop.f32.mrb[0].mxu0
  %641 = vmatprep.mubr.f32.mxu0 0.0
  %642 = vmatmul.mubr.f32.gmra.mrb[0].mxu0 %v562
  %v643 = vpop.f32.mrb[0].mxu0
  %v644 = vadd.f32 0.0, %v643
  %v645 = vpop.f32.mrb[0].mxu0
  %646 = vmatprep.mubr.f32.mxu0 0.0
  %647 = vmatmul.mubr.f32.gmra.mrb[0].mxu0 %v565
  %v648 = vpop.f32.mrb[0].mxu0
  %v649 = vadd.f32 0.0, %v648
  %v650 = vpop.f32.mrb[0].mxu0
  %651 = vdwg.mxu0
  %656 = vrot.lane.b32.xlu0 %v634, 63
  %v657 = vpop.permute.xlu0 %656
  %658 = vrot.lane.b32.xlu0 %v639, 63
  %v659 = vpop.permute.xlu0 %658
  %660 = vrot.lane.b32.xlu0 %v644, 63
  %v661 = vpop.permute.xlu0 %660
  %662 = vrot.lane.b32.xlu0 %v649, 63
  %v663 = vpop.permute.xlu0 %662
  %668 = vxpose.xlu0.b32.start [1/16] %v657, 128
  %669 = vxpose.xlu0.b32.cont [2/16] %v659, 128
  %670 = vxpose.xlu0.b32.cont [3/16] %v661, 128
  %671 = vxpose.xlu0.b32.cont [4/16] %v663, 128
  %672 = vxpose.xlu0.b32.cont [5/16] 0.0, 128
  %673 = vxpose.xlu0.b32.cont [6/16] 0.0, 128
  %674 = vxpose.xlu0.b32.cont [7/16] 0.0, 128
  %675 = vxpose.xlu0.b32.cont [8/16] 0.0, 128
  %676 = vxpose.xlu0.b32.cont [9/16] 0.0, 128
  %677 = vxpose.xlu0.b32.cont [10/16] 0.0, 128
  %678 = vxpose.xlu0.b32.cont [11/16] 0.0, 128
  %679 = vxpose.xlu0.b32.cont [12/16] 0.0, 128
  %680 = vxpose.xlu0.b32.cont [13/16] 0.0, 128
  %681 = vxpose.xlu0.b32.cont [14/16] 0.0, 128
  %682 = vxpose.xlu0.b32.cont [15/16] 0.0, 128
  %683 = vxpose.xlu0.b32.end [16/16] 0.0, 128
  %v684 = vpop.trf.xlu0
  %v685 = vpop.trf.xlu0
  %v686 = vpop.trf.xlu0
  %v687 = vpop.trf.xlu0
  %v688 = vpop.trf.xlu0
  %v689 = vpop.trf.xlu0
  %v690 = vpop.trf.xlu0
  %v691 = vpop.trf.xlu0
  %v692 = vpop.trf.xlu0
  %v693 = vpop.trf.xlu0
  %v694 = vpop.trf.xlu0
  %v695 = vpop.trf.xlu0
  %v696 = vpop.trf.xlu0
  %v697 = vpop.trf.xlu0
  %v698 = vpop.trf.xlu0
  %v699 = vpop.trf.xlu0
  %700 = vset.pattern.permute.xlu0 64
  %701 = vperm.xlu0 %700, %v634
  %v702 = vpop.permute.xlu0 %701
  %704 = vset.pattern.permute.xlu0 64
  %705 = vperm.xlu0 %704, %v639
  %v706 = vpop.permute.xlu0 %705
  %708 = vset.pattern.permute.xlu0 64
  %709 = vperm.xlu0 %708, %v644
  %v710 = vpop.permute.xlu0 %709
  %712 = vset.pattern.permute.xlu0 64
  %713 = vperm.xlu0 %712, %v649
  %v714 = vpop.permute.xlu0 %713
  %v716 = vlaneseq
  %v717 = vshrl.u32 %v716, 7
  %v718 = vsub.s32 0, %v717
  %v719 = vrot.slane %v684, %v718
  %v720 = vadd.f32 %v702, %v719
  %v721 = vadd.f32 %v706, %v719
  %v722 = vadd.f32 %v710, %v719
  %v723 = vadd.f32 %v714, %v719
  %vm724 = vcmp.gt.f32.partialorder %v720, 0.0
  %vm725 = vcmp.gt.f32.partialorder %v721, 0.0
  %vm726 = vcmp.gt.f32.partialorder %v722, 0.0
  %vm727 = vcmp.gt.f32.partialorder %v723, 0.0
  %v728 = vmul.f32 %v720, 0.2
  %v729 = vmul.f32 %v721, 0.2
  %v730 = vmul.f32 %v722, 0.2
  %v731 = vmul.f32 %v723, 0.2
  %v732 = vsel %vm724, %v720, %v728
  %v733 = vsel %vm725, %v721, %v729
  %v734 = vsel %vm726, %v722, %v730
  %v735 = vsel %vm727, %v723, %v731
  %v736 = vadd.f32 %v732, %v38
  %v737 = vadd.f32 %v733, %v39
  %v738 = vadd.f32 %v734, %v40
  %v739 = vadd.f32 %v735, %v41
  %v740 = vsel %vm241, %v736, -inf
  %741 = vmax.xlane.f32.xlu0 %v740
  %v742 = vpop.xlane.xlu0 %741
  %v743 = vsel %vm241, %v737, -inf
  %744 = vmax.xlane.f32.xlu0 %v743
  %v745 = vpop.xlane.xlu0 %744
  %v746 = vsel %vm241, %v738, -inf
  %747 = vmax.xlane.f32.xlu0 %v746
  %v748 = vpop.xlane.xlu0 %747
  %v749 = vsel %vm241, %v739, -inf
  %750 = vmax.xlane.f32.xlu0 %v749
  %v751 = vpop.xlane.xlu0 %750
  %v752 = vsub.f32 %v736, %v742
  %v753 = vsub.f32 %v737, %v745
  %v754 = vsub.f32 %v738, %v748
  %v755 = vsub.f32 %v739, %v751
  %v756 = vmul.f32 %v752, 1.442695
  %v757 = vpow.pop %v756
  %v758 = vmul.f32 %v753, 1.442695
  %v759 = vpow.pop %v758
  %v760 = vmul.f32 %v754, 1.442695
  %v761 = vpow.pop %v760
  %v762 = vmul.f32 %v755, 1.442695
  %v763 = vpow.pop %v762
  %v764 = vsel %vm241, %v757, 0.0
  %765 = vadd.xlane.f32.xlu0 %v764
  %v766 = vpop.xlane.xlu0 %765
  %v767 = vsel %vm241, %v759, 0.0
  %768 = vadd.xlane.f32.xlu0 %v767
  %v769 = vpop.xlane.xlu0 %768
  %v770 = vsel %vm241, %v761, 0.0
  %771 = vadd.xlane.f32.xlu0 %v770
  %v772 = vpop.xlane.xlu0 %771
  %v773 = vsel %vm241, %v763, 0.0
  %774 = vadd.xlane.f32.xlu0 %v773
  %v775 = vpop.xlane.xlu0 %774
  %v776 = vrcp.pop %v766
  %v777 = vrcp.pop %v769
  %v778 = vrcp.pop %v772
  %v779 = vrcp.pop %v775
  %v780 = vmul.f32 %v757, %v776
  %v781 = vmul.f32 %v759, %v777
  %v782 = vmul.f32 %v761, %v778
  %v783 = vmul.f32 %v763, %v779
  %784 = vrot.lane.b32.xlu0 %v634, 127
  %v785 = vpop.permute.xlu0 %784
  %786 = vrot.lane.b32.xlu0 %v639, 127
  %v787 = vpop.permute.xlu0 %786
  %788 = vrot.lane.b32.xlu0 %v644, 127
  %v789 = vpop.permute.xlu0 %788
  %790 = vrot.lane.b32.xlu0 %v649, 127
  %v791 = vpop.permute.xlu0 %790
  %v796 = vadd.f32 %v634, %v785
  %v797 = vadd.f32 %v639, %v787
  %v798 = vadd.f32 %v644, %v789
  %v799 = vadd.f32 %v649, %v791
  %vm800 = vcmp.gt.f32.partialorder %v796, 0.0
  %vm801 = vcmp.gt.f32.partialorder %v797, 0.0
  %vm802 = vcmp.gt.f32.partialorder %v798, 0.0
  %vm803 = vcmp.gt.f32.partialorder %v799, 0.0
  %v804 = vmul.f32 %v796, 0.2
  %v805 = vmul.f32 %v797, 0.2
  %v806 = vmul.f32 %v798, 0.2
  %v807 = vmul.f32 %v799, 0.2
  %v808 = vsel %vm800, %v796, %v804
  %v809 = vsel %vm801, %v797, %v805
  %v810 = vsel %vm802, %v798, %v806
  %v811 = vsel %vm803, %v799, %v807
  %v812 = vadd.f32 %v808, %v319
  %v813 = vadd.f32 %v809, %v321
  %v814 = vadd.f32 %v810, %v323
  %v815 = vadd.f32 %v811, %v325
  %v816 = vsub.f32 %v812, %v742
  %v817 = vsub.f32 %v813, %v745
  %v818 = vsub.f32 %v814, %v748
  %v819 = vsub.f32 %v815, %v751
  %v820 = vmul.f32 %v816, 1.442695
  %v821 = vpow.pop %v820
  %v822 = vmul.f32 %v817, 1.442695
  %v823 = vpow.pop %v822
  %v824 = vmul.f32 %v818, 1.442695
  %v825 = vpow.pop %v824
  %v826 = vmul.f32 %v819, 1.442695
  %v827 = vpow.pop %v826
  %v828 = vmul.f32 %v821, %v776
  %v829 = vmul.f32 %v823, %v777
  %v830 = vmul.f32 %v825, %v778
  %v831 = vmul.f32 %v827, %v779
  %832 = vrot.lane.b32.xlu0 %v634, 96
  %v833 = vpop.permute.xlu0 %832
  %834 = vrot.lane.b32.xlu0 %v639, 96
  %v835 = vpop.permute.xlu0 %834
  %836 = vrot.lane.b32.xlu0 %v644, 96
  %v837 = vpop.permute.xlu0 %836
  %838 = vrot.lane.b32.xlu0 %v649, 96
  %v839 = vpop.permute.xlu0 %838
  %v844 = vsub.f32 %v634, %v833
  %v845 = vsub.f32 %v639, %v835
  %v846 = vsub.f32 %v644, %v837
  %v847 = vsub.f32 %v649, %v839
  %849 = vset.pattern.permute.xlu0 64
  %850 = vperm.xlu0 %849, %v828
  %v851 = vpop.permute.xlu0 %850
  %854 = vset.pattern.permute.xlu0 64
  %855 = vperm.xlu0 %854, %v829
  %v856 = vpop.permute.xlu0 %855
  %859 = vset.pattern.permute.xlu0 64
  %860 = vperm.xlu0 %859, %v830
  %v861 = vpop.permute.xlu0 %860
  %864 = vset.pattern.permute.xlu0 64
  %865 = vperm.xlu0 %864, %v831
  %v866 = vpop.permute.xlu0 %865
  %v868 = vmul.f32 %v851, %v844
  %v869 = vmul.f32 %v856, %v845
  %v870 = vmul.f32 %v861, %v846
  %v871 = vmul.f32 %v866, %v847
  %v873 = vsel %vm241, %v780, 0
  %v876 = vsel %vm241, %v781, 0
  %v879 = vsel %vm241, %v782, 0
  %v882 = vsel %vm241, %v783, 0
  %884 = vmatprep.subr.mxu0 0.0
  %885 = vmatpush1.msra.mxu0 %v833
  %886 = vmatprep.subr.mxu0 0.0
  %887 = vmatpush1.msra.mxu0 %v835
  %888 = vmatprep.subr.mxu0 0.0
  %889 = vmatpush1.msra.mxu0 %v837
  %890 = vmatprep.subr.mxu0 0.0
  %891 = vmatpush1.msra.mxu0 %v839
  %892 = vmatprep.subr.mxu0 0.0
  %893 = vmatpush1.msra.mxu0 0.0
  %894 = vmatprep.subr.mxu0 0.0
  %895 = vmatpush1.msra.mxu0 0.0
  %896 = vmatprep.subr.mxu0 0.0
  %897 = vmatpush1.msra.mxu0 0.0
  %898 = vmatprep.subr.mxu0 0.0
  %899 = vmatpush1.msra.mxu0 0.0
  %900 = vmatprep.subr.mxu0 0.0
  %901 = vmatpush1.msra.mxu0 0.0
  %902 = vmatprep.subr.mxu0 0.0
  %903 = vmatpush1.msra.mxu0 0.0
  %904 = vmatprep.subr.mxu0 0.0
  %905 = vmatpush1.msra.mxu0 0.0
  %906 = vmatprep.subr.mxu0 0.0
  %907 = vmatpush1.msra.mxu0 0.0
  %908 = vmatprep.subr.mxu0 0.0
  %909 = vmatpush1.msra.mxu0 0.0
  %910 = vmatprep.subr.mxu0 0.0
  %911 = vmatpush1.msra.mxu0 0.0
  %912 = vmatprep.subr.mxu0 0.0
  %913 = vmatpush1.msra.mxu0 0.0
  %914 = vmatprep.subr.mxu0 0.0
  %915 = vmatpush1.msra.mxu0 0.0
  %916 = vmatprep.subr.mxu0 0.0
  %917 = vmatpush1.msra.mxu0 0.0
  %918 = vmatprep.subr.mxu0 0.0
  %919 = vmatpush1.msra.mxu0 0.0
  %920 = vmatprep.subr.mxu0 0.0
  %921 = vmatpush1.msra.mxu0 0.0
  %922 = vmatprep.subr.mxu0 0.0
  %923 = vmatpush1.msra.mxu0 0.0
  %924 = vmatprep.subr.mxu0 0.0
  %925 = vmatpush1.msra.mxu0 0.0
  %926 = vmatprep.subr.mxu0 0.0
  %927 = vmatpush1.msra.mxu0 0.0
  %928 = vmatprep.subr.mxu0 0.0
  %929 = vmatpush1.msra.mxu0 0.0
  %930 = vmatprep.subr.mxu0 0.0
  %931 = vmatpush1.msra.mxu0 0.0
  %932 = vmatprep.subr.mxu0 0.0
  %933 = vmatpush1.msra.mxu0 0.0
  %934 = vmatprep.subr.mxu0 0.0
  %935 = vmatpush1.msra.mxu0 0.0
  %936 = vmatprep.subr.mxu0 0.0
  %937 = vmatpush1.msra.mxu0 0.0
  %938 = vmatprep.subr.mxu0 0.0
  %939 = vmatpush1.msra.mxu0 0.0
  %940 = vmatprep.subr.mxu0 0.0
  %941 = vmatpush1.msra.mxu0 0.0
  %942 = vmatprep.subr.mxu0 0.0
  %943 = vmatpush1.msra.mxu0 0.0
  %944 = vmatprep.subr.mxu0 0.0
  %945 = vmatpush1.msra.mxu0 0.0
  %946 = vmatprep.subr.mxu0 0.0
  %947 = vmatpush1.msra.mxu0 0.0
  %948 = vmatprep.mubr.f32.mxu0 0.0
  %949 = vmatmul.mubr.f32.gmra.mrb[0].mxu0 %v873
  %v950 = vpop.f32.mrb[0].mxu0
  %v951 = vadd.f32 %v868, %v950
  %v952 = vpop.f32.mrb[0].mxu0
  %953 = vmatprep.mubr.f32.mxu0 0.0
  %954 = vmatmul.mubr.f32.gmra.mrb[0].mxu0 %v876
  %v955 = vpop.f32.mrb[0].mxu0
  %v956 = vadd.f32 %v869, %v955
  %v957 = vpop.f32.mrb[0].mxu0
  %958 = vmatprep.mubr.f32.mxu0 0.0
  %959 = vmatmul.mubr.f32.gmra.mrb[0].mxu0 %v879
  %v960 = vpop.f32.mrb[0].mxu0
  %v961 = vadd.f32 %v870, %v960
  %v962 = vpop.f32.mrb[0].mxu0
  %963 = vmatprep.mubr.f32.mxu0 0.0
  %964 = vmatmul.mubr.f32.gmra.mrb[0].mxu0 %v882
  %v965 = vpop.f32.mrb[0].mxu0
  %v966 = vadd.f32 %v871, %v965
  %v967 = vpop.f32.mrb[0].mxu0
  %968 = vdwg.mxu0
  %v969 = vld [vmem:[%s7] sm:$0x1]
  %v970 = vld [vmem:[%s8] sm:$0x1]
  %v971 = vsel %vm241, %v951, 0.0
  %v972 = vsel %vm241, %v956, 0.0
  %v973 = vadd.f32 %v971, %v972
  %v974 = vsel %vm241, %v961, 0.0
  %v975 = vadd.f32 %v973, %v974
  %v976 = vsel %vm241, %v966, 0.0
  %v977 = vadd.f32 %v975, %v976
  %v978 = vrot.slane %v977, 4
  %v979 = vadd.f32 %v977, %v978
  %v980 = vrot.slane %v979, 2
  %v981 = vadd.f32 %v979, %v980
  %v982 = vrot.slane %v981, 1
  %v983 = vadd.f32 %v981, %v982
  %v984 = vmul.f32 %v983, %v502
  %v985 = vsub.f32 %v951, %v984
  %v986 = vsub.f32 %v956, %v984
  %v987 = vsub.f32 %v961, %v984
  %v988 = vsub.f32 %v966, %v984
  %v989 = vmul.f32 %v985, %v985
  %v990 = vmul.f32 %v986, %v986
  %v991 = vmul.f32 %v987, %v987
  %v992 = vmul.f32 %v988, %v988
  %v993 = vsel %vm241, %v989, 0.0
  %v994 = vsel %vm241, %v990, 0.0
  %v995 = vadd.f32 %v993, %v994
  %v996 = vsel %vm241, %v991, 0.0
  %v997 = vadd.f32 %v995, %v996
  %v998 = vsel %vm241, %v992, 0.0
  %v999 = vadd.f32 %v997, %v998
  %v1000 = vrot.slane %v999, 4
  %v1001 = vadd.f32 %v999, %v1000
  %v1002 = vrot.slane %v1001, 2
  %v1003 = vadd.f32 %v1001, %v1002
  %v1004 = vrot.slane %v1003, 1
  %v1005 = vadd.f32 %v1003, %v1004
  %v1006 = vmul.f32 %v1005, %v502
  %v1007 = vadd.f32 %v1006, 1e-05
  %v1008 = vrsqrt.pop %v1007
  %v1009 = vmul.f32 %v1008, %v969
  %v1010 = vlaneseq
  %v1011 = vshrl.u32 %v1010, 7
  %v1012 = vsub.s32 0, %v1011
  %v1013 = vrot.slane %v1009, %v1012
  %v1014 = vmul.f32 %v985, %v1013
  %v1015 = vmul.f32 %v986, %v1013
  %v1016 = vmul.f32 %v987, %v1013
  %v1017 = vmul.f32 %v988, %v1013
  %v1019 = vlaneseq
  %v1020 = vshrl.u32 %v1019, 7
  %v1021 = vsub.s32 0, %v1020
  %v1022 = vrot.slane %v970, %v1021
  %v1024 = vadd.f32 %v1014, %v1022
  %v1025 = vadd.f32 %v1015, %v1022
  %v1026 = vadd.f32 %v1016, %v1022
  %v1027 = vadd.f32 %v1017, %v1022
  %v1028 = vmax.f32 %v1024, 0.0
  %v1029 = vmax.f32 %v1025, 0.0
  %v1030 = vmax.f32 %v1026, 0.0
  %v1031 = vmax.f32 %v1027, 0.0
  %s1032 = scalar_lea.vmem %s6, 32
  %v1033 = vld [vmem:[%s1032] sm:$0xff]
  %v1034 = vld [vmem:[%s1032 + $0x8] sm:$0xff]
  %v1035 = vld [vmem:[%s1032 + $0x10] sm:$0xff]
  %v1036 = vld [vmem:[%s1032 + $0x18] sm:$0xff]
  %v1038 = vsel %vm241, %v1028, 0
  %v1041 = vsel %vm241, %v1029, 0
  %v1044 = vsel %vm241, %v1030, 0
  %v1047 = vsel %vm241, %v1031, 0
  %1049 = vmatprep.subr.mxu0 0.0
  %1050 = vmatpush1.msra.mxu0 %v1033
  %1051 = vmatprep.subr.mxu0 0.0
  %1052 = vmatpush1.msra.mxu0 %v1034
  %1053 = vmatprep.subr.mxu0 0.0
  %1054 = vmatpush1.msra.mxu0 %v1035
  %1055 = vmatprep.subr.mxu0 0.0
  %1056 = vmatpush1.msra.mxu0 %v1036
  %1057 = vmatprep.subr.mxu0 0.0
  %1058 = vmatpush1.msra.mxu0 0.0
  %1059 = vmatprep.subr.mxu0 0.0
  %1060 = vmatpush1.msra.mxu0 0.0
  %1061 = vmatprep.subr.mxu0 0.0
  %1062 = vmatpush1.msra.mxu0 0.0
  %1063 = vmatprep.subr.mxu0 0.0
  %1064 = vmatpush1.msra.mxu0 0.0
  %1065 = vmatprep.subr.mxu0 0.0
  %1066 = vmatpush1.msra.mxu0 0.0
  %1067 = vmatprep.subr.mxu0 0.0
  %1068 = vmatpush1.msra.mxu0 0.0
  %1069 = vmatprep.subr.mxu0 0.0
  %1070 = vmatpush1.msra.mxu0 0.0
  %1071 = vmatprep.subr.mxu0 0.0
  %1072 = vmatpush1.msra.mxu0 0.0
  %1073 = vmatprep.subr.mxu0 0.0
  %1074 = vmatpush1.msra.mxu0 0.0
  %1075 = vmatprep.subr.mxu0 0.0
  %1076 = vmatpush1.msra.mxu0 0.0
  %1077 = vmatprep.subr.mxu0 0.0
  %1078 = vmatpush1.msra.mxu0 0.0
  %1079 = vmatprep.subr.mxu0 0.0
  %1080 = vmatpush1.msra.mxu0 0.0
  %1081 = vmatprep.subr.mxu0 0.0
  %1082 = vmatpush1.msra.mxu0 0.0
  %1083 = vmatprep.subr.mxu0 0.0
  %1084 = vmatpush1.msra.mxu0 0.0
  %1085 = vmatprep.subr.mxu0 0.0
  %1086 = vmatpush1.msra.mxu0 0.0
  %1087 = vmatprep.subr.mxu0 0.0
  %1088 = vmatpush1.msra.mxu0 0.0
  %1089 = vmatprep.subr.mxu0 0.0
  %1090 = vmatpush1.msra.mxu0 0.0
  %1091 = vmatprep.subr.mxu0 0.0
  %1092 = vmatpush1.msra.mxu0 0.0
  %1093 = vmatprep.subr.mxu0 0.0
  %1094 = vmatpush1.msra.mxu0 0.0
  %1095 = vmatprep.subr.mxu0 0.0
  %1096 = vmatpush1.msra.mxu0 0.0
  %1097 = vmatprep.subr.mxu0 0.0
  %1098 = vmatpush1.msra.mxu0 0.0
  %1099 = vmatprep.subr.mxu0 0.0
  %1100 = vmatpush1.msra.mxu0 0.0
  %1101 = vmatprep.subr.mxu0 0.0
  %1102 = vmatpush1.msra.mxu0 0.0
  %1103 = vmatprep.subr.mxu0 0.0
  %1104 = vmatpush1.msra.mxu0 0.0
  %1105 = vmatprep.subr.mxu0 0.0
  %1106 = vmatpush1.msra.mxu0 0.0
  %1107 = vmatprep.subr.mxu0 0.0
  %1108 = vmatpush1.msra.mxu0 0.0
  %1109 = vmatprep.subr.mxu0 0.0
  %1110 = vmatpush1.msra.mxu0 0.0
  %1111 = vmatprep.subr.mxu0 0.0
  %1112 = vmatpush1.msra.mxu0 0.0
  %1113 = vmatprep.mubr.f32.mxu0 0.0
  %1114 = vmatmul.mubr.f32.gmra.mrb[0].mxu0 %v1038
  %v1115 = vpop.f32.mrb[0].mxu0
  %v1116 = vadd.f32 0.0, %v1115
  %v1117 = vpop.f32.mrb[0].mxu0
  %1118 = vmatprep.mubr.f32.mxu0 0.0
  %1119 = vmatmul.mubr.f32.gmra.mrb[0].mxu0 %v1041
  %v1120 = vpop.f32.mrb[0].mxu0
  %v1121 = vadd.f32 0.0, %v1120
  %v1122 = vpop.f32.mrb[0].mxu0
  %1123 = vmatprep.mubr.f32.mxu0 0.0
  %1124 = vmatmul.mubr.f32.gmra.mrb[0].mxu0 %v1044
  %v1125 = vpop.f32.mrb[0].mxu0
  %v1126 = vadd.f32 0.0, %v1125
  %v1127 = vpop.f32.mrb[0].mxu0
  %1128 = vmatprep.mubr.f32.mxu0 0.0
  %1129 = vmatmul.mubr.f32.gmra.mrb[0].mxu0 %v1047
  %v1130 = vpop.f32.mrb[0].mxu0
  %v1131 = vadd.f32 0.0, %v1130
  %v1132 = vpop.f32.mrb[0].mxu0
  %1133 = vdwg.mxu0
  %1138 = vrot.lane.b32.xlu0 %v1116, 63
  %v1139 = vpop.permute.xlu0 %1138
  %1140 = vrot.lane.b32.xlu0 %v1121, 63
  %v1141 = vpop.permute.xlu0 %1140
  %1142 = vrot.lane.b32.xlu0 %v1126, 63
  %v1143 = vpop.permute.xlu0 %1142
  %1144 = vrot.lane.b32.xlu0 %v1131, 63
  %v1145 = vpop.permute.xlu0 %1144
  %1150 = vxpose.xlu0.b32.start [1/16] %v1139, 128
  %1151 = vxpose.xlu0.b32.cont [2/16] %v1141, 128
  %1152 = vxpose.xlu0.b32.cont [3/16] %v1143, 128
  %1153 = vxpose.xlu0.b32.cont [4/16] %v1145, 128
  %1154 = vxpose.xlu0.b32.cont [5/16] 0.0, 128
  %1155 = vxpose.xlu0.b32.cont [6/16] 0.0, 128
  %1156 = vxpose.xlu0.b32.cont [7/16] 0.0, 128
  %1157 = vxpose.xlu0.b32.cont [8/16] 0.0, 128
  %1158 = vxpose.xlu0.b32.cont [9/16] 0.0, 128
  %1159 = vxpose.xlu0.b32.cont [10/16] 0.0, 128
  %1160 = vxpose.xlu0.b32.cont [11/16] 0.0, 128
  %1161 = vxpose.xlu0.b32.cont [12/16] 0.0, 128
  %1162 = vxpose.xlu0.b32.cont [13/16] 0.0, 128
  %1163 = vxpose.xlu0.b32.cont [14/16] 0.0, 128
  %1164 = vxpose.xlu0.b32.cont [15/16] 0.0, 128
  %1165 = vxpose.xlu0.b32.end [16/16] 0.0, 128
  %v1166 = vpop.trf.xlu0
  %v1167 = vpop.trf.xlu0
  %v1168 = vpop.trf.xlu0
  %v1169 = vpop.trf.xlu0
  %v1170 = vpop.trf.xlu0
  %v1171 = vpop.trf.xlu0
  %v1172 = vpop.trf.xlu0
  %v1173 = vpop.trf.xlu0
  %v1174 = vpop.trf.xlu0
  %v1175 = vpop.trf.xlu0
  %v1176 = vpop.trf.xlu0
  %v1177 = vpop.trf.xlu0
  %v1178 = vpop.trf.xlu0
  %v1179 = vpop.trf.xlu0
  %v1180 = vpop.trf.xlu0
  %v1181 = vpop.trf.xlu0
  %1182 = vset.pattern.permute.xlu0 64
  %1183 = vperm.xlu0 %1182, %v1116
  %v1184 = vpop.permute.xlu0 %1183
  %1186 = vset.pattern.permute.xlu0 64
  %1187 = vperm.xlu0 %1186, %v1121
  %v1188 = vpop.permute.xlu0 %1187
  %1190 = vset.pattern.permute.xlu0 64
  %1191 = vperm.xlu0 %1190, %v1126
  %v1192 = vpop.permute.xlu0 %1191
  %1194 = vset.pattern.permute.xlu0 64
  %1195 = vperm.xlu0 %1194, %v1131
  %v1196 = vpop.permute.xlu0 %1195
  %v1198 = vlaneseq
  %v1199 = vshrl.u32 %v1198, 7
  %v1200 = vsub.s32 0, %v1199
  %v1201 = vrot.slane %v1166, %v1200
  %v1202 = vadd.f32 %v1184, %v1201
  %v1203 = vadd.f32 %v1188, %v1201
  %v1204 = vadd.f32 %v1192, %v1201
  %v1205 = vadd.f32 %v1196, %v1201
  %vm1206 = vcmp.gt.f32.partialorder %v1202, 0.0
  %vm1207 = vcmp.gt.f32.partialorder %v1203, 0.0
  %vm1208 = vcmp.gt.f32.partialorder %v1204, 0.0
  %vm1209 = vcmp.gt.f32.partialorder %v1205, 0.0
  %v1210 = vmul.f32 %v1202, 0.2
  %v1211 = vmul.f32 %v1203, 0.2
  %v1212 = vmul.f32 %v1204, 0.2
  %v1213 = vmul.f32 %v1205, 0.2
  %v1214 = vsel %vm1206, %v1202, %v1210
  %v1215 = vsel %vm1207, %v1203, %v1211
  %v1216 = vsel %vm1208, %v1204, %v1212
  %v1217 = vsel %vm1209, %v1205, %v1213
  %v1218 = vadd.f32 %v1214, %v38
  %v1219 = vadd.f32 %v1215, %v39
  %v1220 = vadd.f32 %v1216, %v40
  %v1221 = vadd.f32 %v1217, %v41
  %v1222 = vsel %vm241, %v1218, -inf
  %1223 = vmax.xlane.f32.xlu0 %v1222
  %v1224 = vpop.xlane.xlu0 %1223
  %v1225 = vsel %vm241, %v1219, -inf
  %1226 = vmax.xlane.f32.xlu0 %v1225
  %v1227 = vpop.xlane.xlu0 %1226
  %v1228 = vsel %vm241, %v1220, -inf
  %1229 = vmax.xlane.f32.xlu0 %v1228
  %v1230 = vpop.xlane.xlu0 %1229
  %v1231 = vsel %vm241, %v1221, -inf
  %1232 = vmax.xlane.f32.xlu0 %v1231
  %v1233 = vpop.xlane.xlu0 %1232
  %v1234 = vsub.f32 %v1218, %v1224
  %v1235 = vsub.f32 %v1219, %v1227
  %v1236 = vsub.f32 %v1220, %v1230
  %v1237 = vsub.f32 %v1221, %v1233
  %v1238 = vmul.f32 %v1234, 1.442695
  %v1239 = vpow.pop %v1238
  %v1240 = vmul.f32 %v1235, 1.442695
  %v1241 = vpow.pop %v1240
  %v1242 = vmul.f32 %v1236, 1.442695
  %v1243 = vpow.pop %v1242
  %v1244 = vmul.f32 %v1237, 1.442695
  %v1245 = vpow.pop %v1244
  %v1246 = vsel %vm241, %v1239, 0.0
  %1247 = vadd.xlane.f32.xlu0 %v1246
  %v1248 = vpop.xlane.xlu0 %1247
  %v1249 = vsel %vm241, %v1241, 0.0
  %1250 = vadd.xlane.f32.xlu0 %v1249
  %v1251 = vpop.xlane.xlu0 %1250
  %v1252 = vsel %vm241, %v1243, 0.0
  %1253 = vadd.xlane.f32.xlu0 %v1252
  %v1254 = vpop.xlane.xlu0 %1253
  %v1255 = vsel %vm241, %v1245, 0.0
  %1256 = vadd.xlane.f32.xlu0 %v1255
  %v1257 = vpop.xlane.xlu0 %1256
  %v1258 = vrcp.pop %v1248
  %v1259 = vrcp.pop %v1251
  %v1260 = vrcp.pop %v1254
  %v1261 = vrcp.pop %v1257
  %v1262 = vmul.f32 %v1239, %v1258
  %v1263 = vmul.f32 %v1241, %v1259
  %v1264 = vmul.f32 %v1243, %v1260
  %v1265 = vmul.f32 %v1245, %v1261
  %1266 = vrot.lane.b32.xlu0 %v1116, 127
  %v1267 = vpop.permute.xlu0 %1266
  %1268 = vrot.lane.b32.xlu0 %v1121, 127
  %v1269 = vpop.permute.xlu0 %1268
  %1270 = vrot.lane.b32.xlu0 %v1126, 127
  %v1271 = vpop.permute.xlu0 %1270
  %1272 = vrot.lane.b32.xlu0 %v1131, 127
  %v1273 = vpop.permute.xlu0 %1272
  %v1278 = vadd.f32 %v1116, %v1267
  %v1279 = vadd.f32 %v1121, %v1269
  %v1280 = vadd.f32 %v1126, %v1271
  %v1281 = vadd.f32 %v1131, %v1273
  %vm1282 = vcmp.gt.f32.partialorder %v1278, 0.0
  %vm1283 = vcmp.gt.f32.partialorder %v1279, 0.0
  %vm1284 = vcmp.gt.f32.partialorder %v1280, 0.0
  %vm1285 = vcmp.gt.f32.partialorder %v1281, 0.0
  %v1286 = vmul.f32 %v1278, 0.2
  %v1287 = vmul.f32 %v1279, 0.2
  %v1288 = vmul.f32 %v1280, 0.2
  %v1289 = vmul.f32 %v1281, 0.2
  %v1290 = vsel %vm1282, %v1278, %v1286
  %v1291 = vsel %vm1283, %v1279, %v1287
  %v1292 = vsel %vm1284, %v1280, %v1288
  %v1293 = vsel %vm1285, %v1281, %v1289
  %v1294 = vadd.f32 %v1290, %v319
  %v1295 = vadd.f32 %v1291, %v321
  %v1296 = vadd.f32 %v1292, %v323
  %v1297 = vadd.f32 %v1293, %v325
  %v1298 = vsub.f32 %v1294, %v1224
  %v1299 = vsub.f32 %v1295, %v1227
  %v1300 = vsub.f32 %v1296, %v1230
  %v1301 = vsub.f32 %v1297, %v1233
  %v1302 = vmul.f32 %v1298, 1.442695
  %v1303 = vpow.pop %v1302
  %v1304 = vmul.f32 %v1299, 1.442695
  %v1305 = vpow.pop %v1304
  %v1306 = vmul.f32 %v1300, 1.442695
  %v1307 = vpow.pop %v1306
  %v1308 = vmul.f32 %v1301, 1.442695
  %v1309 = vpow.pop %v1308
  %v1310 = vmul.f32 %v1303, %v1258
  %v1311 = vmul.f32 %v1305, %v1259
  %v1312 = vmul.f32 %v1307, %v1260
  %v1313 = vmul.f32 %v1309, %v1261
  %1314 = vrot.lane.b32.xlu0 %v1116, 96
  %v1315 = vpop.permute.xlu0 %1314
  %1316 = vrot.lane.b32.xlu0 %v1121, 96
  %v1317 = vpop.permute.xlu0 %1316
  %1318 = vrot.lane.b32.xlu0 %v1126, 96
  %v1319 = vpop.permute.xlu0 %1318
  %1320 = vrot.lane.b32.xlu0 %v1131, 96
  %v1321 = vpop.permute.xlu0 %1320
  %v1326 = vsub.f32 %v1116, %v1315
  %v1327 = vsub.f32 %v1121, %v1317
  %v1328 = vsub.f32 %v1126, %v1319
  %v1329 = vsub.f32 %v1131, %v1321
  %1331 = vset.pattern.permute.xlu0 64
  %1332 = vperm.xlu0 %1331, %v1310
  %v1333 = vpop.permute.xlu0 %1332
  %1336 = vset.pattern.permute.xlu0 64
  %1337 = vperm.xlu0 %1336, %v1311
  %v1338 = vpop.permute.xlu0 %1337
  %1341 = vset.pattern.permute.xlu0 64
  %1342 = vperm.xlu0 %1341, %v1312
  %v1343 = vpop.permute.xlu0 %1342
  %1346 = vset.pattern.permute.xlu0 64
  %1347 = vperm.xlu0 %1346, %v1313
  %v1348 = vpop.permute.xlu0 %1347
  %v1350 = vmul.f32 %v1333, %v1326
  %v1351 = vmul.f32 %v1338, %v1327
  %v1352 = vmul.f32 %v1343, %v1328
  %v1353 = vmul.f32 %v1348, %v1329
  %v1355 = vsel %vm241, %v1262, 0
  %v1358 = vsel %vm241, %v1263, 0
  %v1361 = vsel %vm241, %v1264, 0
  %v1364 = vsel %vm241, %v1265, 0
  %1366 = vmatprep.subr.mxu0 0.0
  %1367 = vmatpush1.msra.mxu0 %v1315
  %1368 = vmatprep.subr.mxu0 0.0
  %1369 = vmatpush1.msra.mxu0 %v1317
  %1370 = vmatprep.subr.mxu0 0.0
  %1371 = vmatpush1.msra.mxu0 %v1319
  %1372 = vmatprep.subr.mxu0 0.0
  %1373 = vmatpush1.msra.mxu0 %v1321
  %1374 = vmatprep.subr.mxu0 0.0
  %1375 = vmatpush1.msra.mxu0 0.0
  %1376 = vmatprep.subr.mxu0 0.0
  %1377 = vmatpush1.msra.mxu0 0.0
  %1378 = vmatprep.subr.mxu0 0.0
  %1379 = vmatpush1.msra.mxu0 0.0
  %1380 = vmatprep.subr.mxu0 0.0
  %1381 = vmatpush1.msra.mxu0 0.0
  %1382 = vmatprep.subr.mxu0 0.0
  %1383 = vmatpush1.msra.mxu0 0.0
  %1384 = vmatprep.subr.mxu0 0.0
  %1385 = vmatpush1.msra.mxu0 0.0
  %1386 = vmatprep.subr.mxu0 0.0
  %1387 = vmatpush1.msra.mxu0 0.0
  %1388 = vmatprep.subr.mxu0 0.0
  %1389 = vmatpush1.msra.mxu0 0.0
  %1390 = vmatprep.subr.mxu0 0.0
  %1391 = vmatpush1.msra.mxu0 0.0
  %1392 = vmatprep.subr.mxu0 0.0
  %1393 = vmatpush1.msra.mxu0 0.0
  %1394 = vmatprep.subr.mxu0 0.0
  %1395 = vmatpush1.msra.mxu0 0.0
  %1396 = vmatprep.subr.mxu0 0.0
  %1397 = vmatpush1.msra.mxu0 0.0
  %1398 = vmatprep.subr.mxu0 0.0
  %1399 = vmatpush1.msra.mxu0 0.0
  %1400 = vmatprep.subr.mxu0 0.0
  %1401 = vmatpush1.msra.mxu0 0.0
  %1402 = vmatprep.subr.mxu0 0.0
  %1403 = vmatpush1.msra.mxu0 0.0
  %1404 = vmatprep.subr.mxu0 0.0
  %1405 = vmatpush1.msra.mxu0 0.0
  %1406 = vmatprep.subr.mxu0 0.0
  %1407 = vmatpush1.msra.mxu0 0.0
  %1408 = vmatprep.subr.mxu0 0.0
  %1409 = vmatpush1.msra.mxu0 0.0
  %1410 = vmatprep.subr.mxu0 0.0
  %1411 = vmatpush1.msra.mxu0 0.0
  %1412 = vmatprep.subr.mxu0 0.0
  %1413 = vmatpush1.msra.mxu0 0.0
  %1414 = vmatprep.subr.mxu0 0.0
  %1415 = vmatpush1.msra.mxu0 0.0
  %1416 = vmatprep.subr.mxu0 0.0
  %1417 = vmatpush1.msra.mxu0 0.0
  %1418 = vmatprep.subr.mxu0 0.0
  %1419 = vmatpush1.msra.mxu0 0.0
  %1420 = vmatprep.subr.mxu0 0.0
  %1421 = vmatpush1.msra.mxu0 0.0
  %1422 = vmatprep.subr.mxu0 0.0
  %1423 = vmatpush1.msra.mxu0 0.0
  %1424 = vmatprep.subr.mxu0 0.0
  %1425 = vmatpush1.msra.mxu0 0.0
  %1426 = vmatprep.subr.mxu0 0.0
  %1427 = vmatpush1.msra.mxu0 0.0
  %1428 = vmatprep.subr.mxu0 0.0
  %1429 = vmatpush1.msra.mxu0 0.0
  %1430 = vmatprep.mubr.f32.mxu0 0.0
  %1431 = vmatmul.mubr.f32.gmra.mrb[0].mxu0 %v1355
  %v1432 = vpop.f32.mrb[0].mxu0
  %v1433 = vadd.f32 %v1350, %v1432
  %v1434 = vpop.f32.mrb[0].mxu0
  %1435 = vmatprep.mubr.f32.mxu0 0.0
  %1436 = vmatmul.mubr.f32.gmra.mrb[0].mxu0 %v1358
  %v1437 = vpop.f32.mrb[0].mxu0
  %v1438 = vadd.f32 %v1351, %v1437
  %v1439 = vpop.f32.mrb[0].mxu0
  %1440 = vmatprep.mubr.f32.mxu0 0.0
  %1441 = vmatmul.mubr.f32.gmra.mrb[0].mxu0 %v1361
  %v1442 = vpop.f32.mrb[0].mxu0
  %v1443 = vadd.f32 %v1352, %v1442
  %v1444 = vpop.f32.mrb[0].mxu0
  %1445 = vmatprep.mubr.f32.mxu0 0.0
  %1446 = vmatmul.mubr.f32.gmra.mrb[0].mxu0 %v1364
  %v1447 = vpop.f32.mrb[0].mxu0
  %v1448 = vadd.f32 %v1353, %v1447
  %v1449 = vpop.f32.mrb[0].mxu0
  %1450 = vdwg.mxu0
  %s1451 = scalar_lea.vmem %s7, 1
  %v1452 = vld [vmem:[%s1451] sm:$0x1]
  %s1453 = scalar_lea.vmem %s8, 1
  %v1454 = vld [vmem:[%s1453] sm:$0x1]
  %v1455 = vsel %vm241, %v1433, 0.0
  %v1456 = vsel %vm241, %v1438, 0.0
  %v1457 = vadd.f32 %v1455, %v1456
  %v1458 = vsel %vm241, %v1443, 0.0
  %v1459 = vadd.f32 %v1457, %v1458
  %v1460 = vsel %vm241, %v1448, 0.0
  %v1461 = vadd.f32 %v1459, %v1460
  %v1462 = vrot.slane %v1461, 4
  %v1463 = vadd.f32 %v1461, %v1462
  %v1464 = vrot.slane %v1463, 2
  %v1465 = vadd.f32 %v1463, %v1464
  %v1466 = vrot.slane %v1465, 1
  %v1467 = vadd.f32 %v1465, %v1466
  %v1468 = vmul.f32 %v1467, %v502
  %v1469 = vsub.f32 %v1433, %v1468
  %v1470 = vsub.f32 %v1438, %v1468
  %v1471 = vsub.f32 %v1443, %v1468
  %v1472 = vsub.f32 %v1448, %v1468
  %v1473 = vmul.f32 %v1469, %v1469
  %v1474 = vmul.f32 %v1470, %v1470
  %v1475 = vmul.f32 %v1471, %v1471
  %v1476 = vmul.f32 %v1472, %v1472
  %v1477 = vsel %vm241, %v1473, 0.0
  %v1478 = vsel %vm241, %v1474, 0.0
  %v1479 = vadd.f32 %v1477, %v1478
  %v1480 = vsel %vm241, %v1475, 0.0
  %v1481 = vadd.f32 %v1479, %v1480
  %v1482 = vsel %vm241, %v1476, 0.0
  %v1483 = vadd.f32 %v1481, %v1482
  %v1484 = vrot.slane %v1483, 4
  %v1485 = vadd.f32 %v1483, %v1484
  %v1486 = vrot.slane %v1485, 2
  %v1487 = vadd.f32 %v1485, %v1486
  %v1488 = vrot.slane %v1487, 1
  %v1489 = vadd.f32 %v1487, %v1488
  %v1490 = vmul.f32 %v1489, %v502
  %v1491 = vadd.f32 %v1490, 1e-05
  %v1492 = vrsqrt.pop %v1491
  %v1493 = vmul.f32 %v1492, %v1452
  %v1494 = vlaneseq
  %v1495 = vshrl.u32 %v1494, 7
  %v1496 = vsub.s32 0, %v1495
  %v1497 = vrot.slane %v1493, %v1496
  %v1498 = vmul.f32 %v1469, %v1497
  %v1499 = vmul.f32 %v1470, %v1497
  %v1500 = vmul.f32 %v1471, %v1497
  %v1501 = vmul.f32 %v1472, %v1497
  %v1503 = vlaneseq
  %v1504 = vshrl.u32 %v1503, 7
  %v1505 = vsub.s32 0, %v1504
  %v1506 = vrot.slane %v1454, %v1505
  %v1508 = vadd.f32 %v1498, %v1506
  %v1509 = vadd.f32 %v1499, %v1506
  %v1510 = vadd.f32 %v1500, %v1506
  %v1511 = vadd.f32 %v1501, %v1506
  %v1512 = vmax.f32 %v1508, 0.0
  %v1513 = vmax.f32 %v1509, 0.0
  %v1514 = vmax.f32 %v1510, 0.0
  %v1515 = vmax.f32 %v1511, 0.0
  %v1516 = vadd.f32 %v1512, %v547
  %v1517 = vadd.f32 %v1513, %v548
  %v1518 = vadd.f32 %v1514, %v549
  %v1519 = vadd.f32 %v1515, %v550
  %s1520 = scalar_lea.vmem %s6, 64
  %v1521 = vld [vmem:[%s1520] sm:$0xff]
  %v1522 = vld [vmem:[%s1520 + $0x8] sm:$0xff]
  %v1523 = vld [vmem:[%s1520 + $0x10] sm:$0xff]
  %v1524 = vld [vmem:[%s1520 + $0x18] sm:$0xff]
  %v1526 = vsel %vm241, %v1516, 0
  %v1529 = vsel %vm241, %v1517, 0
  %v1532 = vsel %vm241, %v1518, 0
  %v1535 = vsel %vm241, %v1519, 0
  %1537 = vmatprep.subr.mxu0 0.0
  %1538 = vmatpush1.msra.mxu0 %v1521
  %1539 = vmatprep.subr.mxu0 0.0
  %1540 = vmatpush1.msra.mxu0 %v1522
  %1541 = vmatprep.subr.mxu0 0.0
  %1542 = vmatpush1.msra.mxu0 %v1523
  %1543 = vmatprep.subr.mxu0 0.0
  %1544 = vmatpush1.msra.mxu0 %v1524
  %1545 = vmatprep.subr.mxu0 0.0
  %1546 = vmatpush1.msra.mxu0 0.0
  %1547 = vmatprep.subr.mxu0 0.0
  %1548 = vmatpush1.msra.mxu0 0.0
  %1549 = vmatprep.subr.mxu0 0.0
  %1550 = vmatpush1.msra.mxu0 0.0
  %1551 = vmatprep.subr.mxu0 0.0
  %1552 = vmatpush1.msra.mxu0 0.0
  %1553 = vmatprep.subr.mxu0 0.0
  %1554 = vmatpush1.msra.mxu0 0.0
  %1555 = vmatprep.subr.mxu0 0.0
  %1556 = vmatpush1.msra.mxu0 0.0
  %1557 = vmatprep.subr.mxu0 0.0
  %1558 = vmatpush1.msra.mxu0 0.0
  %1559 = vmatprep.subr.mxu0 0.0
  %1560 = vmatpush1.msra.mxu0 0.0
  %1561 = vmatprep.subr.mxu0 0.0
  %1562 = vmatpush1.msra.mxu0 0.0
  %1563 = vmatprep.subr.mxu0 0.0
  %1564 = vmatpush1.msra.mxu0 0.0
  %1565 = vmatprep.subr.mxu0 0.0
  %1566 = vmatpush1.msra.mxu0 0.0
  %1567 = vmatprep.subr.mxu0 0.0
  %1568 = vmatpush1.msra.mxu0 0.0
  %1569 = vmatprep.subr.mxu0 0.0
  %1570 = vmatpush1.msra.mxu0 0.0
  %1571 = vmatprep.subr.mxu0 0.0
  %1572 = vmatpush1.msra.mxu0 0.0
  %1573 = vmatprep.subr.mxu0 0.0
  %1574 = vmatpush1.msra.mxu0 0.0
  %1575 = vmatprep.subr.mxu0 0.0
  %1576 = vmatpush1.msra.mxu0 0.0
  %1577 = vmatprep.subr.mxu0 0.0
  %1578 = vmatpush1.msra.mxu0 0.0
  %1579 = vmatprep.subr.mxu0 0.0
  %1580 = vmatpush1.msra.mxu0 0.0
  %1581 = vmatprep.subr.mxu0 0.0
  %1582 = vmatpush1.msra.mxu0 0.0
  %1583 = vmatprep.subr.mxu0 0.0
  %1584 = vmatpush1.msra.mxu0 0.0
  %1585 = vmatprep.subr.mxu0 0.0
  %1586 = vmatpush1.msra.mxu0 0.0
  %1587 = vmatprep.subr.mxu0 0.0
  %1588 = vmatpush1.msra.mxu0 0.0
  %1589 = vmatprep.subr.mxu0 0.0
  %1590 = vmatpush1.msra.mxu0 0.0
  %1591 = vmatprep.subr.mxu0 0.0
  %1592 = vmatpush1.msra.mxu0 0.0
  %1593 = vmatprep.subr.mxu0 0.0
  %1594 = vmatpush1.msra.mxu0 0.0
  %1595 = vmatprep.subr.mxu0 0.0
  %1596 = vmatpush1.msra.mxu0 0.0
  %1597 = vmatprep.subr.mxu0 0.0
  %1598 = vmatpush1.msra.mxu0 0.0
  %1599 = vmatprep.subr.mxu0 0.0
  %1600 = vmatpush1.msra.mxu0 0.0
  %1601 = vmatprep.mubr.f32.mxu0 0.0
  %1602 = vmatmul.mubr.f32.gmra.mrb[0].mxu0 %v1526
  %v1603 = vpop.f32.mrb[0].mxu0
  %v1604 = vadd.f32 0.0, %v1603
  %v1605 = vpop.f32.mrb[0].mxu0
  %1606 = vmatprep.mubr.f32.mxu0 0.0
  %1607 = vmatmul.mubr.f32.gmra.mrb[0].mxu0 %v1529
  %v1608 = vpop.f32.mrb[0].mxu0
  %v1609 = vadd.f32 0.0, %v1608
  %v1610 = vpop.f32.mrb[0].mxu0
  %1611 = vmatprep.mubr.f32.mxu0 0.0
  %1612 = vmatmul.mubr.f32.gmra.mrb[0].mxu0 %v1532
  %v1613 = vpop.f32.mrb[0].mxu0
  %v1614 = vadd.f32 0.0, %v1613
  %v1615 = vpop.f32.mrb[0].mxu0
  %1616 = vmatprep.mubr.f32.mxu0 0.0
  %1617 = vmatmul.mubr.f32.gmra.mrb[0].mxu0 %v1535
  %v1618 = vpop.f32.mrb[0].mxu0
  %v1619 = vadd.f32 0.0, %v1618
  %v1620 = vpop.f32.mrb[0].mxu0
  %1621 = vdwg.mxu0
  %1626 = vrot.lane.b32.xlu0 %v1604, 63
  %v1627 = vpop.permute.xlu0 %1626
  %1628 = vrot.lane.b32.xlu0 %v1609, 63
  %v1629 = vpop.permute.xlu0 %1628
  %1630 = vrot.lane.b32.xlu0 %v1614, 63
  %v1631 = vpop.permute.xlu0 %1630
  %1632 = vrot.lane.b32.xlu0 %v1619, 63
  %v1633 = vpop.permute.xlu0 %1632
  %1638 = vxpose.xlu0.b32.start [1/16] %v1627, 128
  %1639 = vxpose.xlu0.b32.cont [2/16] %v1629, 128
  %1640 = vxpose.xlu0.b32.cont [3/16] %v1631, 128
  %1641 = vxpose.xlu0.b32.cont [4/16] %v1633, 128
  %1642 = vxpose.xlu0.b32.cont [5/16] 0.0, 128
  %1643 = vxpose.xlu0.b32.cont [6/16] 0.0, 128
  %1644 = vxpose.xlu0.b32.cont [7/16] 0.0, 128
  %1645 = vxpose.xlu0.b32.cont [8/16] 0.0, 128
  %1646 = vxpose.xlu0.b32.cont [9/16] 0.0, 128
  %1647 = vxpose.xlu0.b32.cont [10/16] 0.0, 128
  %1648 = vxpose.xlu0.b32.cont [11/16] 0.0, 128
  %1649 = vxpose.xlu0.b32.cont [12/16] 0.0, 128
  %1650 = vxpose.xlu0.b32.cont [13/16] 0.0, 128
  %1651 = vxpose.xlu0.b32.cont [14/16] 0.0, 128
  %1652 = vxpose.xlu0.b32.cont [15/16] 0.0, 128
  %1653 = vxpose.xlu0.b32.end [16/16] 0.0, 128
  %v1654 = vpop.trf.xlu0
  %v1655 = vpop.trf.xlu0
  %v1656 = vpop.trf.xlu0
  %v1657 = vpop.trf.xlu0
  %v1658 = vpop.trf.xlu0
  %v1659 = vpop.trf.xlu0
  %v1660 = vpop.trf.xlu0
  %v1661 = vpop.trf.xlu0
  %v1662 = vpop.trf.xlu0
  %v1663 = vpop.trf.xlu0
  %v1664 = vpop.trf.xlu0
  %v1665 = vpop.trf.xlu0
  %v1666 = vpop.trf.xlu0
  %v1667 = vpop.trf.xlu0
  %v1668 = vpop.trf.xlu0
  %v1669 = vpop.trf.xlu0
  %1670 = vset.pattern.permute.xlu0 64
  %1671 = vperm.xlu0 %1670, %v1604
  %v1672 = vpop.permute.xlu0 %1671
  %1674 = vset.pattern.permute.xlu0 64
  %1675 = vperm.xlu0 %1674, %v1609
  %v1676 = vpop.permute.xlu0 %1675
  %1678 = vset.pattern.permute.xlu0 64
  %1679 = vperm.xlu0 %1678, %v1614
  %v1680 = vpop.permute.xlu0 %1679
  %1682 = vset.pattern.permute.xlu0 64
  %1683 = vperm.xlu0 %1682, %v1619
  %v1684 = vpop.permute.xlu0 %1683
  %v1686 = vlaneseq
  %v1687 = vshrl.u32 %v1686, 7
  %v1688 = vsub.s32 0, %v1687
  %v1689 = vrot.slane %v1654, %v1688
  %v1690 = vadd.f32 %v1672, %v1689
  %v1691 = vadd.f32 %v1676, %v1689
  %v1692 = vadd.f32 %v1680, %v1689
  %v1693 = vadd.f32 %v1684, %v1689
  %vm1694 = vcmp.gt.f32.partialorder %v1690, 0.0
  %vm1695 = vcmp.gt.f32.partialorder %v1691, 0.0
  %vm1696 = vcmp.gt.f32.partialorder %v1692, 0.0
  %vm1697 = vcmp.gt.f32.partialorder %v1693, 0.0
  %v1698 = vmul.f32 %v1690, 0.2
  %v1699 = vmul.f32 %v1691, 0.2
  %v1700 = vmul.f32 %v1692, 0.2
  %v1701 = vmul.f32 %v1693, 0.2
  %v1702 = vsel %vm1694, %v1690, %v1698
  %v1703 = vsel %vm1695, %v1691, %v1699
  %v1704 = vsel %vm1696, %v1692, %v1700
  %v1705 = vsel %vm1697, %v1693, %v1701
  %v1706 = vadd.f32 %v1702, %v38
  %v1707 = vadd.f32 %v1703, %v39
  %v1708 = vadd.f32 %v1704, %v40
  %v1709 = vadd.f32 %v1705, %v41
  %v1710 = vsel %vm241, %v1706, -inf
  %1711 = vmax.xlane.f32.xlu0 %v1710
  %v1712 = vpop.xlane.xlu0 %1711
  %v1713 = vsel %vm241, %v1707, -inf
  %1714 = vmax.xlane.f32.xlu0 %v1713
  %v1715 = vpop.xlane.xlu0 %1714
  %v1716 = vsel %vm241, %v1708, -inf
  %1717 = vmax.xlane.f32.xlu0 %v1716
  %v1718 = vpop.xlane.xlu0 %1717
  %v1719 = vsel %vm241, %v1709, -inf
  %1720 = vmax.xlane.f32.xlu0 %v1719
  %v1721 = vpop.xlane.xlu0 %1720
  %v1722 = vsub.f32 %v1706, %v1712
  %v1723 = vsub.f32 %v1707, %v1715
  %v1724 = vsub.f32 %v1708, %v1718
  %v1725 = vsub.f32 %v1709, %v1721
  %v1726 = vmul.f32 %v1722, 1.442695
  %v1727 = vpow.pop %v1726
  %v1728 = vmul.f32 %v1723, 1.442695
  %v1729 = vpow.pop %v1728
  %v1730 = vmul.f32 %v1724, 1.442695
  %v1731 = vpow.pop %v1730
  %v1732 = vmul.f32 %v1725, 1.442695
  %v1733 = vpow.pop %v1732
  %v1734 = vsel %vm241, %v1727, 0.0
  %1735 = vadd.xlane.f32.xlu0 %v1734
  %v1736 = vpop.xlane.xlu0 %1735
  %v1737 = vsel %vm241, %v1729, 0.0
  %1738 = vadd.xlane.f32.xlu0 %v1737
  %v1739 = vpop.xlane.xlu0 %1738
  %v1740 = vsel %vm241, %v1731, 0.0
  %1741 = vadd.xlane.f32.xlu0 %v1740
  %v1742 = vpop.xlane.xlu0 %1741
  %v1743 = vsel %vm241, %v1733, 0.0
  %1744 = vadd.xlane.f32.xlu0 %v1743
  %v1745 = vpop.xlane.xlu0 %1744
  %v1746 = vrcp.pop %v1736
  %v1747 = vrcp.pop %v1739
  %v1748 = vrcp.pop %v1742
  %v1749 = vrcp.pop %v1745
  %v1750 = vmul.f32 %v1727, %v1746
  %v1751 = vmul.f32 %v1729, %v1747
  %v1752 = vmul.f32 %v1731, %v1748
  %v1753 = vmul.f32 %v1733, %v1749
  %1754 = vrot.lane.b32.xlu0 %v1604, 127
  %v1755 = vpop.permute.xlu0 %1754
  %1756 = vrot.lane.b32.xlu0 %v1609, 127
  %v1757 = vpop.permute.xlu0 %1756
  %1758 = vrot.lane.b32.xlu0 %v1614, 127
  %v1759 = vpop.permute.xlu0 %1758
  %1760 = vrot.lane.b32.xlu0 %v1619, 127
  %v1761 = vpop.permute.xlu0 %1760
  %v1766 = vadd.f32 %v1604, %v1755
  %v1767 = vadd.f32 %v1609, %v1757
  %v1768 = vadd.f32 %v1614, %v1759
  %v1769 = vadd.f32 %v1619, %v1761
  %vm1770 = vcmp.gt.f32.partialorder %v1766, 0.0
  %vm1771 = vcmp.gt.f32.partialorder %v1767, 0.0
  %vm1772 = vcmp.gt.f32.partialorder %v1768, 0.0
  %vm1773 = vcmp.gt.f32.partialorder %v1769, 0.0
  %v1774 = vmul.f32 %v1766, 0.2
  %v1775 = vmul.f32 %v1767, 0.2
  %v1776 = vmul.f32 %v1768, 0.2
  %v1777 = vmul.f32 %v1769, 0.2
  %v1778 = vsel %vm1770, %v1766, %v1774
  %v1779 = vsel %vm1771, %v1767, %v1775
  %v1780 = vsel %vm1772, %v1768, %v1776
  %v1781 = vsel %vm1773, %v1769, %v1777
  %v1782 = vadd.f32 %v1778, %v319
  %v1783 = vadd.f32 %v1779, %v321
  %v1784 = vadd.f32 %v1780, %v323
  %v1785 = vadd.f32 %v1781, %v325
  %v1786 = vsub.f32 %v1782, %v1712
  %v1787 = vsub.f32 %v1783, %v1715
  %v1788 = vsub.f32 %v1784, %v1718
  %v1789 = vsub.f32 %v1785, %v1721
  %v1790 = vmul.f32 %v1786, 1.442695
  %v1791 = vpow.pop %v1790
  %v1792 = vmul.f32 %v1787, 1.442695
  %v1793 = vpow.pop %v1792
  %v1794 = vmul.f32 %v1788, 1.442695
  %v1795 = vpow.pop %v1794
  %v1796 = vmul.f32 %v1789, 1.442695
  %v1797 = vpow.pop %v1796
  %v1798 = vmul.f32 %v1791, %v1746
  %v1799 = vmul.f32 %v1793, %v1747
  %v1800 = vmul.f32 %v1795, %v1748
  %v1801 = vmul.f32 %v1797, %v1749
  %1802 = vrot.lane.b32.xlu0 %v1604, 96
  %v1803 = vpop.permute.xlu0 %1802
  %1804 = vrot.lane.b32.xlu0 %v1609, 96
  %v1805 = vpop.permute.xlu0 %1804
  %1806 = vrot.lane.b32.xlu0 %v1614, 96
  %v1807 = vpop.permute.xlu0 %1806
  %1808 = vrot.lane.b32.xlu0 %v1619, 96
  %v1809 = vpop.permute.xlu0 %1808
  %v1814 = vsub.f32 %v1604, %v1803
  %v1815 = vsub.f32 %v1609, %v1805
  %v1816 = vsub.f32 %v1614, %v1807
  %v1817 = vsub.f32 %v1619, %v1809
  %1819 = vset.pattern.permute.xlu0 64
  %1820 = vperm.xlu0 %1819, %v1798
  %v1821 = vpop.permute.xlu0 %1820
  %1824 = vset.pattern.permute.xlu0 64
  %1825 = vperm.xlu0 %1824, %v1799
  %v1826 = vpop.permute.xlu0 %1825
  %1829 = vset.pattern.permute.xlu0 64
  %1830 = vperm.xlu0 %1829, %v1800
  %v1831 = vpop.permute.xlu0 %1830
  %1834 = vset.pattern.permute.xlu0 64
  %1835 = vperm.xlu0 %1834, %v1801
  %v1836 = vpop.permute.xlu0 %1835
  %v1838 = vmul.f32 %v1821, %v1814
  %v1839 = vmul.f32 %v1826, %v1815
  %v1840 = vmul.f32 %v1831, %v1816
  %v1841 = vmul.f32 %v1836, %v1817
  %v1843 = vsel %vm241, %v1750, 0
  %v1846 = vsel %vm241, %v1751, 0
  %v1849 = vsel %vm241, %v1752, 0
  %v1852 = vsel %vm241, %v1753, 0
  %1854 = vmatprep.subr.mxu0 0.0
  %1855 = vmatpush1.msra.mxu0 %v1803
  %1856 = vmatprep.subr.mxu0 0.0
  %1857 = vmatpush1.msra.mxu0 %v1805
  %1858 = vmatprep.subr.mxu0 0.0
  %1859 = vmatpush1.msra.mxu0 %v1807
  %1860 = vmatprep.subr.mxu0 0.0
  %1861 = vmatpush1.msra.mxu0 %v1809
  %1862 = vmatprep.subr.mxu0 0.0
  %1863 = vmatpush1.msra.mxu0 0.0
  %1864 = vmatprep.subr.mxu0 0.0
  %1865 = vmatpush1.msra.mxu0 0.0
  %1866 = vmatprep.subr.mxu0 0.0
  %1867 = vmatpush1.msra.mxu0 0.0
  %1868 = vmatprep.subr.mxu0 0.0
  %1869 = vmatpush1.msra.mxu0 0.0
  %1870 = vmatprep.subr.mxu0 0.0
  %1871 = vmatpush1.msra.mxu0 0.0
  %1872 = vmatprep.subr.mxu0 0.0
  %1873 = vmatpush1.msra.mxu0 0.0
  %1874 = vmatprep.subr.mxu0 0.0
  %1875 = vmatpush1.msra.mxu0 0.0
  %1876 = vmatprep.subr.mxu0 0.0
  %1877 = vmatpush1.msra.mxu0 0.0
  %1878 = vmatprep.subr.mxu0 0.0
  %1879 = vmatpush1.msra.mxu0 0.0
  %1880 = vmatprep.subr.mxu0 0.0
  %1881 = vmatpush1.msra.mxu0 0.0
  %1882 = vmatprep.subr.mxu0 0.0
  %1883 = vmatpush1.msra.mxu0 0.0
  %1884 = vmatprep.subr.mxu0 0.0
  %1885 = vmatpush1.msra.mxu0 0.0
  %1886 = vmatprep.subr.mxu0 0.0
  %1887 = vmatpush1.msra.mxu0 0.0
  %1888 = vmatprep.subr.mxu0 0.0
  %1889 = vmatpush1.msra.mxu0 0.0
  %1890 = vmatprep.subr.mxu0 0.0
  %1891 = vmatpush1.msra.mxu0 0.0
  %1892 = vmatprep.subr.mxu0 0.0
  %1893 = vmatpush1.msra.mxu0 0.0
  %1894 = vmatprep.subr.mxu0 0.0
  %1895 = vmatpush1.msra.mxu0 0.0
  %1896 = vmatprep.subr.mxu0 0.0
  %1897 = vmatpush1.msra.mxu0 0.0
  %1898 = vmatprep.subr.mxu0 0.0
  %1899 = vmatpush1.msra.mxu0 0.0
  %1900 = vmatprep.subr.mxu0 0.0
  %1901 = vmatpush1.msra.mxu0 0.0
  %1902 = vmatprep.subr.mxu0 0.0
  %1903 = vmatpush1.msra.mxu0 0.0
  %1904 = vmatprep.subr.mxu0 0.0
  %1905 = vmatpush1.msra.mxu0 0.0
  %1906 = vmatprep.subr.mxu0 0.0
  %1907 = vmatpush1.msra.mxu0 0.0
  %1908 = vmatprep.subr.mxu0 0.0
  %1909 = vmatpush1.msra.mxu0 0.0
  %1910 = vmatprep.subr.mxu0 0.0
  %1911 = vmatpush1.msra.mxu0 0.0
  %1912 = vmatprep.subr.mxu0 0.0
  %1913 = vmatpush1.msra.mxu0 0.0
  %1914 = vmatprep.subr.mxu0 0.0
  %1915 = vmatpush1.msra.mxu0 0.0
  %1916 = vmatprep.subr.mxu0 0.0
  %1917 = vmatpush1.msra.mxu0 0.0
  %1918 = vmatprep.mubr.f32.mxu0 0.0
  %1919 = vmatmul.mubr.f32.gmra.mrb[0].mxu0 %v1843
  %v1920 = vpop.f32.mrb[0].mxu0
  %v1921 = vadd.f32 %v1838, %v1920
  %v1922 = vpop.f32.mrb[0].mxu0
  %1923 = vmatprep.mubr.f32.mxu0 0.0
  %1924 = vmatmul.mubr.f32.gmra.mrb[0].mxu0 %v1846
  %v1925 = vpop.f32.mrb[0].mxu0
  %v1926 = vadd.f32 %v1839, %v1925
  %v1927 = vpop.f32.mrb[0].mxu0
  %1928 = vmatprep.mubr.f32.mxu0 0.0
  %1929 = vmatmul.mubr.f32.gmra.mrb[0].mxu0 %v1849
  %v1930 = vpop.f32.mrb[0].mxu0
  %v1931 = vadd.f32 %v1840, %v1930
  %v1932 = vpop.f32.mrb[0].mxu0
  %1933 = vmatprep.mubr.f32.mxu0 0.0
  %1934 = vmatmul.mubr.f32.gmra.mrb[0].mxu0 %v1852
  %v1935 = vpop.f32.mrb[0].mxu0
  %v1936 = vadd.f32 %v1841, %v1935
  %v1937 = vpop.f32.mrb[0].mxu0
  %1938 = vdwg.mxu0
  %s1939 = scalar_lea.vmem %s7, 2
  %v1940 = vld [vmem:[%s1939] sm:$0x1]
  %s1941 = scalar_lea.vmem %s8, 2
  %v1942 = vld [vmem:[%s1941] sm:$0x1]
  %v1943 = vsel %vm241, %v1921, 0.0
  %v1944 = vsel %vm241, %v1926, 0.0
  %v1945 = vadd.f32 %v1943, %v1944
  %v1946 = vsel %vm241, %v1931, 0.0
  %v1947 = vadd.f32 %v1945, %v1946
  %v1948 = vsel %vm241, %v1936, 0.0
  %v1949 = vadd.f32 %v1947, %v1948
  %v1950 = vrot.slane %v1949, 4
  %v1951 = vadd.f32 %v1949, %v1950
  %v1952 = vrot.slane %v1951, 2
  %v1953 = vadd.f32 %v1951, %v1952
  %v1954 = vrot.slane %v1953, 1
  %v1955 = vadd.f32 %v1953, %v1954
  %v1956 = vmul.f32 %v1955, %v502
  %v1957 = vsub.f32 %v1921, %v1956
  %v1958 = vsub.f32 %v1926, %v1956
  %v1959 = vsub.f32 %v1931, %v1956
  %v1960 = vsub.f32 %v1936, %v1956
  %v1961 = vmul.f32 %v1957, %v1957
  %v1962 = vmul.f32 %v1958, %v1958
  %v1963 = vmul.f32 %v1959, %v1959
  %v1964 = vmul.f32 %v1960, %v1960
  %v1965 = vsel %vm241, %v1961, 0.0
  %v1966 = vsel %vm241, %v1962, 0.0
  %v1967 = vadd.f32 %v1965, %v1966
  %v1968 = vsel %vm241, %v1963, 0.0
  %v1969 = vadd.f32 %v1967, %v1968
  %v1970 = vsel %vm241, %v1964, 0.0
  %v1971 = vadd.f32 %v1969, %v1970
  %v1972 = vrot.slane %v1971, 4
  %v1973 = vadd.f32 %v1971, %v1972
  %v1974 = vrot.slane %v1973, 2
  %v1975 = vadd.f32 %v1973, %v1974
  %v1976 = vrot.slane %v1975, 1
  %v1977 = vadd.f32 %v1975, %v1976
  %v1978 = vmul.f32 %v1977, %v502
  %v1979 = vadd.f32 %v1978, 1e-05
  %v1980 = vrsqrt.pop %v1979
  %v1981 = vmul.f32 %v1980, %v1940
  %v1982 = vlaneseq
  %v1983 = vshrl.u32 %v1982, 7
  %v1984 = vsub.s32 0, %v1983
  %v1985 = vrot.slane %v1981, %v1984
  %v1986 = vmul.f32 %v1957, %v1985
  %v1987 = vmul.f32 %v1958, %v1985
  %v1988 = vmul.f32 %v1959, %v1985
  %v1989 = vmul.f32 %v1960, %v1985
  %v1991 = vlaneseq
  %v1992 = vshrl.u32 %v1991, 7
  %v1993 = vsub.s32 0, %v1992
  %v1994 = vrot.slane %v1942, %v1993
  %v1996 = vadd.f32 %v1986, %v1994
  %v1997 = vadd.f32 %v1987, %v1994
  %v1998 = vadd.f32 %v1988, %v1994
  %v1999 = vadd.f32 %v1989, %v1994
  %v2000 = vmax.f32 %v1996, 0.0
  %v2001 = vmax.f32 %v1997, 0.0
  %v2002 = vmax.f32 %v1998, 0.0
  %v2003 = vmax.f32 %v1999, 0.0
  %s2004 = scalar_lea.vmem %s6, 96
  %v2005 = vld [vmem:[%s2004] sm:$0xff]
  %v2006 = vld [vmem:[%s2004 + $0x8] sm:$0xff]
  %v2007 = vld [vmem:[%s2004 + $0x10] sm:$0xff]
  %v2008 = vld [vmem:[%s2004 + $0x18] sm:$0xff]
  %v2010 = vsel %vm241, %v2000, 0
  %v2013 = vsel %vm241, %v2001, 0
  %v2016 = vsel %vm241, %v2002, 0
  %v2019 = vsel %vm241, %v2003, 0
  %2021 = vmatprep.subr.mxu0 0.0
  %2022 = vmatpush1.msra.mxu0 %v2005
  %2023 = vmatprep.subr.mxu0 0.0
  %2024 = vmatpush1.msra.mxu0 %v2006
  %2025 = vmatprep.subr.mxu0 0.0
  %2026 = vmatpush1.msra.mxu0 %v2007
  %2027 = vmatprep.subr.mxu0 0.0
  %2028 = vmatpush1.msra.mxu0 %v2008
  %2029 = vmatprep.subr.mxu0 0.0
  %2030 = vmatpush1.msra.mxu0 0.0
  %2031 = vmatprep.subr.mxu0 0.0
  %2032 = vmatpush1.msra.mxu0 0.0
  %2033 = vmatprep.subr.mxu0 0.0
  %2034 = vmatpush1.msra.mxu0 0.0
  %2035 = vmatprep.subr.mxu0 0.0
  %2036 = vmatpush1.msra.mxu0 0.0
  %2037 = vmatprep.subr.mxu0 0.0
  %2038 = vmatpush1.msra.mxu0 0.0
  %2039 = vmatprep.subr.mxu0 0.0
  %2040 = vmatpush1.msra.mxu0 0.0
  %2041 = vmatprep.subr.mxu0 0.0
  %2042 = vmatpush1.msra.mxu0 0.0
  %2043 = vmatprep.subr.mxu0 0.0
  %2044 = vmatpush1.msra.mxu0 0.0
  %2045 = vmatprep.subr.mxu0 0.0
  %2046 = vmatpush1.msra.mxu0 0.0
  %2047 = vmatprep.subr.mxu0 0.0
  %2048 = vmatpush1.msra.mxu0 0.0
  %2049 = vmatprep.subr.mxu0 0.0
  %2050 = vmatpush1.msra.mxu0 0.0
  %2051 = vmatprep.subr.mxu0 0.0
  %2052 = vmatpush1.msra.mxu0 0.0
  %2053 = vmatprep.subr.mxu0 0.0
  %2054 = vmatpush1.msra.mxu0 0.0
  %2055 = vmatprep.subr.mxu0 0.0
  %2056 = vmatpush1.msra.mxu0 0.0
  %2057 = vmatprep.subr.mxu0 0.0
  %2058 = vmatpush1.msra.mxu0 0.0
  %2059 = vmatprep.subr.mxu0 0.0
  %2060 = vmatpush1.msra.mxu0 0.0
  %2061 = vmatprep.subr.mxu0 0.0
  %2062 = vmatpush1.msra.mxu0 0.0
  %2063 = vmatprep.subr.mxu0 0.0
  %2064 = vmatpush1.msra.mxu0 0.0
  %2065 = vmatprep.subr.mxu0 0.0
  %2066 = vmatpush1.msra.mxu0 0.0
  %2067 = vmatprep.subr.mxu0 0.0
  %2068 = vmatpush1.msra.mxu0 0.0
  %2069 = vmatprep.subr.mxu0 0.0
  %2070 = vmatpush1.msra.mxu0 0.0
  %2071 = vmatprep.subr.mxu0 0.0
  %2072 = vmatpush1.msra.mxu0 0.0
  %2073 = vmatprep.subr.mxu0 0.0
  %2074 = vmatpush1.msra.mxu0 0.0
  %2075 = vmatprep.subr.mxu0 0.0
  %2076 = vmatpush1.msra.mxu0 0.0
  %2077 = vmatprep.subr.mxu0 0.0
  %2078 = vmatpush1.msra.mxu0 0.0
  %2079 = vmatprep.subr.mxu0 0.0
  %2080 = vmatpush1.msra.mxu0 0.0
  %2081 = vmatprep.subr.mxu0 0.0
  %2082 = vmatpush1.msra.mxu0 0.0
  %2083 = vmatprep.subr.mxu0 0.0
  %2084 = vmatpush1.msra.mxu0 0.0
  %2085 = vmatprep.mubr.f32.mxu0 0.0
  %2086 = vmatmul.mubr.f32.gmra.mrb[0].mxu0 %v2010
  %v2087 = vpop.f32.mrb[0].mxu0
  %v2088 = vadd.f32 0.0, %v2087
  %v2089 = vpop.f32.mrb[0].mxu0
  %2090 = vmatprep.mubr.f32.mxu0 0.0
  %2091 = vmatmul.mubr.f32.gmra.mrb[0].mxu0 %v2013
  %v2092 = vpop.f32.mrb[0].mxu0
  %v2093 = vadd.f32 0.0, %v2092
  %v2094 = vpop.f32.mrb[0].mxu0
  %2095 = vmatprep.mubr.f32.mxu0 0.0
  %2096 = vmatmul.mubr.f32.gmra.mrb[0].mxu0 %v2016
  %v2097 = vpop.f32.mrb[0].mxu0
  %v2098 = vadd.f32 0.0, %v2097
  %v2099 = vpop.f32.mrb[0].mxu0
  %2100 = vmatprep.mubr.f32.mxu0 0.0
  %2101 = vmatmul.mubr.f32.gmra.mrb[0].mxu0 %v2019
  %v2102 = vpop.f32.mrb[0].mxu0
  %v2103 = vadd.f32 0.0, %v2102
  %v2104 = vpop.f32.mrb[0].mxu0
  %2105 = vdwg.mxu0
  %2110 = vrot.lane.b32.xlu0 %v2088, 63
  %v2111 = vpop.permute.xlu0 %2110
  %2112 = vrot.lane.b32.xlu0 %v2093, 63
  %v2113 = vpop.permute.xlu0 %2112
  %2114 = vrot.lane.b32.xlu0 %v2098, 63
  %v2115 = vpop.permute.xlu0 %2114
  %2116 = vrot.lane.b32.xlu0 %v2103, 63
  %v2117 = vpop.permute.xlu0 %2116
  %2122 = vxpose.xlu0.b32.start [1/16] %v2111, 128
  %2123 = vxpose.xlu0.b32.cont [2/16] %v2113, 128
  %2124 = vxpose.xlu0.b32.cont [3/16] %v2115, 128
  %2125 = vxpose.xlu0.b32.cont [4/16] %v2117, 128
  %2126 = vxpose.xlu0.b32.cont [5/16] 0.0, 128
  %2127 = vxpose.xlu0.b32.cont [6/16] 0.0, 128
  %2128 = vxpose.xlu0.b32.cont [7/16] 0.0, 128
  %2129 = vxpose.xlu0.b32.cont [8/16] 0.0, 128
  %2130 = vxpose.xlu0.b32.cont [9/16] 0.0, 128
  %2131 = vxpose.xlu0.b32.cont [10/16] 0.0, 128
  %2132 = vxpose.xlu0.b32.cont [11/16] 0.0, 128
  %2133 = vxpose.xlu0.b32.cont [12/16] 0.0, 128
  %2134 = vxpose.xlu0.b32.cont [13/16] 0.0, 128
  %2135 = vxpose.xlu0.b32.cont [14/16] 0.0, 128
  %2136 = vxpose.xlu0.b32.cont [15/16] 0.0, 128
  %2137 = vxpose.xlu0.b32.end [16/16] 0.0, 128
  %v2138 = vpop.trf.xlu0
  %v2139 = vpop.trf.xlu0
  %v2140 = vpop.trf.xlu0
  %v2141 = vpop.trf.xlu0
  %v2142 = vpop.trf.xlu0
  %v2143 = vpop.trf.xlu0
  %v2144 = vpop.trf.xlu0
  %v2145 = vpop.trf.xlu0
  %v2146 = vpop.trf.xlu0
  %v2147 = vpop.trf.xlu0
  %v2148 = vpop.trf.xlu0
  %v2149 = vpop.trf.xlu0
  %v2150 = vpop.trf.xlu0
  %v2151 = vpop.trf.xlu0
  %v2152 = vpop.trf.xlu0
  %v2153 = vpop.trf.xlu0
  %2154 = vset.pattern.permute.xlu0 64
  %2155 = vperm.xlu0 %2154, %v2088
  %v2156 = vpop.permute.xlu0 %2155
  %2158 = vset.pattern.permute.xlu0 64
  %2159 = vperm.xlu0 %2158, %v2093
  %v2160 = vpop.permute.xlu0 %2159
  %2162 = vset.pattern.permute.xlu0 64
  %2163 = vperm.xlu0 %2162, %v2098
  %v2164 = vpop.permute.xlu0 %2163
  %2166 = vset.pattern.permute.xlu0 64
  %2167 = vperm.xlu0 %2166, %v2103
  %v2168 = vpop.permute.xlu0 %2167
  %v2170 = vlaneseq
  %v2171 = vshrl.u32 %v2170, 7
  %v2172 = vsub.s32 0, %v2171
  %v2173 = vrot.slane %v2138, %v2172
  %v2174 = vadd.f32 %v2156, %v2173
  %v2175 = vadd.f32 %v2160, %v2173
  %v2176 = vadd.f32 %v2164, %v2173
  %v2177 = vadd.f32 %v2168, %v2173
  %vm2178 = vcmp.gt.f32.partialorder %v2174, 0.0
  %vm2179 = vcmp.gt.f32.partialorder %v2175, 0.0
  %vm2180 = vcmp.gt.f32.partialorder %v2176, 0.0
  %vm2181 = vcmp.gt.f32.partialorder %v2177, 0.0
  %v2182 = vmul.f32 %v2174, 0.2
  %v2183 = vmul.f32 %v2175, 0.2
  %v2184 = vmul.f32 %v2176, 0.2
  %v2185 = vmul.f32 %v2177, 0.2
  %v2186 = vsel %vm2178, %v2174, %v2182
  %v2187 = vsel %vm2179, %v2175, %v2183
  %v2188 = vsel %vm2180, %v2176, %v2184
  %v2189 = vsel %vm2181, %v2177, %v2185
  %v2190 = vadd.f32 %v2186, %v38
  %v2191 = vadd.f32 %v2187, %v39
  %v2192 = vadd.f32 %v2188, %v40
  %v2193 = vadd.f32 %v2189, %v41
  %v2194 = vsel %vm241, %v2190, -inf
  %2195 = vmax.xlane.f32.xlu0 %v2194
  %v2196 = vpop.xlane.xlu0 %2195
  %v2197 = vsel %vm241, %v2191, -inf
  %2198 = vmax.xlane.f32.xlu0 %v2197
  %v2199 = vpop.xlane.xlu0 %2198
  %v2200 = vsel %vm241, %v2192, -inf
  %2201 = vmax.xlane.f32.xlu0 %v2200
  %v2202 = vpop.xlane.xlu0 %2201
  %v2203 = vsel %vm241, %v2193, -inf
  %2204 = vmax.xlane.f32.xlu0 %v2203
  %v2205 = vpop.xlane.xlu0 %2204
  %v2206 = vsub.f32 %v2190, %v2196
  %v2207 = vsub.f32 %v2191, %v2199
  %v2208 = vsub.f32 %v2192, %v2202
  %v2209 = vsub.f32 %v2193, %v2205
  %v2210 = vmul.f32 %v2206, 1.442695
  %v2211 = vpow.pop %v2210
  %v2212 = vmul.f32 %v2207, 1.442695
  %v2213 = vpow.pop %v2212
  %v2214 = vmul.f32 %v2208, 1.442695
  %v2215 = vpow.pop %v2214
  %v2216 = vmul.f32 %v2209, 1.442695
  %v2217 = vpow.pop %v2216
  %v2218 = vsel %vm241, %v2211, 0.0
  %2219 = vadd.xlane.f32.xlu0 %v2218
  %v2220 = vpop.xlane.xlu0 %2219
  %v2221 = vsel %vm241, %v2213, 0.0
  %2222 = vadd.xlane.f32.xlu0 %v2221
  %v2223 = vpop.xlane.xlu0 %2222
  %v2224 = vsel %vm241, %v2215, 0.0
  %2225 = vadd.xlane.f32.xlu0 %v2224
  %v2226 = vpop.xlane.xlu0 %2225
  %v2227 = vsel %vm241, %v2217, 0.0
  %2228 = vadd.xlane.f32.xlu0 %v2227
  %v2229 = vpop.xlane.xlu0 %2228
  %v2230 = vrcp.pop %v2220
  %v2231 = vrcp.pop %v2223
  %v2232 = vrcp.pop %v2226
  %v2233 = vrcp.pop %v2229
  %v2234 = vmul.f32 %v2211, %v2230
  %v2235 = vmul.f32 %v2213, %v2231
  %v2236 = vmul.f32 %v2215, %v2232
  %v2237 = vmul.f32 %v2217, %v2233
  %2238 = vrot.lane.b32.xlu0 %v2088, 127
  %v2239 = vpop.permute.xlu0 %2238
  %2240 = vrot.lane.b32.xlu0 %v2093, 127
  %v2241 = vpop.permute.xlu0 %2240
  %2242 = vrot.lane.b32.xlu0 %v2098, 127
  %v2243 = vpop.permute.xlu0 %2242
  %2244 = vrot.lane.b32.xlu0 %v2103, 127
  %v2245 = vpop.permute.xlu0 %2244
  %v2250 = vadd.f32 %v2088, %v2239
  %v2251 = vadd.f32 %v2093, %v2241
  %v2252 = vadd.f32 %v2098, %v2243
  %v2253 = vadd.f32 %v2103, %v2245
  %vm2254 = vcmp.gt.f32.partialorder %v2250, 0.0
  %vm2255 = vcmp.gt.f32.partialorder %v2251, 0.0
  %vm2256 = vcmp.gt.f32.partialorder %v2252, 0.0
  %vm2257 = vcmp.gt.f32.partialorder %v2253, 0.0
  %v2258 = vmul.f32 %v2250, 0.2
  %v2259 = vmul.f32 %v2251, 0.2
  %v2260 = vmul.f32 %v2252, 0.2
  %v2261 = vmul.f32 %v2253, 0.2
  %v2262 = vsel %vm2254, %v2250, %v2258
  %v2263 = vsel %vm2255, %v2251, %v2259
  %v2264 = vsel %vm2256, %v2252, %v2260
  %v2265 = vsel %vm2257, %v2253, %v2261
  %v2266 = vadd.f32 %v2262, %v319
  %v2267 = vadd.f32 %v2263, %v321
  %v2268 = vadd.f32 %v2264, %v323
  %v2269 = vadd.f32 %v2265, %v325
  %v2270 = vsub.f32 %v2266, %v2196
  %v2271 = vsub.f32 %v2267, %v2199
  %v2272 = vsub.f32 %v2268, %v2202
  %v2273 = vsub.f32 %v2269, %v2205
  %v2274 = vmul.f32 %v2270, 1.442695
  %v2275 = vpow.pop %v2274
  %v2276 = vmul.f32 %v2271, 1.442695
  %v2277 = vpow.pop %v2276
  %v2278 = vmul.f32 %v2272, 1.442695
  %v2279 = vpow.pop %v2278
  %v2280 = vmul.f32 %v2273, 1.442695
  %v2281 = vpow.pop %v2280
  %v2282 = vmul.f32 %v2275, %v2230
  %v2283 = vmul.f32 %v2277, %v2231
  %v2284 = vmul.f32 %v2279, %v2232
  %v2285 = vmul.f32 %v2281, %v2233
  %2286 = vrot.lane.b32.xlu0 %v2088, 96
  %v2287 = vpop.permute.xlu0 %2286
  %2288 = vrot.lane.b32.xlu0 %v2093, 96
  %v2289 = vpop.permute.xlu0 %2288
  %2290 = vrot.lane.b32.xlu0 %v2098, 96
  %v2291 = vpop.permute.xlu0 %2290
  %2292 = vrot.lane.b32.xlu0 %v2103, 96
  %v2293 = vpop.permute.xlu0 %2292
  %v2298 = vsub.f32 %v2088, %v2287
  %v2299 = vsub.f32 %v2093, %v2289
  %v2300 = vsub.f32 %v2098, %v2291
  %v2301 = vsub.f32 %v2103, %v2293
  %2303 = vset.pattern.permute.xlu0 64
  %2304 = vperm.xlu0 %2303, %v2282
  %v2305 = vpop.permute.xlu0 %2304
  %2308 = vset.pattern.permute.xlu0 64
  %2309 = vperm.xlu0 %2308, %v2283
  %v2310 = vpop.permute.xlu0 %2309
  %2313 = vset.pattern.permute.xlu0 64
  %2314 = vperm.xlu0 %2313, %v2284
  %v2315 = vpop.permute.xlu0 %2314
  %2318 = vset.pattern.permute.xlu0 64
  %2319 = vperm.xlu0 %2318, %v2285
  %v2320 = vpop.permute.xlu0 %2319
  %v2322 = vmul.f32 %v2305, %v2298
  %v2323 = vmul.f32 %v2310, %v2299
  %v2324 = vmul.f32 %v2315, %v2300
  %v2325 = vmul.f32 %v2320, %v2301
  %v2327 = vsel %vm241, %v2234, 0
  %v2330 = vsel %vm241, %v2235, 0
  %v2333 = vsel %vm241, %v2236, 0
  %v2336 = vsel %vm241, %v2237, 0
  %2338 = vmatprep.subr.mxu0 0.0
  %2339 = vmatpush1.msra.mxu0 %v2287
  %2340 = vmatprep.subr.mxu0 0.0
  %2341 = vmatpush1.msra.mxu0 %v2289
  %2342 = vmatprep.subr.mxu0 0.0
  %2343 = vmatpush1.msra.mxu0 %v2291
  %2344 = vmatprep.subr.mxu0 0.0
  %2345 = vmatpush1.msra.mxu0 %v2293
  %2346 = vmatprep.subr.mxu0 0.0
  %2347 = vmatpush1.msra.mxu0 0.0
  %2348 = vmatprep.subr.mxu0 0.0
  %2349 = vmatpush1.msra.mxu0 0.0
  %2350 = vmatprep.subr.mxu0 0.0
  %2351 = vmatpush1.msra.mxu0 0.0
  %2352 = vmatprep.subr.mxu0 0.0
  %2353 = vmatpush1.msra.mxu0 0.0
  %2354 = vmatprep.subr.mxu0 0.0
  %2355 = vmatpush1.msra.mxu0 0.0
  %2356 = vmatprep.subr.mxu0 0.0
  %2357 = vmatpush1.msra.mxu0 0.0
  %2358 = vmatprep.subr.mxu0 0.0
  %2359 = vmatpush1.msra.mxu0 0.0
  %2360 = vmatprep.subr.mxu0 0.0
  %2361 = vmatpush1.msra.mxu0 0.0
  %2362 = vmatprep.subr.mxu0 0.0
  %2363 = vmatpush1.msra.mxu0 0.0
  %2364 = vmatprep.subr.mxu0 0.0
  %2365 = vmatpush1.msra.mxu0 0.0
  %2366 = vmatprep.subr.mxu0 0.0
  %2367 = vmatpush1.msra.mxu0 0.0
  %2368 = vmatprep.subr.mxu0 0.0
  %2369 = vmatpush1.msra.mxu0 0.0
  %2370 = vmatprep.subr.mxu0 0.0
  %2371 = vmatpush1.msra.mxu0 0.0
  %2372 = vmatprep.subr.mxu0 0.0
  %2373 = vmatpush1.msra.mxu0 0.0
  %2374 = vmatprep.subr.mxu0 0.0
  %2375 = vmatpush1.msra.mxu0 0.0
  %2376 = vmatprep.subr.mxu0 0.0
  %2377 = vmatpush1.msra.mxu0 0.0
  %2378 = vmatprep.subr.mxu0 0.0
  %2379 = vmatpush1.msra.mxu0 0.0
  %2380 = vmatprep.subr.mxu0 0.0
  %2381 = vmatpush1.msra.mxu0 0.0
  %2382 = vmatprep.subr.mxu0 0.0
  %2383 = vmatpush1.msra.mxu0 0.0
  %2384 = vmatprep.subr.mxu0 0.0
  %2385 = vmatpush1.msra.mxu0 0.0
  %2386 = vmatprep.subr.mxu0 0.0
  %2387 = vmatpush1.msra.mxu0 0.0
  %2388 = vmatprep.subr.mxu0 0.0
  %2389 = vmatpush1.msra.mxu0 0.0
  %2390 = vmatprep.subr.mxu0 0.0
  %2391 = vmatpush1.msra.mxu0 0.0
  %2392 = vmatprep.subr.mxu0 0.0
  %2393 = vmatpush1.msra.mxu0 0.0
  %2394 = vmatprep.subr.mxu0 0.0
  %2395 = vmatpush1.msra.mxu0 0.0
  %2396 = vmatprep.subr.mxu0 0.0
  %2397 = vmatpush1.msra.mxu0 0.0
  %2398 = vmatprep.subr.mxu0 0.0
  %2399 = vmatpush1.msra.mxu0 0.0
  %2400 = vmatprep.subr.mxu0 0.0
  %2401 = vmatpush1.msra.mxu0 0.0
  %2402 = vmatprep.mubr.f32.mxu0 0.0
  %2403 = vmatmul.mubr.f32.gmra.mrb[0].mxu0 %v2327
  %v2404 = vpop.f32.mrb[0].mxu0
  %v2405 = vadd.f32 %v2322, %v2404
  %v2406 = vpop.f32.mrb[0].mxu0
  %2407 = vmatprep.mubr.f32.mxu0 0.0
  %2408 = vmatmul.mubr.f32.gmra.mrb[0].mxu0 %v2330
  %v2409 = vpop.f32.mrb[0].mxu0
  %v2410 = vadd.f32 %v2323, %v2409
  %v2411 = vpop.f32.mrb[0].mxu0
  %2412 = vmatprep.mubr.f32.mxu0 0.0
  %2413 = vmatmul.mubr.f32.gmra.mrb[0].mxu0 %v2333
  %v2414 = vpop.f32.mrb[0].mxu0
  %v2415 = vadd.f32 %v2324, %v2414
  %v2416 = vpop.f32.mrb[0].mxu0
  %2417 = vmatprep.mubr.f32.mxu0 0.0
  %2418 = vmatmul.mubr.f32.gmra.mrb[0].mxu0 %v2336
  %v2419 = vpop.f32.mrb[0].mxu0
  %v2420 = vadd.f32 %v2325, %v2419
  %v2421 = vpop.f32.mrb[0].mxu0
  %2422 = vdwg.mxu0
  %s2423 = scalar_lea.vmem %s7, 3
  %v2424 = vld [vmem:[%s2423] sm:$0x1]
  %s2425 = scalar_lea.vmem %s8, 3
  %v2426 = vld [vmem:[%s2425] sm:$0x1]
  %v2427 = vsel %vm241, %v2405, 0.0
  %v2428 = vsel %vm241, %v2410, 0.0
  %v2429 = vadd.f32 %v2427, %v2428
  %v2430 = vsel %vm241, %v2415, 0.0
  %v2431 = vadd.f32 %v2429, %v2430
  %v2432 = vsel %vm241, %v2420, 0.0
  %v2433 = vadd.f32 %v2431, %v2432
  %v2434 = vrot.slane %v2433, 4
  %v2435 = vadd.f32 %v2433, %v2434
  %v2436 = vrot.slane %v2435, 2
  %v2437 = vadd.f32 %v2435, %v2436
  %v2438 = vrot.slane %v2437, 1
  %v2439 = vadd.f32 %v2437, %v2438
  %v2440 = vmul.f32 %v2439, %v502
  %v2441 = vsub.f32 %v2405, %v2440
  %v2442 = vsub.f32 %v2410, %v2440
  %v2443 = vsub.f32 %v2415, %v2440
  %v2444 = vsub.f32 %v2420, %v2440
  %v2445 = vmul.f32 %v2441, %v2441
  %v2446 = vmul.f32 %v2442, %v2442
  %v2447 = vmul.f32 %v2443, %v2443
  %v2448 = vmul.f32 %v2444, %v2444
  %v2449 = vsel %vm241, %v2445, 0.0
  %v2450 = vsel %vm241, %v2446, 0.0
  %v2451 = vadd.f32 %v2449, %v2450
  %v2452 = vsel %vm241, %v2447, 0.0
  %v2453 = vadd.f32 %v2451, %v2452
  %v2454 = vsel %vm241, %v2448, 0.0
  %v2455 = vadd.f32 %v2453, %v2454
  %v2456 = vrot.slane %v2455, 4
  %v2457 = vadd.f32 %v2455, %v2456
  %v2458 = vrot.slane %v2457, 2
  %v2459 = vadd.f32 %v2457, %v2458
  %v2460 = vrot.slane %v2459, 1
  %v2461 = vadd.f32 %v2459, %v2460
  %v2462 = vmul.f32 %v2461, %v502
  %v2463 = vadd.f32 %v2462, 1e-05
  %v2464 = vrsqrt.pop %v2463
  %v2465 = vmul.f32 %v2464, %v2424
  %v2466 = vlaneseq
  %v2467 = vshrl.u32 %v2466, 7
  %v2468 = vsub.s32 0, %v2467
  %v2469 = vrot.slane %v2465, %v2468
  %v2470 = vmul.f32 %v2441, %v2469
  %v2471 = vmul.f32 %v2442, %v2469
  %v2472 = vmul.f32 %v2443, %v2469
  %v2473 = vmul.f32 %v2444, %v2469
  %v2475 = vlaneseq
  %v2476 = vshrl.u32 %v2475, 7
  %v2477 = vsub.s32 0, %v2476
  %v2478 = vrot.slane %v2426, %v2477
  %v2480 = vadd.f32 %v2470, %v2478
  %v2481 = vadd.f32 %v2471, %v2478
  %v2482 = vadd.f32 %v2472, %v2478
  %v2483 = vadd.f32 %v2473, %v2478
  %v2484 = vmax.f32 %v2480, 0.0
  %v2485 = vmax.f32 %v2481, 0.0
  %v2486 = vmax.f32 %v2482, 0.0
  %v2487 = vmax.f32 %v2483, 0.0
  %v2488 = vadd.f32 %v2484, %v1516
  %v2489 = vadd.f32 %v2485, %v1517
  %v2490 = vadd.f32 %v2486, %v1518
  %v2491 = vadd.f32 %v2487, %v1519
  %s2492 = scalar_lea.vmem %s6, 128
  %v2493 = vld [vmem:[%s2492] sm:$0xff]
  %v2494 = vld [vmem:[%s2492 + $0x8] sm:$0xff]
  %v2495 = vld [vmem:[%s2492 + $0x10] sm:$0xff]
  %v2496 = vld [vmem:[%s2492 + $0x18] sm:$0xff]
  %v2498 = vsel %vm241, %v2488, 0
  %v2501 = vsel %vm241, %v2489, 0
  %v2504 = vsel %vm241, %v2490, 0
  %v2507 = vsel %vm241, %v2491, 0
  %2509 = vmatprep.subr.mxu0 0.0
  %2510 = vmatpush1.msra.mxu0 %v2493
  %2511 = vmatprep.subr.mxu0 0.0
  %2512 = vmatpush1.msra.mxu0 %v2494
  %2513 = vmatprep.subr.mxu0 0.0
  %2514 = vmatpush1.msra.mxu0 %v2495
  %2515 = vmatprep.subr.mxu0 0.0
  %2516 = vmatpush1.msra.mxu0 %v2496
  %2517 = vmatprep.subr.mxu0 0.0
  %2518 = vmatpush1.msra.mxu0 0.0
  %2519 = vmatprep.subr.mxu0 0.0
  %2520 = vmatpush1.msra.mxu0 0.0
  %2521 = vmatprep.subr.mxu0 0.0
  %2522 = vmatpush1.msra.mxu0 0.0
  %2523 = vmatprep.subr.mxu0 0.0
  %2524 = vmatpush1.msra.mxu0 0.0
  %2525 = vmatprep.subr.mxu0 0.0
  %2526 = vmatpush1.msra.mxu0 0.0
  %2527 = vmatprep.subr.mxu0 0.0
  %2528 = vmatpush1.msra.mxu0 0.0
  %2529 = vmatprep.subr.mxu0 0.0
  %2530 = vmatpush1.msra.mxu0 0.0
  %2531 = vmatprep.subr.mxu0 0.0
  %2532 = vmatpush1.msra.mxu0 0.0
  %2533 = vmatprep.subr.mxu0 0.0
  %2534 = vmatpush1.msra.mxu0 0.0
  %2535 = vmatprep.subr.mxu0 0.0
  %2536 = vmatpush1.msra.mxu0 0.0
  %2537 = vmatprep.subr.mxu0 0.0
  %2538 = vmatpush1.msra.mxu0 0.0
  %2539 = vmatprep.subr.mxu0 0.0
  %2540 = vmatpush1.msra.mxu0 0.0
  %2541 = vmatprep.subr.mxu0 0.0
  %2542 = vmatpush1.msra.mxu0 0.0
  %2543 = vmatprep.subr.mxu0 0.0
  %2544 = vmatpush1.msra.mxu0 0.0
  %2545 = vmatprep.subr.mxu0 0.0
  %2546 = vmatpush1.msra.mxu0 0.0
  %2547 = vmatprep.subr.mxu0 0.0
  %2548 = vmatpush1.msra.mxu0 0.0
  %2549 = vmatprep.subr.mxu0 0.0
  %2550 = vmatpush1.msra.mxu0 0.0
  %2551 = vmatprep.subr.mxu0 0.0
  %2552 = vmatpush1.msra.mxu0 0.0
  %2553 = vmatprep.subr.mxu0 0.0
  %2554 = vmatpush1.msra.mxu0 0.0
  %2555 = vmatprep.subr.mxu0 0.0
  %2556 = vmatpush1.msra.mxu0 0.0
  %2557 = vmatprep.subr.mxu0 0.0
  %2558 = vmatpush1.msra.mxu0 0.0
  %2559 = vmatprep.subr.mxu0 0.0
  %2560 = vmatpush1.msra.mxu0 0.0
  %2561 = vmatprep.subr.mxu0 0.0
  %2562 = vmatpush1.msra.mxu0 0.0
  %2563 = vmatprep.subr.mxu0 0.0
  %2564 = vmatpush1.msra.mxu0 0.0
  %2565 = vmatprep.subr.mxu0 0.0
  %2566 = vmatpush1.msra.mxu0 0.0
  %2567 = vmatprep.subr.mxu0 0.0
  %2568 = vmatpush1.msra.mxu0 0.0
  %2569 = vmatprep.subr.mxu0 0.0
  %2570 = vmatpush1.msra.mxu0 0.0
  %2571 = vmatprep.subr.mxu0 0.0
  %2572 = vmatpush1.msra.mxu0 0.0
  %2573 = vmatprep.mubr.f32.mxu0 0.0
  %2574 = vmatmul.mubr.f32.gmra.mrb[0].mxu0 %v2498
  %v2575 = vpop.f32.mrb[0].mxu0
  %v2576 = vadd.f32 0.0, %v2575
  %v2577 = vpop.f32.mrb[0].mxu0
  %2578 = vmatprep.mubr.f32.mxu0 0.0
  %2579 = vmatmul.mubr.f32.gmra.mrb[0].mxu0 %v2501
  %v2580 = vpop.f32.mrb[0].mxu0
  %v2581 = vadd.f32 0.0, %v2580
  %v2582 = vpop.f32.mrb[0].mxu0
  %2583 = vmatprep.mubr.f32.mxu0 0.0
  %2584 = vmatmul.mubr.f32.gmra.mrb[0].mxu0 %v2504
  %v2585 = vpop.f32.mrb[0].mxu0
  %v2586 = vadd.f32 0.0, %v2585
  %v2587 = vpop.f32.mrb[0].mxu0
  %2588 = vmatprep.mubr.f32.mxu0 0.0
  %2589 = vmatmul.mubr.f32.gmra.mrb[0].mxu0 %v2507
  %v2590 = vpop.f32.mrb[0].mxu0
  %v2591 = vadd.f32 0.0, %v2590
  %v2592 = vpop.f32.mrb[0].mxu0
  %2593 = vdwg.mxu0
  %2598 = vrot.lane.b32.xlu0 %v2576, 63
  %v2599 = vpop.permute.xlu0 %2598
  %2600 = vrot.lane.b32.xlu0 %v2581, 63
  %v2601 = vpop.permute.xlu0 %2600
  %2602 = vrot.lane.b32.xlu0 %v2586, 63
  %v2603 = vpop.permute.xlu0 %2602
  %2604 = vrot.lane.b32.xlu0 %v2591, 63
  %v2605 = vpop.permute.xlu0 %2604
  %2610 = vxpose.xlu0.b32.start [1/16] %v2599, 128
  %2611 = vxpose.xlu0.b32.cont [2/16] %v2601, 128
  %2612 = vxpose.xlu0.b32.cont [3/16] %v2603, 128
  %2613 = vxpose.xlu0.b32.cont [4/16] %v2605, 128
  %2614 = vxpose.xlu0.b32.cont [5/16] 0.0, 128
  %2615 = vxpose.xlu0.b32.cont [6/16] 0.0, 128
  %2616 = vxpose.xlu0.b32.cont [7/16] 0.0, 128
  %2617 = vxpose.xlu0.b32.cont [8/16] 0.0, 128
  %2618 = vxpose.xlu0.b32.cont [9/16] 0.0, 128
  %2619 = vxpose.xlu0.b32.cont [10/16] 0.0, 128
  %2620 = vxpose.xlu0.b32.cont [11/16] 0.0, 128
  %2621 = vxpose.xlu0.b32.cont [12/16] 0.0, 128
  %2622 = vxpose.xlu0.b32.cont [13/16] 0.0, 128
  %2623 = vxpose.xlu0.b32.cont [14/16] 0.0, 128
  %2624 = vxpose.xlu0.b32.cont [15/16] 0.0, 128
  %2625 = vxpose.xlu0.b32.end [16/16] 0.0, 128
  %v2626 = vpop.trf.xlu0
  %v2627 = vpop.trf.xlu0
  %v2628 = vpop.trf.xlu0
  %v2629 = vpop.trf.xlu0
  %v2630 = vpop.trf.xlu0
  %v2631 = vpop.trf.xlu0
  %v2632 = vpop.trf.xlu0
  %v2633 = vpop.trf.xlu0
  %v2634 = vpop.trf.xlu0
  %v2635 = vpop.trf.xlu0
  %v2636 = vpop.trf.xlu0
  %v2637 = vpop.trf.xlu0
  %v2638 = vpop.trf.xlu0
  %v2639 = vpop.trf.xlu0
  %v2640 = vpop.trf.xlu0
  %v2641 = vpop.trf.xlu0
  %2642 = vset.pattern.permute.xlu0 64
  %2643 = vperm.xlu0 %2642, %v2576
  %v2644 = vpop.permute.xlu0 %2643
  %2646 = vset.pattern.permute.xlu0 64
  %2647 = vperm.xlu0 %2646, %v2581
  %v2648 = vpop.permute.xlu0 %2647
  %2650 = vset.pattern.permute.xlu0 64
  %2651 = vperm.xlu0 %2650, %v2586
  %v2652 = vpop.permute.xlu0 %2651
  %2654 = vset.pattern.permute.xlu0 64
  %2655 = vperm.xlu0 %2654, %v2591
  %v2656 = vpop.permute.xlu0 %2655
  %v2658 = vlaneseq
  %v2659 = vshrl.u32 %v2658, 7
  %v2660 = vsub.s32 0, %v2659
  %v2661 = vrot.slane %v2626, %v2660
  %v2662 = vadd.f32 %v2644, %v2661
  %v2663 = vadd.f32 %v2648, %v2661
  %v2664 = vadd.f32 %v2652, %v2661
  %v2665 = vadd.f32 %v2656, %v2661
  %vm2666 = vcmp.gt.f32.partialorder %v2662, 0.0
  %vm2667 = vcmp.gt.f32.partialorder %v2663, 0.0
  %vm2668 = vcmp.gt.f32.partialorder %v2664, 0.0
  %vm2669 = vcmp.gt.f32.partialorder %v2665, 0.0
  %v2670 = vmul.f32 %v2662, 0.2
  %v2671 = vmul.f32 %v2663, 0.2
  %v2672 = vmul.f32 %v2664, 0.2
  %v2673 = vmul.f32 %v2665, 0.2
  %v2674 = vsel %vm2666, %v2662, %v2670
  %v2675 = vsel %vm2667, %v2663, %v2671
  %v2676 = vsel %vm2668, %v2664, %v2672
  %v2677 = vsel %vm2669, %v2665, %v2673
  %v2678 = vadd.f32 %v2674, %v38
  %v2679 = vadd.f32 %v2675, %v39
  %v2680 = vadd.f32 %v2676, %v40
  %v2681 = vadd.f32 %v2677, %v41
  %v2682 = vsel %vm241, %v2678, -inf
  %2683 = vmax.xlane.f32.xlu0 %v2682
  %v2684 = vpop.xlane.xlu0 %2683
  %v2685 = vsel %vm241, %v2679, -inf
  %2686 = vmax.xlane.f32.xlu0 %v2685
  %v2687 = vpop.xlane.xlu0 %2686
  %v2688 = vsel %vm241, %v2680, -inf
  %2689 = vmax.xlane.f32.xlu0 %v2688
  %v2690 = vpop.xlane.xlu0 %2689
  %v2691 = vsel %vm241, %v2681, -inf
  %2692 = vmax.xlane.f32.xlu0 %v2691
  %v2693 = vpop.xlane.xlu0 %2692
  %v2694 = vsub.f32 %v2678, %v2684
  %v2695 = vsub.f32 %v2679, %v2687
  %v2696 = vsub.f32 %v2680, %v2690
  %v2697 = vsub.f32 %v2681, %v2693
  %v2698 = vmul.f32 %v2694, 1.442695
  %v2699 = vpow.pop %v2698
  %v2700 = vmul.f32 %v2695, 1.442695
  %v2701 = vpow.pop %v2700
  %v2702 = vmul.f32 %v2696, 1.442695
  %v2703 = vpow.pop %v2702
  %v2704 = vmul.f32 %v2697, 1.442695
  %v2705 = vpow.pop %v2704
  %v2706 = vsel %vm241, %v2699, 0.0
  %2707 = vadd.xlane.f32.xlu0 %v2706
  %v2708 = vpop.xlane.xlu0 %2707
  %v2709 = vsel %vm241, %v2701, 0.0
  %2710 = vadd.xlane.f32.xlu0 %v2709
  %v2711 = vpop.xlane.xlu0 %2710
  %v2712 = vsel %vm241, %v2703, 0.0
  %2713 = vadd.xlane.f32.xlu0 %v2712
  %v2714 = vpop.xlane.xlu0 %2713
  %v2715 = vsel %vm241, %v2705, 0.0
  %2716 = vadd.xlane.f32.xlu0 %v2715
  %v2717 = vpop.xlane.xlu0 %2716
  %v2718 = vrcp.pop %v2708
  %v2719 = vrcp.pop %v2711
  %v2720 = vrcp.pop %v2714
  %v2721 = vrcp.pop %v2717
  %v2722 = vmul.f32 %v2699, %v2718
  %v2723 = vmul.f32 %v2701, %v2719
  %v2724 = vmul.f32 %v2703, %v2720
  %v2725 = vmul.f32 %v2705, %v2721
  %2726 = vrot.lane.b32.xlu0 %v2576, 127
  %v2727 = vpop.permute.xlu0 %2726
  %2728 = vrot.lane.b32.xlu0 %v2581, 127
  %v2729 = vpop.permute.xlu0 %2728
  %2730 = vrot.lane.b32.xlu0 %v2586, 127
  %v2731 = vpop.permute.xlu0 %2730
  %2732 = vrot.lane.b32.xlu0 %v2591, 127
  %v2733 = vpop.permute.xlu0 %2732
  %v2738 = vadd.f32 %v2576, %v2727
  %v2739 = vadd.f32 %v2581, %v2729
  %v2740 = vadd.f32 %v2586, %v2731
  %v2741 = vadd.f32 %v2591, %v2733
  %vm2742 = vcmp.gt.f32.partialorder %v2738, 0.0
  %vm2743 = vcmp.gt.f32.partialorder %v2739, 0.0
  %vm2744 = vcmp.gt.f32.partialorder %v2740, 0.0
  %vm2745 = vcmp.gt.f32.partialorder %v2741, 0.0
  %v2746 = vmul.f32 %v2738, 0.2
  %v2747 = vmul.f32 %v2739, 0.2
  %v2748 = vmul.f32 %v2740, 0.2
  %v2749 = vmul.f32 %v2741, 0.2
  %v2750 = vsel %vm2742, %v2738, %v2746
  %v2751 = vsel %vm2743, %v2739, %v2747
  %v2752 = vsel %vm2744, %v2740, %v2748
  %v2753 = vsel %vm2745, %v2741, %v2749
  %v2754 = vadd.f32 %v2750, %v319
  %v2755 = vadd.f32 %v2751, %v321
  %v2756 = vadd.f32 %v2752, %v323
  %v2757 = vadd.f32 %v2753, %v325
  %v2758 = vsub.f32 %v2754, %v2684
  %v2759 = vsub.f32 %v2755, %v2687
  %v2760 = vsub.f32 %v2756, %v2690
  %v2761 = vsub.f32 %v2757, %v2693
  %v2762 = vmul.f32 %v2758, 1.442695
  %v2763 = vpow.pop %v2762
  %v2764 = vmul.f32 %v2759, 1.442695
  %v2765 = vpow.pop %v2764
  %v2766 = vmul.f32 %v2760, 1.442695
  %v2767 = vpow.pop %v2766
  %v2768 = vmul.f32 %v2761, 1.442695
  %v2769 = vpow.pop %v2768
  %v2770 = vmul.f32 %v2763, %v2718
  %v2771 = vmul.f32 %v2765, %v2719
  %v2772 = vmul.f32 %v2767, %v2720
  %v2773 = vmul.f32 %v2769, %v2721
  %2774 = vrot.lane.b32.xlu0 %v2576, 96
  %v2775 = vpop.permute.xlu0 %2774
  %2776 = vrot.lane.b32.xlu0 %v2581, 96
  %v2777 = vpop.permute.xlu0 %2776
  %2778 = vrot.lane.b32.xlu0 %v2586, 96
  %v2779 = vpop.permute.xlu0 %2778
  %2780 = vrot.lane.b32.xlu0 %v2591, 96
  %v2781 = vpop.permute.xlu0 %2780
  %v2786 = vsub.f32 %v2576, %v2775
  %v2787 = vsub.f32 %v2581, %v2777
  %v2788 = vsub.f32 %v2586, %v2779
  %v2789 = vsub.f32 %v2591, %v2781
  %2791 = vset.pattern.permute.xlu0 64
  %2792 = vperm.xlu0 %2791, %v2770
  %v2793 = vpop.permute.xlu0 %2792
  %2796 = vset.pattern.permute.xlu0 64
  %2797 = vperm.xlu0 %2796, %v2771
  %v2798 = vpop.permute.xlu0 %2797
  %2801 = vset.pattern.permute.xlu0 64
  %2802 = vperm.xlu0 %2801, %v2772
  %v2803 = vpop.permute.xlu0 %2802
  %2806 = vset.pattern.permute.xlu0 64
  %2807 = vperm.xlu0 %2806, %v2773
  %v2808 = vpop.permute.xlu0 %2807
  %v2810 = vmul.f32 %v2793, %v2786
  %v2811 = vmul.f32 %v2798, %v2787
  %v2812 = vmul.f32 %v2803, %v2788
  %v2813 = vmul.f32 %v2808, %v2789
  %v2815 = vsel %vm241, %v2722, 0
  %v2818 = vsel %vm241, %v2723, 0
  %v2821 = vsel %vm241, %v2724, 0
  %v2824 = vsel %vm241, %v2725, 0
  %2826 = vmatprep.subr.mxu0 0.0
  %2827 = vmatpush1.msra.mxu0 %v2775
  %2828 = vmatprep.subr.mxu0 0.0
  %2829 = vmatpush1.msra.mxu0 %v2777
  %2830 = vmatprep.subr.mxu0 0.0
  %2831 = vmatpush1.msra.mxu0 %v2779
  %2832 = vmatprep.subr.mxu0 0.0
  %2833 = vmatpush1.msra.mxu0 %v2781
  %2834 = vmatprep.subr.mxu0 0.0
  %2835 = vmatpush1.msra.mxu0 0.0
  %2836 = vmatprep.subr.mxu0 0.0
  %2837 = vmatpush1.msra.mxu0 0.0
  %2838 = vmatprep.subr.mxu0 0.0
  %2839 = vmatpush1.msra.mxu0 0.0
  %2840 = vmatprep.subr.mxu0 0.0
  %2841 = vmatpush1.msra.mxu0 0.0
  %2842 = vmatprep.subr.mxu0 0.0
  %2843 = vmatpush1.msra.mxu0 0.0
  %2844 = vmatprep.subr.mxu0 0.0
  %2845 = vmatpush1.msra.mxu0 0.0
  %2846 = vmatprep.subr.mxu0 0.0
  %2847 = vmatpush1.msra.mxu0 0.0
  %2848 = vmatprep.subr.mxu0 0.0
  %2849 = vmatpush1.msra.mxu0 0.0
  %2850 = vmatprep.subr.mxu0 0.0
  %2851 = vmatpush1.msra.mxu0 0.0
  %2852 = vmatprep.subr.mxu0 0.0
  %2853 = vmatpush1.msra.mxu0 0.0
  %2854 = vmatprep.subr.mxu0 0.0
  %2855 = vmatpush1.msra.mxu0 0.0
  %2856 = vmatprep.subr.mxu0 0.0
  %2857 = vmatpush1.msra.mxu0 0.0
  %2858 = vmatprep.subr.mxu0 0.0
  %2859 = vmatpush1.msra.mxu0 0.0
  %2860 = vmatprep.subr.mxu0 0.0
  %2861 = vmatpush1.msra.mxu0 0.0
  %2862 = vmatprep.subr.mxu0 0.0
  %2863 = vmatpush1.msra.mxu0 0.0
  %2864 = vmatprep.subr.mxu0 0.0
  %2865 = vmatpush1.msra.mxu0 0.0
  %2866 = vmatprep.subr.mxu0 0.0
  %2867 = vmatpush1.msra.mxu0 0.0
  %2868 = vmatprep.subr.mxu0 0.0
  %2869 = vmatpush1.msra.mxu0 0.0
  %2870 = vmatprep.subr.mxu0 0.0
  %2871 = vmatpush1.msra.mxu0 0.0
  %2872 = vmatprep.subr.mxu0 0.0
  %2873 = vmatpush1.msra.mxu0 0.0
  %2874 = vmatprep.subr.mxu0 0.0
  %2875 = vmatpush1.msra.mxu0 0.0
  %2876 = vmatprep.subr.mxu0 0.0
  %2877 = vmatpush1.msra.mxu0 0.0
  %2878 = vmatprep.subr.mxu0 0.0
  %2879 = vmatpush1.msra.mxu0 0.0
  %2880 = vmatprep.subr.mxu0 0.0
  %2881 = vmatpush1.msra.mxu0 0.0
  %2882 = vmatprep.subr.mxu0 0.0
  %2883 = vmatpush1.msra.mxu0 0.0
  %2884 = vmatprep.subr.mxu0 0.0
  %2885 = vmatpush1.msra.mxu0 0.0
  %2886 = vmatprep.subr.mxu0 0.0
  %2887 = vmatpush1.msra.mxu0 0.0
  %2888 = vmatprep.subr.mxu0 0.0
  %2889 = vmatpush1.msra.mxu0 0.0
  %2890 = vmatprep.mubr.f32.mxu0 0.0
  %2891 = vmatmul.mubr.f32.gmra.mrb[0].mxu0 %v2815
  %v2892 = vpop.f32.mrb[0].mxu0
  %v2893 = vadd.f32 %v2810, %v2892
  %v2894 = vpop.f32.mrb[0].mxu0
  %2895 = vmatprep.mubr.f32.mxu0 0.0
  %2896 = vmatmul.mubr.f32.gmra.mrb[0].mxu0 %v2818
  %v2897 = vpop.f32.mrb[0].mxu0
  %v2898 = vadd.f32 %v2811, %v2897
  %v2899 = vpop.f32.mrb[0].mxu0
  %2900 = vmatprep.mubr.f32.mxu0 0.0
  %2901 = vmatmul.mubr.f32.gmra.mrb[0].mxu0 %v2821
  %v2902 = vpop.f32.mrb[0].mxu0
  %v2903 = vadd.f32 %v2812, %v2902
  %v2904 = vpop.f32.mrb[0].mxu0
  %2905 = vmatprep.mubr.f32.mxu0 0.0
  %2906 = vmatmul.mubr.f32.gmra.mrb[0].mxu0 %v2824
  %v2907 = vpop.f32.mrb[0].mxu0
  %v2908 = vadd.f32 %v2813, %v2907
  %v2909 = vpop.f32.mrb[0].mxu0
  %2910 = vdwg.mxu0
  %s2911 = scalar_lea.vmem %s7, 4
  %v2912 = vld [vmem:[%s2911] sm:$0x1]
  %s2913 = scalar_lea.vmem %s8, 4
  %v2914 = vld [vmem:[%s2913] sm:$0x1]
  %v2915 = vsel %vm241, %v2893, 0.0
  %v2916 = vsel %vm241, %v2898, 0.0
  %v2917 = vadd.f32 %v2915, %v2916
  %v2918 = vsel %vm241, %v2903, 0.0
  %v2919 = vadd.f32 %v2917, %v2918
  %v2920 = vsel %vm241, %v2908, 0.0
  %v2921 = vadd.f32 %v2919, %v2920
  %v2922 = vrot.slane %v2921, 4
  %v2923 = vadd.f32 %v2921, %v2922
  %v2924 = vrot.slane %v2923, 2
  %v2925 = vadd.f32 %v2923, %v2924
  %v2926 = vrot.slane %v2925, 1
  %v2927 = vadd.f32 %v2925, %v2926
  %v2928 = vmul.f32 %v2927, %v502
  %v2929 = vsub.f32 %v2893, %v2928
  %v2930 = vsub.f32 %v2898, %v2928
  %v2931 = vsub.f32 %v2903, %v2928
  %v2932 = vsub.f32 %v2908, %v2928
  %v2933 = vmul.f32 %v2929, %v2929
  %v2934 = vmul.f32 %v2930, %v2930
  %v2935 = vmul.f32 %v2931, %v2931
  %v2936 = vmul.f32 %v2932, %v2932
  %v2937 = vsel %vm241, %v2933, 0.0
  %v2938 = vsel %vm241, %v2934, 0.0
  %v2939 = vadd.f32 %v2937, %v2938
  %v2940 = vsel %vm241, %v2935, 0.0
  %v2941 = vadd.f32 %v2939, %v2940
  %v2942 = vsel %vm241, %v2936, 0.0
  %v2943 = vadd.f32 %v2941, %v2942
  %v2944 = vrot.slane %v2943, 4
  %v2945 = vadd.f32 %v2943, %v2944
  %v2946 = vrot.slane %v2945, 2
  %v2947 = vadd.f32 %v2945, %v2946
  %v2948 = vrot.slane %v2947, 1
  %v2949 = vadd.f32 %v2947, %v2948
  %v2950 = vmul.f32 %v2949, %v502
  %v2951 = vadd.f32 %v2950, 1e-05
  %v2952 = vrsqrt.pop %v2951
  %v2953 = vmul.f32 %v2952, %v2912
  %v2954 = vlaneseq
  %v2955 = vshrl.u32 %v2954, 7
  %v2956 = vsub.s32 0, %v2955
  %v2957 = vrot.slane %v2953, %v2956
  %v2958 = vmul.f32 %v2929, %v2957
  %v2959 = vmul.f32 %v2930, %v2957
  %v2960 = vmul.f32 %v2931, %v2957
  %v2961 = vmul.f32 %v2932, %v2957
  %v2963 = vlaneseq
  %v2964 = vshrl.u32 %v2963, 7
  %v2965 = vsub.s32 0, %v2964
  %v2966 = vrot.slane %v2914, %v2965
  %v2968 = vadd.f32 %v2958, %v2966
  %v2969 = vadd.f32 %v2959, %v2966
  %v2970 = vadd.f32 %v2960, %v2966
  %v2971 = vadd.f32 %v2961, %v2966
  %v2972 = vmax.f32 %v2968, 0.0
  %v2973 = vmax.f32 %v2969, 0.0
  %v2974 = vmax.f32 %v2970, 0.0
  %v2975 = vmax.f32 %v2971, 0.0
  %s2976 = scalar_lea.vmem %s6, 160
  %v2977 = vld [vmem:[%s2976] sm:$0xff]
  %v2978 = vld [vmem:[%s2976 + $0x8] sm:$0xff]
  %v2979 = vld [vmem:[%s2976 + $0x10] sm:$0xff]
  %v2980 = vld [vmem:[%s2976 + $0x18] sm:$0xff]
  %v2982 = vsel %vm241, %v2972, 0
  %v2985 = vsel %vm241, %v2973, 0
  %v2988 = vsel %vm241, %v2974, 0
  %v2991 = vsel %vm241, %v2975, 0
  %2993 = vmatprep.subr.mxu0 0.0
  %2994 = vmatpush1.msra.mxu0 %v2977
  %2995 = vmatprep.subr.mxu0 0.0
  %2996 = vmatpush1.msra.mxu0 %v2978
  %2997 = vmatprep.subr.mxu0 0.0
  %2998 = vmatpush1.msra.mxu0 %v2979
  %2999 = vmatprep.subr.mxu0 0.0
  %3000 = vmatpush1.msra.mxu0 %v2980
  %3001 = vmatprep.subr.mxu0 0.0
  %3002 = vmatpush1.msra.mxu0 0.0
  %3003 = vmatprep.subr.mxu0 0.0
  %3004 = vmatpush1.msra.mxu0 0.0
  %3005 = vmatprep.subr.mxu0 0.0
  %3006 = vmatpush1.msra.mxu0 0.0
  %3007 = vmatprep.subr.mxu0 0.0
  %3008 = vmatpush1.msra.mxu0 0.0
  %3009 = vmatprep.subr.mxu0 0.0
  %3010 = vmatpush1.msra.mxu0 0.0
  %3011 = vmatprep.subr.mxu0 0.0
  %3012 = vmatpush1.msra.mxu0 0.0
  %3013 = vmatprep.subr.mxu0 0.0
  %3014 = vmatpush1.msra.mxu0 0.0
  %3015 = vmatprep.subr.mxu0 0.0
  %3016 = vmatpush1.msra.mxu0 0.0
  %3017 = vmatprep.subr.mxu0 0.0
  %3018 = vmatpush1.msra.mxu0 0.0
  %3019 = vmatprep.subr.mxu0 0.0
  %3020 = vmatpush1.msra.mxu0 0.0
  %3021 = vmatprep.subr.mxu0 0.0
  %3022 = vmatpush1.msra.mxu0 0.0
  %3023 = vmatprep.subr.mxu0 0.0
  %3024 = vmatpush1.msra.mxu0 0.0
  %3025 = vmatprep.subr.mxu0 0.0
  %3026 = vmatpush1.msra.mxu0 0.0
  %3027 = vmatprep.subr.mxu0 0.0
  %3028 = vmatpush1.msra.mxu0 0.0
  %3029 = vmatprep.subr.mxu0 0.0
  %3030 = vmatpush1.msra.mxu0 0.0
  %3031 = vmatprep.subr.mxu0 0.0
  %3032 = vmatpush1.msra.mxu0 0.0
  %3033 = vmatprep.subr.mxu0 0.0
  %3034 = vmatpush1.msra.mxu0 0.0
  %3035 = vmatprep.subr.mxu0 0.0
  %3036 = vmatpush1.msra.mxu0 0.0
  %3037 = vmatprep.subr.mxu0 0.0
  %3038 = vmatpush1.msra.mxu0 0.0
  %3039 = vmatprep.subr.mxu0 0.0
  %3040 = vmatpush1.msra.mxu0 0.0
  %3041 = vmatprep.subr.mxu0 0.0
  %3042 = vmatpush1.msra.mxu0 0.0
  %3043 = vmatprep.subr.mxu0 0.0
  %3044 = vmatpush1.msra.mxu0 0.0
  %3045 = vmatprep.subr.mxu0 0.0
  %3046 = vmatpush1.msra.mxu0 0.0
  %3047 = vmatprep.subr.mxu0 0.0
  %3048 = vmatpush1.msra.mxu0 0.0
  %3049 = vmatprep.subr.mxu0 0.0
  %3050 = vmatpush1.msra.mxu0 0.0
  %3051 = vmatprep.subr.mxu0 0.0
  %3052 = vmatpush1.msra.mxu0 0.0
  %3053 = vmatprep.subr.mxu0 0.0
  %3054 = vmatpush1.msra.mxu0 0.0
  %3055 = vmatprep.subr.mxu0 0.0
  %3056 = vmatpush1.msra.mxu0 0.0
  %3057 = vmatprep.mubr.f32.mxu0 0.0
  %3058 = vmatmul.mubr.f32.gmra.mrb[0].mxu0 %v2982
  %v3059 = vpop.f32.mrb[0].mxu0
  %v3060 = vadd.f32 0.0, %v3059
  %v3061 = vpop.f32.mrb[0].mxu0
  %3062 = vmatprep.mubr.f32.mxu0 0.0
  %3063 = vmatmul.mubr.f32.gmra.mrb[0].mxu0 %v2985
  %v3064 = vpop.f32.mrb[0].mxu0
  %v3065 = vadd.f32 0.0, %v3064
  %v3066 = vpop.f32.mrb[0].mxu0
  %3067 = vmatprep.mubr.f32.mxu0 0.0
  %3068 = vmatmul.mubr.f32.gmra.mrb[0].mxu0 %v2988
  %v3069 = vpop.f32.mrb[0].mxu0
  %v3070 = vadd.f32 0.0, %v3069
  %v3071 = vpop.f32.mrb[0].mxu0
  %3072 = vmatprep.mubr.f32.mxu0 0.0
  %3073 = vmatmul.mubr.f32.gmra.mrb[0].mxu0 %v2991
  %v3074 = vpop.f32.mrb[0].mxu0
  %v3075 = vadd.f32 0.0, %v3074
  %v3076 = vpop.f32.mrb[0].mxu0
  %3077 = vdwg.mxu0
  %3082 = vrot.lane.b32.xlu0 %v3060, 63
  %v3083 = vpop.permute.xlu0 %3082
  %3084 = vrot.lane.b32.xlu0 %v3065, 63
  %v3085 = vpop.permute.xlu0 %3084
  %3086 = vrot.lane.b32.xlu0 %v3070, 63
  %v3087 = vpop.permute.xlu0 %3086
  %3088 = vrot.lane.b32.xlu0 %v3075, 63
  %v3089 = vpop.permute.xlu0 %3088
  %3094 = vxpose.xlu0.b32.start [1/16] %v3083, 128
  %3095 = vxpose.xlu0.b32.cont [2/16] %v3085, 128
  %3096 = vxpose.xlu0.b32.cont [3/16] %v3087, 128
  %3097 = vxpose.xlu0.b32.cont [4/16] %v3089, 128
  %3098 = vxpose.xlu0.b32.cont [5/16] 0.0, 128
  %3099 = vxpose.xlu0.b32.cont [6/16] 0.0, 128
  %3100 = vxpose.xlu0.b32.cont [7/16] 0.0, 128
  %3101 = vxpose.xlu0.b32.cont [8/16] 0.0, 128
  %3102 = vxpose.xlu0.b32.cont [9/16] 0.0, 128
  %3103 = vxpose.xlu0.b32.cont [10/16] 0.0, 128
  %3104 = vxpose.xlu0.b32.cont [11/16] 0.0, 128
  %3105 = vxpose.xlu0.b32.cont [12/16] 0.0, 128
  %3106 = vxpose.xlu0.b32.cont [13/16] 0.0, 128
  %3107 = vxpose.xlu0.b32.cont [14/16] 0.0, 128
  %3108 = vxpose.xlu0.b32.cont [15/16] 0.0, 128
  %3109 = vxpose.xlu0.b32.end [16/16] 0.0, 128
  %v3110 = vpop.trf.xlu0
  %v3111 = vpop.trf.xlu0
  %v3112 = vpop.trf.xlu0
  %v3113 = vpop.trf.xlu0
  %v3114 = vpop.trf.xlu0
  %v3115 = vpop.trf.xlu0
  %v3116 = vpop.trf.xlu0
  %v3117 = vpop.trf.xlu0
  %v3118 = vpop.trf.xlu0
  %v3119 = vpop.trf.xlu0
  %v3120 = vpop.trf.xlu0
  %v3121 = vpop.trf.xlu0
  %v3122 = vpop.trf.xlu0
  %v3123 = vpop.trf.xlu0
  %v3124 = vpop.trf.xlu0
  %v3125 = vpop.trf.xlu0
  %3126 = vset.pattern.permute.xlu0 64
  %3127 = vperm.xlu0 %3126, %v3060
  %v3128 = vpop.permute.xlu0 %3127
  %3130 = vset.pattern.permute.xlu0 64
  %3131 = vperm.xlu0 %3130, %v3065
  %v3132 = vpop.permute.xlu0 %3131
  %3134 = vset.pattern.permute.xlu0 64
  %3135 = vperm.xlu0 %3134, %v3070
  %v3136 = vpop.permute.xlu0 %3135
  %3138 = vset.pattern.permute.xlu0 64
  %3139 = vperm.xlu0 %3138, %v3075
  %v3140 = vpop.permute.xlu0 %3139
  %v3142 = vlaneseq
  %v3143 = vshrl.u32 %v3142, 7
  %v3144 = vsub.s32 0, %v3143
  %v3145 = vrot.slane %v3110, %v3144
  %v3146 = vadd.f32 %v3128, %v3145
  %v3147 = vadd.f32 %v3132, %v3145
  %v3148 = vadd.f32 %v3136, %v3145
  %v3149 = vadd.f32 %v3140, %v3145
  %vm3150 = vcmp.gt.f32.partialorder %v3146, 0.0
  %vm3151 = vcmp.gt.f32.partialorder %v3147, 0.0
  %vm3152 = vcmp.gt.f32.partialorder %v3148, 0.0
  %vm3153 = vcmp.gt.f32.partialorder %v3149, 0.0
  %v3154 = vmul.f32 %v3146, 0.2
  %v3155 = vmul.f32 %v3147, 0.2
  %v3156 = vmul.f32 %v3148, 0.2
  %v3157 = vmul.f32 %v3149, 0.2
  %v3158 = vsel %vm3150, %v3146, %v3154
  %v3159 = vsel %vm3151, %v3147, %v3155
  %v3160 = vsel %vm3152, %v3148, %v3156
  %v3161 = vsel %vm3153, %v3149, %v3157
  %v3162 = vadd.f32 %v3158, %v38
  %v3163 = vadd.f32 %v3159, %v39
  %v3164 = vadd.f32 %v3160, %v40
  %v3165 = vadd.f32 %v3161, %v41
  %v3166 = vsel %vm241, %v3162, -inf
  %3167 = vmax.xlane.f32.xlu0 %v3166
  %v3168 = vpop.xlane.xlu0 %3167
  %v3169 = vsel %vm241, %v3163, -inf
  %3170 = vmax.xlane.f32.xlu0 %v3169
  %v3171 = vpop.xlane.xlu0 %3170
  %v3172 = vsel %vm241, %v3164, -inf
  %3173 = vmax.xlane.f32.xlu0 %v3172
  %v3174 = vpop.xlane.xlu0 %3173
  %v3175 = vsel %vm241, %v3165, -inf
  %3176 = vmax.xlane.f32.xlu0 %v3175
  %v3177 = vpop.xlane.xlu0 %3176
  %v3178 = vsub.f32 %v3162, %v3168
  %v3179 = vsub.f32 %v3163, %v3171
  %v3180 = vsub.f32 %v3164, %v3174
  %v3181 = vsub.f32 %v3165, %v3177
  %v3182 = vmul.f32 %v3178, 1.442695
  %v3183 = vpow.pop %v3182
  %v3184 = vmul.f32 %v3179, 1.442695
  %v3185 = vpow.pop %v3184
  %v3186 = vmul.f32 %v3180, 1.442695
  %v3187 = vpow.pop %v3186
  %v3188 = vmul.f32 %v3181, 1.442695
  %v3189 = vpow.pop %v3188
  %v3190 = vsel %vm241, %v3183, 0.0
  %3191 = vadd.xlane.f32.xlu0 %v3190
  %v3192 = vpop.xlane.xlu0 %3191
  %v3193 = vsel %vm241, %v3185, 0.0
  %3194 = vadd.xlane.f32.xlu0 %v3193
  %v3195 = vpop.xlane.xlu0 %3194
  %v3196 = vsel %vm241, %v3187, 0.0
  %3197 = vadd.xlane.f32.xlu0 %v3196
  %v3198 = vpop.xlane.xlu0 %3197
  %v3199 = vsel %vm241, %v3189, 0.0
  %3200 = vadd.xlane.f32.xlu0 %v3199
  %v3201 = vpop.xlane.xlu0 %3200
  %v3202 = vrcp.pop %v3192
  %v3203 = vrcp.pop %v3195
  %v3204 = vrcp.pop %v3198
  %v3205 = vrcp.pop %v3201
  %v3206 = vmul.f32 %v3183, %v3202
  %v3207 = vmul.f32 %v3185, %v3203
  %v3208 = vmul.f32 %v3187, %v3204
  %v3209 = vmul.f32 %v3189, %v3205
  %3210 = vrot.lane.b32.xlu0 %v3060, 127
  %v3211 = vpop.permute.xlu0 %3210
  %3212 = vrot.lane.b32.xlu0 %v3065, 127
  %v3213 = vpop.permute.xlu0 %3212
  %3214 = vrot.lane.b32.xlu0 %v3070, 127
  %v3215 = vpop.permute.xlu0 %3214
  %3216 = vrot.lane.b32.xlu0 %v3075, 127
  %v3217 = vpop.permute.xlu0 %3216
  %v3222 = vadd.f32 %v3060, %v3211
  %v3223 = vadd.f32 %v3065, %v3213
  %v3224 = vadd.f32 %v3070, %v3215
  %v3225 = vadd.f32 %v3075, %v3217
  %vm3226 = vcmp.gt.f32.partialorder %v3222, 0.0
  %vm3227 = vcmp.gt.f32.partialorder %v3223, 0.0
  %vm3228 = vcmp.gt.f32.partialorder %v3224, 0.0
  %vm3229 = vcmp.gt.f32.partialorder %v3225, 0.0
  %v3230 = vmul.f32 %v3222, 0.2
  %v3231 = vmul.f32 %v3223, 0.2
  %v3232 = vmul.f32 %v3224, 0.2
  %v3233 = vmul.f32 %v3225, 0.2
  %v3234 = vsel %vm3226, %v3222, %v3230
  %v3235 = vsel %vm3227, %v3223, %v3231
  %v3236 = vsel %vm3228, %v3224, %v3232
  %v3237 = vsel %vm3229, %v3225, %v3233
  %v3238 = vadd.f32 %v3234, %v319
  %v3239 = vadd.f32 %v3235, %v321
  %v3240 = vadd.f32 %v3236, %v323
  %v3241 = vadd.f32 %v3237, %v325
  %v3242 = vsub.f32 %v3238, %v3168
  %v3243 = vsub.f32 %v3239, %v3171
  %v3244 = vsub.f32 %v3240, %v3174
  %v3245 = vsub.f32 %v3241, %v3177
  %v3246 = vmul.f32 %v3242, 1.442695
  %v3247 = vpow.pop %v3246
  %v3248 = vmul.f32 %v3243, 1.442695
  %v3249 = vpow.pop %v3248
  %v3250 = vmul.f32 %v3244, 1.442695
  %v3251 = vpow.pop %v3250
  %v3252 = vmul.f32 %v3245, 1.442695
  %v3253 = vpow.pop %v3252
  %v3254 = vmul.f32 %v3247, %v3202
  %v3255 = vmul.f32 %v3249, %v3203
  %v3256 = vmul.f32 %v3251, %v3204
  %v3257 = vmul.f32 %v3253, %v3205
  %3258 = vrot.lane.b32.xlu0 %v3060, 96
  %v3259 = vpop.permute.xlu0 %3258
  %3260 = vrot.lane.b32.xlu0 %v3065, 96
  %v3261 = vpop.permute.xlu0 %3260
  %3262 = vrot.lane.b32.xlu0 %v3070, 96
  %v3263 = vpop.permute.xlu0 %3262
  %3264 = vrot.lane.b32.xlu0 %v3075, 96
  %v3265 = vpop.permute.xlu0 %3264
  %v3270 = vsub.f32 %v3060, %v3259
  %v3271 = vsub.f32 %v3065, %v3261
  %v3272 = vsub.f32 %v3070, %v3263
  %v3273 = vsub.f32 %v3075, %v3265
  %3275 = vset.pattern.permute.xlu0 64
  %3276 = vperm.xlu0 %3275, %v3254
  %v3277 = vpop.permute.xlu0 %3276
  %3280 = vset.pattern.permute.xlu0 64
  %3281 = vperm.xlu0 %3280, %v3255
  %v3282 = vpop.permute.xlu0 %3281
  %3285 = vset.pattern.permute.xlu0 64
  %3286 = vperm.xlu0 %3285, %v3256
  %v3287 = vpop.permute.xlu0 %3286
  %3290 = vset.pattern.permute.xlu0 64
  %3291 = vperm.xlu0 %3290, %v3257
  %v3292 = vpop.permute.xlu0 %3291
  %v3294 = vmul.f32 %v3277, %v3270
  %v3295 = vmul.f32 %v3282, %v3271
  %v3296 = vmul.f32 %v3287, %v3272
  %v3297 = vmul.f32 %v3292, %v3273
  %v3299 = vsel %vm241, %v3206, 0
  %v3302 = vsel %vm241, %v3207, 0
  %v3305 = vsel %vm241, %v3208, 0
  %v3308 = vsel %vm241, %v3209, 0
  %3310 = vmatprep.subr.mxu0 0.0
  %3311 = vmatpush1.msra.mxu0 %v3259
  %3312 = vmatprep.subr.mxu0 0.0
  %3313 = vmatpush1.msra.mxu0 %v3261
  %3314 = vmatprep.subr.mxu0 0.0
  %3315 = vmatpush1.msra.mxu0 %v3263
  %3316 = vmatprep.subr.mxu0 0.0
  %3317 = vmatpush1.msra.mxu0 %v3265
  %3318 = vmatprep.subr.mxu0 0.0
  %3319 = vmatpush1.msra.mxu0 0.0
  %3320 = vmatprep.subr.mxu0 0.0
  %3321 = vmatpush1.msra.mxu0 0.0
  %3322 = vmatprep.subr.mxu0 0.0
  %3323 = vmatpush1.msra.mxu0 0.0
  %3324 = vmatprep.subr.mxu0 0.0
  %3325 = vmatpush1.msra.mxu0 0.0
  %3326 = vmatprep.subr.mxu0 0.0
  %3327 = vmatpush1.msra.mxu0 0.0
  %3328 = vmatprep.subr.mxu0 0.0
  %3329 = vmatpush1.msra.mxu0 0.0
  %3330 = vmatprep.subr.mxu0 0.0
  %3331 = vmatpush1.msra.mxu0 0.0
  %3332 = vmatprep.subr.mxu0 0.0
  %3333 = vmatpush1.msra.mxu0 0.0
  %3334 = vmatprep.subr.mxu0 0.0
  %3335 = vmatpush1.msra.mxu0 0.0
  %3336 = vmatprep.subr.mxu0 0.0
  %3337 = vmatpush1.msra.mxu0 0.0
  %3338 = vmatprep.subr.mxu0 0.0
  %3339 = vmatpush1.msra.mxu0 0.0
  %3340 = vmatprep.subr.mxu0 0.0
  %3341 = vmatpush1.msra.mxu0 0.0
  %3342 = vmatprep.subr.mxu0 0.0
  %3343 = vmatpush1.msra.mxu0 0.0
  %3344 = vmatprep.subr.mxu0 0.0
  %3345 = vmatpush1.msra.mxu0 0.0
  %3346 = vmatprep.subr.mxu0 0.0
  %3347 = vmatpush1.msra.mxu0 0.0
  %3348 = vmatprep.subr.mxu0 0.0
  %3349 = vmatpush1.msra.mxu0 0.0
  %3350 = vmatprep.subr.mxu0 0.0
  %3351 = vmatpush1.msra.mxu0 0.0
  %3352 = vmatprep.subr.mxu0 0.0
  %3353 = vmatpush1.msra.mxu0 0.0
  %3354 = vmatprep.subr.mxu0 0.0
  %3355 = vmatpush1.msra.mxu0 0.0
  %3356 = vmatprep.subr.mxu0 0.0
  %3357 = vmatpush1.msra.mxu0 0.0
  %3358 = vmatprep.subr.mxu0 0.0
  %3359 = vmatpush1.msra.mxu0 0.0
  %3360 = vmatprep.subr.mxu0 0.0
  %3361 = vmatpush1.msra.mxu0 0.0
  %3362 = vmatprep.subr.mxu0 0.0
  %3363 = vmatpush1.msra.mxu0 0.0
  %3364 = vmatprep.subr.mxu0 0.0
  %3365 = vmatpush1.msra.mxu0 0.0
  %3366 = vmatprep.subr.mxu0 0.0
  %3367 = vmatpush1.msra.mxu0 0.0
  %3368 = vmatprep.subr.mxu0 0.0
  %3369 = vmatpush1.msra.mxu0 0.0
  %3370 = vmatprep.subr.mxu0 0.0
  %3371 = vmatpush1.msra.mxu0 0.0
  %3372 = vmatprep.subr.mxu0 0.0
  %3373 = vmatpush1.msra.mxu0 0.0
  %3374 = vmatprep.mubr.f32.mxu0 0.0
  %3375 = vmatmul.mubr.f32.gmra.mrb[0].mxu0 %v3299
  %v3376 = vpop.f32.mrb[0].mxu0
  %v3377 = vadd.f32 %v3294, %v3376
  %v3378 = vpop.f32.mrb[0].mxu0
  %3379 = vmatprep.mubr.f32.mxu0 0.0
  %3380 = vmatmul.mubr.f32.gmra.mrb[0].mxu0 %v3302
  %v3381 = vpop.f32.mrb[0].mxu0
  %v3382 = vadd.f32 %v3295, %v3381
  %v3383 = vpop.f32.mrb[0].mxu0
  %3384 = vmatprep.mubr.f32.mxu0 0.0
  %3385 = vmatmul.mubr.f32.gmra.mrb[0].mxu0 %v3305
  %v3386 = vpop.f32.mrb[0].mxu0
  %v3387 = vadd.f32 %v3296, %v3386
  %v3388 = vpop.f32.mrb[0].mxu0
  %3389 = vmatprep.mubr.f32.mxu0 0.0
  %3390 = vmatmul.mubr.f32.gmra.mrb[0].mxu0 %v3308
  %v3391 = vpop.f32.mrb[0].mxu0
  %v3392 = vadd.f32 %v3297, %v3391
  %v3393 = vpop.f32.mrb[0].mxu0
  %3394 = vdwg.mxu0
  %s3395 = scalar_lea.vmem %s7, 5
  %v3396 = vld [vmem:[%s3395] sm:$0x1]
  %s3397 = scalar_lea.vmem %s8, 5
  %v3398 = vld [vmem:[%s3397] sm:$0x1]
  %v3399 = vsel %vm241, %v3377, 0.0
  %v3400 = vsel %vm241, %v3382, 0.0
  %v3401 = vadd.f32 %v3399, %v3400
  %v3402 = vsel %vm241, %v3387, 0.0
  %v3403 = vadd.f32 %v3401, %v3402
  %v3404 = vsel %vm241, %v3392, 0.0
  %v3405 = vadd.f32 %v3403, %v3404
  %v3406 = vrot.slane %v3405, 4
  %v3407 = vadd.f32 %v3405, %v3406
  %v3408 = vrot.slane %v3407, 2
  %v3409 = vadd.f32 %v3407, %v3408
  %v3410 = vrot.slane %v3409, 1
  %v3411 = vadd.f32 %v3409, %v3410
  %v3412 = vmul.f32 %v3411, %v502
  %v3413 = vsub.f32 %v3377, %v3412
  %v3414 = vsub.f32 %v3382, %v3412
  %v3415 = vsub.f32 %v3387, %v3412
  %v3416 = vsub.f32 %v3392, %v3412
  %v3417 = vmul.f32 %v3413, %v3413
  %v3418 = vmul.f32 %v3414, %v3414
  %v3419 = vmul.f32 %v3415, %v3415
  %v3420 = vmul.f32 %v3416, %v3416
  %v3421 = vsel %vm241, %v3417, 0.0
  %v3422 = vsel %vm241, %v3418, 0.0
  %v3423 = vadd.f32 %v3421, %v3422
  %v3424 = vsel %vm241, %v3419, 0.0
  %v3425 = vadd.f32 %v3423, %v3424
  %v3426 = vsel %vm241, %v3420, 0.0
  %v3427 = vadd.f32 %v3425, %v3426
  %v3428 = vrot.slane %v3427, 4
  %v3429 = vadd.f32 %v3427, %v3428
  %v3430 = vrot.slane %v3429, 2
  %v3431 = vadd.f32 %v3429, %v3430
  %v3432 = vrot.slane %v3431, 1
  %v3433 = vadd.f32 %v3431, %v3432
  %v3434 = vmul.f32 %v3433, %v502
  %v3435 = vadd.f32 %v3434, 1e-05
  %v3436 = vrsqrt.pop %v3435
  %v3437 = vmul.f32 %v3436, %v3396
  %v3438 = vlaneseq
  %v3439 = vshrl.u32 %v3438, 7
  %v3440 = vsub.s32 0, %v3439
  %v3441 = vrot.slane %v3437, %v3440
  %v3442 = vmul.f32 %v3413, %v3441
  %v3443 = vmul.f32 %v3414, %v3441
  %v3444 = vmul.f32 %v3415, %v3441
  %v3445 = vmul.f32 %v3416, %v3441
  %v3447 = vlaneseq
  %v3448 = vshrl.u32 %v3447, 7
  %v3449 = vsub.s32 0, %v3448
  %v3450 = vrot.slane %v3398, %v3449
  %v3452 = vadd.f32 %v3442, %v3450
  %v3453 = vadd.f32 %v3443, %v3450
  %v3454 = vadd.f32 %v3444, %v3450
  %v3455 = vadd.f32 %v3445, %v3450
  %v3456 = vmax.f32 %v3452, 0.0
  %v3457 = vmax.f32 %v3453, 0.0
  %v3458 = vmax.f32 %v3454, 0.0
  %v3459 = vmax.f32 %v3455, 0.0
  %v3460 = vadd.f32 %v3456, %v2488
  %v3461 = vadd.f32 %v3457, %v2489
  %v3462 = vadd.f32 %v3458, %v2490
  %v3463 = vadd.f32 %v3459, %v2491
  %s3464 = scalar_lea.vmem %s6, 192
  %v3465 = vld [vmem:[%s3464] sm:$0xff]
  %v3466 = vld [vmem:[%s3464 + $0x8] sm:$0xff]
  %v3467 = vld [vmem:[%s3464 + $0x10] sm:$0xff]
  %v3468 = vld [vmem:[%s3464 + $0x18] sm:$0xff]
  %v3470 = vsel %vm241, %v3460, 0
  %v3473 = vsel %vm241, %v3461, 0
  %v3476 = vsel %vm241, %v3462, 0
  %v3479 = vsel %vm241, %v3463, 0
  %3481 = vmatprep.subr.mxu0 0.0
  %3482 = vmatpush1.msra.mxu0 %v3465
  %3483 = vmatprep.subr.mxu0 0.0
  %3484 = vmatpush1.msra.mxu0 %v3466
  %3485 = vmatprep.subr.mxu0 0.0
  %3486 = vmatpush1.msra.mxu0 %v3467
  %3487 = vmatprep.subr.mxu0 0.0
  %3488 = vmatpush1.msra.mxu0 %v3468
  %3489 = vmatprep.subr.mxu0 0.0
  %3490 = vmatpush1.msra.mxu0 0.0
  %3491 = vmatprep.subr.mxu0 0.0
  %3492 = vmatpush1.msra.mxu0 0.0
  %3493 = vmatprep.subr.mxu0 0.0
  %3494 = vmatpush1.msra.mxu0 0.0
  %3495 = vmatprep.subr.mxu0 0.0
  %3496 = vmatpush1.msra.mxu0 0.0
  %3497 = vmatprep.subr.mxu0 0.0
  %3498 = vmatpush1.msra.mxu0 0.0
  %3499 = vmatprep.subr.mxu0 0.0
  %3500 = vmatpush1.msra.mxu0 0.0
  %3501 = vmatprep.subr.mxu0 0.0
  %3502 = vmatpush1.msra.mxu0 0.0
  %3503 = vmatprep.subr.mxu0 0.0
  %3504 = vmatpush1.msra.mxu0 0.0
  %3505 = vmatprep.subr.mxu0 0.0
  %3506 = vmatpush1.msra.mxu0 0.0
  %3507 = vmatprep.subr.mxu0 0.0
  %3508 = vmatpush1.msra.mxu0 0.0
  %3509 = vmatprep.subr.mxu0 0.0
  %3510 = vmatpush1.msra.mxu0 0.0
  %3511 = vmatprep.subr.mxu0 0.0
  %3512 = vmatpush1.msra.mxu0 0.0
  %3513 = vmatprep.subr.mxu0 0.0
  %3514 = vmatpush1.msra.mxu0 0.0
  %3515 = vmatprep.subr.mxu0 0.0
  %3516 = vmatpush1.msra.mxu0 0.0
  %3517 = vmatprep.subr.mxu0 0.0
  %3518 = vmatpush1.msra.mxu0 0.0
  %3519 = vmatprep.subr.mxu0 0.0
  %3520 = vmatpush1.msra.mxu0 0.0
  %3521 = vmatprep.subr.mxu0 0.0
  %3522 = vmatpush1.msra.mxu0 0.0
  %3523 = vmatprep.subr.mxu0 0.0
  %3524 = vmatpush1.msra.mxu0 0.0
  %3525 = vmatprep.subr.mxu0 0.0
  %3526 = vmatpush1.msra.mxu0 0.0
  %3527 = vmatprep.subr.mxu0 0.0
  %3528 = vmatpush1.msra.mxu0 0.0
  %3529 = vmatprep.subr.mxu0 0.0
  %3530 = vmatpush1.msra.mxu0 0.0
  %3531 = vmatprep.subr.mxu0 0.0
  %3532 = vmatpush1.msra.mxu0 0.0
  %3533 = vmatprep.subr.mxu0 0.0
  %3534 = vmatpush1.msra.mxu0 0.0
  %3535 = vmatprep.subr.mxu0 0.0
  %3536 = vmatpush1.msra.mxu0 0.0
  %3537 = vmatprep.subr.mxu0 0.0
  %3538 = vmatpush1.msra.mxu0 0.0
  %3539 = vmatprep.subr.mxu0 0.0
  %3540 = vmatpush1.msra.mxu0 0.0
  %3541 = vmatprep.subr.mxu0 0.0
  %3542 = vmatpush1.msra.mxu0 0.0
  %3543 = vmatprep.subr.mxu0 0.0
  %3544 = vmatpush1.msra.mxu0 0.0
  %3545 = vmatprep.mubr.f32.mxu0 0.0
  %3546 = vmatmul.mubr.f32.gmra.mrb[0].mxu0 %v3470
  %v3547 = vpop.f32.mrb[0].mxu0
  %v3548 = vadd.f32 0.0, %v3547
  %v3549 = vpop.f32.mrb[0].mxu0
  %3550 = vmatprep.mubr.f32.mxu0 0.0
  %3551 = vmatmul.mubr.f32.gmra.mrb[0].mxu0 %v3473
  %v3552 = vpop.f32.mrb[0].mxu0
  %v3553 = vadd.f32 0.0, %v3552
  %v3554 = vpop.f32.mrb[0].mxu0
  %3555 = vmatprep.mubr.f32.mxu0 0.0
  %3556 = vmatmul.mubr.f32.gmra.mrb[0].mxu0 %v3476
  %v3557 = vpop.f32.mrb[0].mxu0
  %v3558 = vadd.f32 0.0, %v3557
  %v3559 = vpop.f32.mrb[0].mxu0
  %3560 = vmatprep.mubr.f32.mxu0 0.0
  %3561 = vmatmul.mubr.f32.gmra.mrb[0].mxu0 %v3479
  %v3562 = vpop.f32.mrb[0].mxu0
  %v3563 = vadd.f32 0.0, %v3562
  %v3564 = vpop.f32.mrb[0].mxu0
  %3565 = vdwg.mxu0
  %3570 = vrot.lane.b32.xlu0 %v3548, 63
  %v3571 = vpop.permute.xlu0 %3570
  %3572 = vrot.lane.b32.xlu0 %v3553, 63
  %v3573 = vpop.permute.xlu0 %3572
  %3574 = vrot.lane.b32.xlu0 %v3558, 63
  %v3575 = vpop.permute.xlu0 %3574
  %3576 = vrot.lane.b32.xlu0 %v3563, 63
  %v3577 = vpop.permute.xlu0 %3576
  %3582 = vxpose.xlu0.b32.start [1/16] %v3571, 128
  %3583 = vxpose.xlu0.b32.cont [2/16] %v3573, 128
  %3584 = vxpose.xlu0.b32.cont [3/16] %v3575, 128
  %3585 = vxpose.xlu0.b32.cont [4/16] %v3577, 128
  %3586 = vxpose.xlu0.b32.cont [5/16] 0.0, 128
  %3587 = vxpose.xlu0.b32.cont [6/16] 0.0, 128
  %3588 = vxpose.xlu0.b32.cont [7/16] 0.0, 128
  %3589 = vxpose.xlu0.b32.cont [8/16] 0.0, 128
  %3590 = vxpose.xlu0.b32.cont [9/16] 0.0, 128
  %3591 = vxpose.xlu0.b32.cont [10/16] 0.0, 128
  %3592 = vxpose.xlu0.b32.cont [11/16] 0.0, 128
  %3593 = vxpose.xlu0.b32.cont [12/16] 0.0, 128
  %3594 = vxpose.xlu0.b32.cont [13/16] 0.0, 128
  %3595 = vxpose.xlu0.b32.cont [14/16] 0.0, 128
  %3596 = vxpose.xlu0.b32.cont [15/16] 0.0, 128
  %3597 = vxpose.xlu0.b32.end [16/16] 0.0, 128
  %v3598 = vpop.trf.xlu0
  %v3599 = vpop.trf.xlu0
  %v3600 = vpop.trf.xlu0
  %v3601 = vpop.trf.xlu0
  %v3602 = vpop.trf.xlu0
  %v3603 = vpop.trf.xlu0
  %v3604 = vpop.trf.xlu0
  %v3605 = vpop.trf.xlu0
  %v3606 = vpop.trf.xlu0
  %v3607 = vpop.trf.xlu0
  %v3608 = vpop.trf.xlu0
  %v3609 = vpop.trf.xlu0
  %v3610 = vpop.trf.xlu0
  %v3611 = vpop.trf.xlu0
  %v3612 = vpop.trf.xlu0
  %v3613 = vpop.trf.xlu0
  %3614 = vset.pattern.permute.xlu0 64
  %3615 = vperm.xlu0 %3614, %v3548
  %v3616 = vpop.permute.xlu0 %3615
  %3618 = vset.pattern.permute.xlu0 64
  %3619 = vperm.xlu0 %3618, %v3553
  %v3620 = vpop.permute.xlu0 %3619
  %3622 = vset.pattern.permute.xlu0 64
  %3623 = vperm.xlu0 %3622, %v3558
  %v3624 = vpop.permute.xlu0 %3623
  %3626 = vset.pattern.permute.xlu0 64
  %3627 = vperm.xlu0 %3626, %v3563
  %v3628 = vpop.permute.xlu0 %3627
  %v3630 = vlaneseq
  %v3631 = vshrl.u32 %v3630, 7
  %v3632 = vsub.s32 0, %v3631
  %v3633 = vrot.slane %v3598, %v3632
  %v3634 = vadd.f32 %v3616, %v3633
  %v3635 = vadd.f32 %v3620, %v3633
  %v3636 = vadd.f32 %v3624, %v3633
  %v3637 = vadd.f32 %v3628, %v3633
  %vm3638 = vcmp.gt.f32.partialorder %v3634, 0.0
  %vm3639 = vcmp.gt.f32.partialorder %v3635, 0.0
  %vm3640 = vcmp.gt.f32.partialorder %v3636, 0.0
  %vm3641 = vcmp.gt.f32.partialorder %v3637, 0.0
  %v3642 = vmul.f32 %v3634, 0.2
  %v3643 = vmul.f32 %v3635, 0.2
  %v3644 = vmul.f32 %v3636, 0.2
  %v3645 = vmul.f32 %v3637, 0.2
  %v3646 = vsel %vm3638, %v3634, %v3642
  %v3647 = vsel %vm3639, %v3635, %v3643
  %v3648 = vsel %vm3640, %v3636, %v3644
  %v3649 = vsel %vm3641, %v3637, %v3645
  %v3650 = vadd.f32 %v3646, %v38
  %v3651 = vadd.f32 %v3647, %v39
  %v3652 = vadd.f32 %v3648, %v40
  %v3653 = vadd.f32 %v3649, %v41
  %v3654 = vsel %vm241, %v3650, -inf
  %3655 = vmax.xlane.f32.xlu0 %v3654
  %v3656 = vpop.xlane.xlu0 %3655
  %v3657 = vsel %vm241, %v3651, -inf
  %3658 = vmax.xlane.f32.xlu0 %v3657
  %v3659 = vpop.xlane.xlu0 %3658
  %v3660 = vsel %vm241, %v3652, -inf
  %3661 = vmax.xlane.f32.xlu0 %v3660
  %v3662 = vpop.xlane.xlu0 %3661
  %v3663 = vsel %vm241, %v3653, -inf
  %3664 = vmax.xlane.f32.xlu0 %v3663
  %v3665 = vpop.xlane.xlu0 %3664
  %v3666 = vsub.f32 %v3650, %v3656
  %v3667 = vsub.f32 %v3651, %v3659
  %v3668 = vsub.f32 %v3652, %v3662
  %v3669 = vsub.f32 %v3653, %v3665
  %v3670 = vmul.f32 %v3666, 1.442695
  %v3671 = vpow.pop %v3670
  %v3672 = vmul.f32 %v3667, 1.442695
  %v3673 = vpow.pop %v3672
  %v3674 = vmul.f32 %v3668, 1.442695
  %v3675 = vpow.pop %v3674
  %v3676 = vmul.f32 %v3669, 1.442695
  %v3677 = vpow.pop %v3676
  %v3678 = vsel %vm241, %v3671, 0.0
  %3679 = vadd.xlane.f32.xlu0 %v3678
  %v3680 = vpop.xlane.xlu0 %3679
  %v3681 = vsel %vm241, %v3673, 0.0
  %3682 = vadd.xlane.f32.xlu0 %v3681
  %v3683 = vpop.xlane.xlu0 %3682
  %v3684 = vsel %vm241, %v3675, 0.0
  %3685 = vadd.xlane.f32.xlu0 %v3684
  %v3686 = vpop.xlane.xlu0 %3685
  %v3687 = vsel %vm241, %v3677, 0.0
  %3688 = vadd.xlane.f32.xlu0 %v3687
  %v3689 = vpop.xlane.xlu0 %3688
  %v3690 = vrcp.pop %v3680
  %v3691 = vrcp.pop %v3683
  %v3692 = vrcp.pop %v3686
  %v3693 = vrcp.pop %v3689
  %v3694 = vmul.f32 %v3671, %v3690
  %v3695 = vmul.f32 %v3673, %v3691
  %v3696 = vmul.f32 %v3675, %v3692
  %v3697 = vmul.f32 %v3677, %v3693
  %3698 = vrot.lane.b32.xlu0 %v3548, 127
  %v3699 = vpop.permute.xlu0 %3698
  %3700 = vrot.lane.b32.xlu0 %v3553, 127
  %v3701 = vpop.permute.xlu0 %3700
  %3702 = vrot.lane.b32.xlu0 %v3558, 127
  %v3703 = vpop.permute.xlu0 %3702
  %3704 = vrot.lane.b32.xlu0 %v3563, 127
  %v3705 = vpop.permute.xlu0 %3704
  %v3710 = vadd.f32 %v3548, %v3699
  %v3711 = vadd.f32 %v3553, %v3701
  %v3712 = vadd.f32 %v3558, %v3703
  %v3713 = vadd.f32 %v3563, %v3705
  %vm3714 = vcmp.gt.f32.partialorder %v3710, 0.0
  %vm3715 = vcmp.gt.f32.partialorder %v3711, 0.0
  %vm3716 = vcmp.gt.f32.partialorder %v3712, 0.0
  %vm3717 = vcmp.gt.f32.partialorder %v3713, 0.0
  %v3718 = vmul.f32 %v3710, 0.2
  %v3719 = vmul.f32 %v3711, 0.2
  %v3720 = vmul.f32 %v3712, 0.2
  %v3721 = vmul.f32 %v3713, 0.2
  %v3722 = vsel %vm3714, %v3710, %v3718
  %v3723 = vsel %vm3715, %v3711, %v3719
  %v3724 = vsel %vm3716, %v3712, %v3720
  %v3725 = vsel %vm3717, %v3713, %v3721
  %v3726 = vadd.f32 %v3722, %v319
  %v3727 = vadd.f32 %v3723, %v321
  %v3728 = vadd.f32 %v3724, %v323
  %v3729 = vadd.f32 %v3725, %v325
  %v3730 = vsub.f32 %v3726, %v3656
  %v3731 = vsub.f32 %v3727, %v3659
  %v3732 = vsub.f32 %v3728, %v3662
  %v3733 = vsub.f32 %v3729, %v3665
  %v3734 = vmul.f32 %v3730, 1.442695
  %v3735 = vpow.pop %v3734
  %v3736 = vmul.f32 %v3731, 1.442695
  %v3737 = vpow.pop %v3736
  %v3738 = vmul.f32 %v3732, 1.442695
  %v3739 = vpow.pop %v3738
  %v3740 = vmul.f32 %v3733, 1.442695
  %v3741 = vpow.pop %v3740
  %v3742 = vmul.f32 %v3735, %v3690
  %v3743 = vmul.f32 %v3737, %v3691
  %v3744 = vmul.f32 %v3739, %v3692
  %v3745 = vmul.f32 %v3741, %v3693
  %3746 = vrot.lane.b32.xlu0 %v3548, 96
  %v3747 = vpop.permute.xlu0 %3746
  %3748 = vrot.lane.b32.xlu0 %v3553, 96
  %v3749 = vpop.permute.xlu0 %3748
  %3750 = vrot.lane.b32.xlu0 %v3558, 96
  %v3751 = vpop.permute.xlu0 %3750
  %3752 = vrot.lane.b32.xlu0 %v3563, 96
  %v3753 = vpop.permute.xlu0 %3752
  %v3758 = vsub.f32 %v3548, %v3747
  %v3759 = vsub.f32 %v3553, %v3749
  %v3760 = vsub.f32 %v3558, %v3751
  %v3761 = vsub.f32 %v3563, %v3753
  %3763 = vset.pattern.permute.xlu0 64
  %3764 = vperm.xlu0 %3763, %v3742
  %v3765 = vpop.permute.xlu0 %3764
  %3768 = vset.pattern.permute.xlu0 64
  %3769 = vperm.xlu0 %3768, %v3743
  %v3770 = vpop.permute.xlu0 %3769
  %3773 = vset.pattern.permute.xlu0 64
  %3774 = vperm.xlu0 %3773, %v3744
  %v3775 = vpop.permute.xlu0 %3774
  %3778 = vset.pattern.permute.xlu0 64
  %3779 = vperm.xlu0 %3778, %v3745
  %v3780 = vpop.permute.xlu0 %3779
  %v3782 = vmul.f32 %v3765, %v3758
  %v3783 = vmul.f32 %v3770, %v3759
  %v3784 = vmul.f32 %v3775, %v3760
  %v3785 = vmul.f32 %v3780, %v3761
  %v3787 = vsel %vm241, %v3694, 0
  %v3790 = vsel %vm241, %v3695, 0
  %v3793 = vsel %vm241, %v3696, 0
  %v3796 = vsel %vm241, %v3697, 0
  %3798 = vmatprep.subr.mxu0 0.0
  %3799 = vmatpush1.msra.mxu0 %v3747
  %3800 = vmatprep.subr.mxu0 0.0
  %3801 = vmatpush1.msra.mxu0 %v3749
  %3802 = vmatprep.subr.mxu0 0.0
  %3803 = vmatpush1.msra.mxu0 %v3751
  %3804 = vmatprep.subr.mxu0 0.0
  %3805 = vmatpush1.msra.mxu0 %v3753
  %3806 = vmatprep.subr.mxu0 0.0
  %3807 = vmatpush1.msra.mxu0 0.0
  %3808 = vmatprep.subr.mxu0 0.0
  %3809 = vmatpush1.msra.mxu0 0.0
  %3810 = vmatprep.subr.mxu0 0.0
  %3811 = vmatpush1.msra.mxu0 0.0
  %3812 = vmatprep.subr.mxu0 0.0
  %3813 = vmatpush1.msra.mxu0 0.0
  %3814 = vmatprep.subr.mxu0 0.0
  %3815 = vmatpush1.msra.mxu0 0.0
  %3816 = vmatprep.subr.mxu0 0.0
  %3817 = vmatpush1.msra.mxu0 0.0
  %3818 = vmatprep.subr.mxu0 0.0
  %3819 = vmatpush1.msra.mxu0 0.0
  %3820 = vmatprep.subr.mxu0 0.0
  %3821 = vmatpush1.msra.mxu0 0.0
  %3822 = vmatprep.subr.mxu0 0.0
  %3823 = vmatpush1.msra.mxu0 0.0
  %3824 = vmatprep.subr.mxu0 0.0
  %3825 = vmatpush1.msra.mxu0 0.0
  %3826 = vmatprep.subr.mxu0 0.0
  %3827 = vmatpush1.msra.mxu0 0.0
  %3828 = vmatprep.subr.mxu0 0.0
  %3829 = vmatpush1.msra.mxu0 0.0
  %3830 = vmatprep.subr.mxu0 0.0
  %3831 = vmatpush1.msra.mxu0 0.0
  %3832 = vmatprep.subr.mxu0 0.0
  %3833 = vmatpush1.msra.mxu0 0.0
  %3834 = vmatprep.subr.mxu0 0.0
  %3835 = vmatpush1.msra.mxu0 0.0
  %3836 = vmatprep.subr.mxu0 0.0
  %3837 = vmatpush1.msra.mxu0 0.0
  %3838 = vmatprep.subr.mxu0 0.0
  %3839 = vmatpush1.msra.mxu0 0.0
  %3840 = vmatprep.subr.mxu0 0.0
  %3841 = vmatpush1.msra.mxu0 0.0
  %3842 = vmatprep.subr.mxu0 0.0
  %3843 = vmatpush1.msra.mxu0 0.0
  %3844 = vmatprep.subr.mxu0 0.0
  %3845 = vmatpush1.msra.mxu0 0.0
  %3846 = vmatprep.subr.mxu0 0.0
  %3847 = vmatpush1.msra.mxu0 0.0
  %3848 = vmatprep.subr.mxu0 0.0
  %3849 = vmatpush1.msra.mxu0 0.0
  %3850 = vmatprep.subr.mxu0 0.0
  %3851 = vmatpush1.msra.mxu0 0.0
  %3852 = vmatprep.subr.mxu0 0.0
  %3853 = vmatpush1.msra.mxu0 0.0
  %3854 = vmatprep.subr.mxu0 0.0
  %3855 = vmatpush1.msra.mxu0 0.0
  %3856 = vmatprep.subr.mxu0 0.0
  %3857 = vmatpush1.msra.mxu0 0.0
  %3858 = vmatprep.subr.mxu0 0.0
  %3859 = vmatpush1.msra.mxu0 0.0
  %3860 = vmatprep.subr.mxu0 0.0
  %3861 = vmatpush1.msra.mxu0 0.0
  %3862 = vmatprep.mubr.f32.mxu0 0.0
  %3863 = vmatmul.mubr.f32.gmra.mrb[0].mxu0 %v3787
  %v3864 = vpop.f32.mrb[0].mxu0
  %v3865 = vadd.f32 %v3782, %v3864
  %v3866 = vpop.f32.mrb[0].mxu0
  %3867 = vmatprep.mubr.f32.mxu0 0.0
  %3868 = vmatmul.mubr.f32.gmra.mrb[0].mxu0 %v3790
  %v3869 = vpop.f32.mrb[0].mxu0
  %v3870 = vadd.f32 %v3783, %v3869
  %v3871 = vpop.f32.mrb[0].mxu0
  %3872 = vmatprep.mubr.f32.mxu0 0.0
  %3873 = vmatmul.mubr.f32.gmra.mrb[0].mxu0 %v3793
  %v3874 = vpop.f32.mrb[0].mxu0
  %v3875 = vadd.f32 %v3784, %v3874
  %v3876 = vpop.f32.mrb[0].mxu0
  %3877 = vmatprep.mubr.f32.mxu0 0.0
  %3878 = vmatmul.mubr.f32.gmra.mrb[0].mxu0 %v3796
  %v3879 = vpop.f32.mrb[0].mxu0
  %v3880 = vadd.f32 %v3785, %v3879
  %v3881 = vpop.f32.mrb[0].mxu0
  %3882 = vdwg.mxu0
  %s3883 = scalar_lea.vmem %s7, 6
  %v3884 = vld [vmem:[%s3883] sm:$0x1]
  %s3885 = scalar_lea.vmem %s8, 6
  %v3886 = vld [vmem:[%s3885] sm:$0x1]
  %v3887 = vsel %vm241, %v3865, 0.0
  %v3888 = vsel %vm241, %v3870, 0.0
  %v3889 = vadd.f32 %v3887, %v3888
  %v3890 = vsel %vm241, %v3875, 0.0
  %v3891 = vadd.f32 %v3889, %v3890
  %v3892 = vsel %vm241, %v3880, 0.0
  %v3893 = vadd.f32 %v3891, %v3892
  %v3894 = vrot.slane %v3893, 4
  %v3895 = vadd.f32 %v3893, %v3894
  %v3896 = vrot.slane %v3895, 2
  %v3897 = vadd.f32 %v3895, %v3896
  %v3898 = vrot.slane %v3897, 1
  %v3899 = vadd.f32 %v3897, %v3898
  %v3900 = vmul.f32 %v3899, %v502
  %v3901 = vsub.f32 %v3865, %v3900
  %v3902 = vsub.f32 %v3870, %v3900
  %v3903 = vsub.f32 %v3875, %v3900
  %v3904 = vsub.f32 %v3880, %v3900
  %v3905 = vmul.f32 %v3901, %v3901
  %v3906 = vmul.f32 %v3902, %v3902
  %v3907 = vmul.f32 %v3903, %v3903
  %v3908 = vmul.f32 %v3904, %v3904
  %v3909 = vsel %vm241, %v3905, 0.0
  %v3910 = vsel %vm241, %v3906, 0.0
  %v3911 = vadd.f32 %v3909, %v3910
  %v3912 = vsel %vm241, %v3907, 0.0
  %v3913 = vadd.f32 %v3911, %v3912
  %v3914 = vsel %vm241, %v3908, 0.0
  %v3915 = vadd.f32 %v3913, %v3914
  %v3916 = vrot.slane %v3915, 4
  %v3917 = vadd.f32 %v3915, %v3916
  %v3918 = vrot.slane %v3917, 2
  %v3919 = vadd.f32 %v3917, %v3918
  %v3920 = vrot.slane %v3919, 1
  %v3921 = vadd.f32 %v3919, %v3920
  %v3922 = vmul.f32 %v3921, %v502
  %v3923 = vadd.f32 %v3922, 1e-05
  %v3924 = vrsqrt.pop %v3923
  %v3925 = vmul.f32 %v3924, %v3884
  %v3926 = vlaneseq
  %v3927 = vshrl.u32 %v3926, 7
  %v3928 = vsub.s32 0, %v3927
  %v3929 = vrot.slane %v3925, %v3928
  %v3930 = vmul.f32 %v3901, %v3929
  %v3931 = vmul.f32 %v3902, %v3929
  %v3932 = vmul.f32 %v3903, %v3929
  %v3933 = vmul.f32 %v3904, %v3929
  %v3935 = vlaneseq
  %v3936 = vshrl.u32 %v3935, 7
  %v3937 = vsub.s32 0, %v3936
  %v3938 = vrot.slane %v3886, %v3937
  %v3940 = vadd.f32 %v3930, %v3938
  %v3941 = vadd.f32 %v3931, %v3938
  %v3942 = vadd.f32 %v3932, %v3938
  %v3943 = vadd.f32 %v3933, %v3938
  %v3944 = vmax.f32 %v3940, 0.0
  %v3945 = vmax.f32 %v3941, 0.0
  %v3946 = vmax.f32 %v3942, 0.0
  %v3947 = vmax.f32 %v3943, 0.0
  %s3948 = scalar_lea.vmem %s6, 224
  %v3949 = vld [vmem:[%s3948] sm:$0xff]
  %v3950 = vld [vmem:[%s3948 + $0x8] sm:$0xff]
  %v3951 = vld [vmem:[%s3948 + $0x10] sm:$0xff]
  %v3952 = vld [vmem:[%s3948 + $0x18] sm:$0xff]
  %v3954 = vsel %vm241, %v3944, 0
  %v3957 = vsel %vm241, %v3945, 0
  %v3960 = vsel %vm241, %v3946, 0
  %v3963 = vsel %vm241, %v3947, 0
  %3965 = vmatprep.subr.mxu0 0.0
  %3966 = vmatpush1.msra.mxu0 %v3949
  %3967 = vmatprep.subr.mxu0 0.0
  %3968 = vmatpush1.msra.mxu0 %v3950
  %3969 = vmatprep.subr.mxu0 0.0
  %3970 = vmatpush1.msra.mxu0 %v3951
  %3971 = vmatprep.subr.mxu0 0.0
  %3972 = vmatpush1.msra.mxu0 %v3952
  %3973 = vmatprep.subr.mxu0 0.0
  %3974 = vmatpush1.msra.mxu0 0.0
  %3975 = vmatprep.subr.mxu0 0.0
  %3976 = vmatpush1.msra.mxu0 0.0
  %3977 = vmatprep.subr.mxu0 0.0
  %3978 = vmatpush1.msra.mxu0 0.0
  %3979 = vmatprep.subr.mxu0 0.0
  %3980 = vmatpush1.msra.mxu0 0.0
  %3981 = vmatprep.subr.mxu0 0.0
  %3982 = vmatpush1.msra.mxu0 0.0
  %3983 = vmatprep.subr.mxu0 0.0
  %3984 = vmatpush1.msra.mxu0 0.0
  %3985 = vmatprep.subr.mxu0 0.0
  %3986 = vmatpush1.msra.mxu0 0.0
  %3987 = vmatprep.subr.mxu0 0.0
  %3988 = vmatpush1.msra.mxu0 0.0
  %3989 = vmatprep.subr.mxu0 0.0
  %3990 = vmatpush1.msra.mxu0 0.0
  %3991 = vmatprep.subr.mxu0 0.0
  %3992 = vmatpush1.msra.mxu0 0.0
  %3993 = vmatprep.subr.mxu0 0.0
  %3994 = vmatpush1.msra.mxu0 0.0
  %3995 = vmatprep.subr.mxu0 0.0
  %3996 = vmatpush1.msra.mxu0 0.0
  %3997 = vmatprep.subr.mxu0 0.0
  %3998 = vmatpush1.msra.mxu0 0.0
  %3999 = vmatprep.subr.mxu0 0.0
  %4000 = vmatpush1.msra.mxu0 0.0
  %4001 = vmatprep.subr.mxu0 0.0
  %4002 = vmatpush1.msra.mxu0 0.0
  %4003 = vmatprep.subr.mxu0 0.0
  %4004 = vmatpush1.msra.mxu0 0.0
  %4005 = vmatprep.subr.mxu0 0.0
  %4006 = vmatpush1.msra.mxu0 0.0
  %4007 = vmatprep.subr.mxu0 0.0
  %4008 = vmatpush1.msra.mxu0 0.0
  %4009 = vmatprep.subr.mxu0 0.0
  %4010 = vmatpush1.msra.mxu0 0.0
  %4011 = vmatprep.subr.mxu0 0.0
  %4012 = vmatpush1.msra.mxu0 0.0
  %4013 = vmatprep.subr.mxu0 0.0
  %4014 = vmatpush1.msra.mxu0 0.0
  %4015 = vmatprep.subr.mxu0 0.0
  %4016 = vmatpush1.msra.mxu0 0.0
  %4017 = vmatprep.subr.mxu0 0.0
  %4018 = vmatpush1.msra.mxu0 0.0
  %4019 = vmatprep.subr.mxu0 0.0
  %4020 = vmatpush1.msra.mxu0 0.0
  %4021 = vmatprep.subr.mxu0 0.0
  %4022 = vmatpush1.msra.mxu0 0.0
  %4023 = vmatprep.subr.mxu0 0.0
  %4024 = vmatpush1.msra.mxu0 0.0
  %4025 = vmatprep.subr.mxu0 0.0
  %4026 = vmatpush1.msra.mxu0 0.0
  %4027 = vmatprep.subr.mxu0 0.0
  %4028 = vmatpush1.msra.mxu0 0.0
  %4029 = vmatprep.mubr.f32.mxu0 0.0
  %4030 = vmatmul.mubr.f32.gmra.mrb[0].mxu0 %v3954
  %v4031 = vpop.f32.mrb[0].mxu0
  %v4032 = vadd.f32 0.0, %v4031
  %v4033 = vpop.f32.mrb[0].mxu0
  %4034 = vmatprep.mubr.f32.mxu0 0.0
  %4035 = vmatmul.mubr.f32.gmra.mrb[0].mxu0 %v3957
  %v4036 = vpop.f32.mrb[0].mxu0
  %v4037 = vadd.f32 0.0, %v4036
  %v4038 = vpop.f32.mrb[0].mxu0
  %4039 = vmatprep.mubr.f32.mxu0 0.0
  %4040 = vmatmul.mubr.f32.gmra.mrb[0].mxu0 %v3960
  %v4041 = vpop.f32.mrb[0].mxu0
  %v4042 = vadd.f32 0.0, %v4041
  %v4043 = vpop.f32.mrb[0].mxu0
  %4044 = vmatprep.mubr.f32.mxu0 0.0
  %4045 = vmatmul.mubr.f32.gmra.mrb[0].mxu0 %v3963
  %v4046 = vpop.f32.mrb[0].mxu0
  %v4047 = vadd.f32 0.0, %v4046
  %v4048 = vpop.f32.mrb[0].mxu0
  %4049 = vdwg.mxu0
  %4054 = vrot.lane.b32.xlu0 %v4032, 63
  %v4055 = vpop.permute.xlu0 %4054
  %4056 = vrot.lane.b32.xlu0 %v4037, 63
  %v4057 = vpop.permute.xlu0 %4056
  %4058 = vrot.lane.b32.xlu0 %v4042, 63
  %v4059 = vpop.permute.xlu0 %4058
  %4060 = vrot.lane.b32.xlu0 %v4047, 63
  %v4061 = vpop.permute.xlu0 %4060
  %4066 = vxpose.xlu0.b32.start [1/16] %v4055, 128
  %4067 = vxpose.xlu0.b32.cont [2/16] %v4057, 128
  %4068 = vxpose.xlu0.b32.cont [3/16] %v4059, 128
  %4069 = vxpose.xlu0.b32.cont [4/16] %v4061, 128
  %4070 = vxpose.xlu0.b32.cont [5/16] 0.0, 128
  %4071 = vxpose.xlu0.b32.cont [6/16] 0.0, 128
  %4072 = vxpose.xlu0.b32.cont [7/16] 0.0, 128
  %4073 = vxpose.xlu0.b32.cont [8/16] 0.0, 128
  %4074 = vxpose.xlu0.b32.cont [9/16] 0.0, 128
  %4075 = vxpose.xlu0.b32.cont [10/16] 0.0, 128
  %4076 = vxpose.xlu0.b32.cont [11/16] 0.0, 128
  %4077 = vxpose.xlu0.b32.cont [12/16] 0.0, 128
  %4078 = vxpose.xlu0.b32.cont [13/16] 0.0, 128
  %4079 = vxpose.xlu0.b32.cont [14/16] 0.0, 128
  %4080 = vxpose.xlu0.b32.cont [15/16] 0.0, 128
  %4081 = vxpose.xlu0.b32.end [16/16] 0.0, 128
  %v4082 = vpop.trf.xlu0
  %v4083 = vpop.trf.xlu0
  %v4084 = vpop.trf.xlu0
  %v4085 = vpop.trf.xlu0
  %v4086 = vpop.trf.xlu0
  %v4087 = vpop.trf.xlu0
  %v4088 = vpop.trf.xlu0
  %v4089 = vpop.trf.xlu0
  %v4090 = vpop.trf.xlu0
  %v4091 = vpop.trf.xlu0
  %v4092 = vpop.trf.xlu0
  %v4093 = vpop.trf.xlu0
  %v4094 = vpop.trf.xlu0
  %v4095 = vpop.trf.xlu0
  %v4096 = vpop.trf.xlu0
  %v4097 = vpop.trf.xlu0
  %4098 = vset.pattern.permute.xlu0 64
  %4099 = vperm.xlu0 %4098, %v4032
  %v4100 = vpop.permute.xlu0 %4099
  %4102 = vset.pattern.permute.xlu0 64
  %4103 = vperm.xlu0 %4102, %v4037
  %v4104 = vpop.permute.xlu0 %4103
  %4106 = vset.pattern.permute.xlu0 64
  %4107 = vperm.xlu0 %4106, %v4042
  %v4108 = vpop.permute.xlu0 %4107
  %4110 = vset.pattern.permute.xlu0 64
  %4111 = vperm.xlu0 %4110, %v4047
  %v4112 = vpop.permute.xlu0 %4111
  %v4114 = vlaneseq
  %v4115 = vshrl.u32 %v4114, 7
  %v4116 = vsub.s32 0, %v4115
  %v4117 = vrot.slane %v4082, %v4116
  %v4118 = vadd.f32 %v4100, %v4117
  %v4119 = vadd.f32 %v4104, %v4117
  %v4120 = vadd.f32 %v4108, %v4117
  %v4121 = vadd.f32 %v4112, %v4117
  %vm4122 = vcmp.gt.f32.partialorder %v4118, 0.0
  %vm4123 = vcmp.gt.f32.partialorder %v4119, 0.0
  %vm4124 = vcmp.gt.f32.partialorder %v4120, 0.0
  %vm4125 = vcmp.gt.f32.partialorder %v4121, 0.0
  %v4126 = vmul.f32 %v4118, 0.2
  %v4127 = vmul.f32 %v4119, 0.2
  %v4128 = vmul.f32 %v4120, 0.2
  %v4129 = vmul.f32 %v4121, 0.2
  %v4130 = vsel %vm4122, %v4118, %v4126
  %v4131 = vsel %vm4123, %v4119, %v4127
  %v4132 = vsel %vm4124, %v4120, %v4128
  %v4133 = vsel %vm4125, %v4121, %v4129
  %v4134 = vadd.f32 %v4130, %v38
  %v4135 = vadd.f32 %v4131, %v39
  %v4136 = vadd.f32 %v4132, %v40
  %v4137 = vadd.f32 %v4133, %v41
  %v4138 = vsel %vm241, %v4134, -inf
  %4139 = vmax.xlane.f32.xlu0 %v4138
  %v4140 = vpop.xlane.xlu0 %4139
  %v4141 = vsel %vm241, %v4135, -inf
  %4142 = vmax.xlane.f32.xlu0 %v4141
  %v4143 = vpop.xlane.xlu0 %4142
  %v4144 = vsel %vm241, %v4136, -inf
  %4145 = vmax.xlane.f32.xlu0 %v4144
  %v4146 = vpop.xlane.xlu0 %4145
  %v4147 = vsel %vm241, %v4137, -inf
  %4148 = vmax.xlane.f32.xlu0 %v4147
  %v4149 = vpop.xlane.xlu0 %4148
  %v4150 = vsub.f32 %v4134, %v4140
  %v4151 = vsub.f32 %v4135, %v4143
  %v4152 = vsub.f32 %v4136, %v4146
  %v4153 = vsub.f32 %v4137, %v4149
  %v4154 = vmul.f32 %v4150, 1.442695
  %v4155 = vpow.pop %v4154
  %v4156 = vmul.f32 %v4151, 1.442695
  %v4157 = vpow.pop %v4156
  %v4158 = vmul.f32 %v4152, 1.442695
  %v4159 = vpow.pop %v4158
  %v4160 = vmul.f32 %v4153, 1.442695
  %v4161 = vpow.pop %v4160
  %v4162 = vsel %vm241, %v4155, 0.0
  %4163 = vadd.xlane.f32.xlu0 %v4162
  %v4164 = vpop.xlane.xlu0 %4163
  %v4165 = vsel %vm241, %v4157, 0.0
  %4166 = vadd.xlane.f32.xlu0 %v4165
  %v4167 = vpop.xlane.xlu0 %4166
  %v4168 = vsel %vm241, %v4159, 0.0
  %4169 = vadd.xlane.f32.xlu0 %v4168
  %v4170 = vpop.xlane.xlu0 %4169
  %v4171 = vsel %vm241, %v4161, 0.0
  %4172 = vadd.xlane.f32.xlu0 %v4171
  %v4173 = vpop.xlane.xlu0 %4172
  %v4174 = vrcp.pop %v4164
  %v4175 = vrcp.pop %v4167
  %v4176 = vrcp.pop %v4170
  %v4177 = vrcp.pop %v4173
  %v4178 = vmul.f32 %v4155, %v4174
  %v4179 = vmul.f32 %v4157, %v4175
  %v4180 = vmul.f32 %v4159, %v4176
  %v4181 = vmul.f32 %v4161, %v4177
  %4182 = vrot.lane.b32.xlu0 %v4032, 127
  %v4183 = vpop.permute.xlu0 %4182
  %4184 = vrot.lane.b32.xlu0 %v4037, 127
  %v4185 = vpop.permute.xlu0 %4184
  %4186 = vrot.lane.b32.xlu0 %v4042, 127
  %v4187 = vpop.permute.xlu0 %4186
  %4188 = vrot.lane.b32.xlu0 %v4047, 127
  %v4189 = vpop.permute.xlu0 %4188
  %v4194 = vadd.f32 %v4032, %v4183
  %v4195 = vadd.f32 %v4037, %v4185
  %v4196 = vadd.f32 %v4042, %v4187
  %v4197 = vadd.f32 %v4047, %v4189
  %vm4198 = vcmp.gt.f32.partialorder %v4194, 0.0
  %vm4199 = vcmp.gt.f32.partialorder %v4195, 0.0
  %vm4200 = vcmp.gt.f32.partialorder %v4196, 0.0
  %vm4201 = vcmp.gt.f32.partialorder %v4197, 0.0
  %v4202 = vmul.f32 %v4194, 0.2
  %v4203 = vmul.f32 %v4195, 0.2
  %v4204 = vmul.f32 %v4196, 0.2
  %v4205 = vmul.f32 %v4197, 0.2
  %v4206 = vsel %vm4198, %v4194, %v4202
  %v4207 = vsel %vm4199, %v4195, %v4203
  %v4208 = vsel %vm4200, %v4196, %v4204
  %v4209 = vsel %vm4201, %v4197, %v4205
  %v4210 = vadd.f32 %v4206, %v319
  %v4211 = vadd.f32 %v4207, %v321
  %v4212 = vadd.f32 %v4208, %v323
  %v4213 = vadd.f32 %v4209, %v325
  %v4214 = vsub.f32 %v4210, %v4140
  %v4215 = vsub.f32 %v4211, %v4143
  %v4216 = vsub.f32 %v4212, %v4146
  %v4217 = vsub.f32 %v4213, %v4149
  %v4218 = vmul.f32 %v4214, 1.442695
  %v4219 = vpow.pop %v4218
  %v4220 = vmul.f32 %v4215, 1.442695
  %v4221 = vpow.pop %v4220
  %v4222 = vmul.f32 %v4216, 1.442695
  %v4223 = vpow.pop %v4222
  %v4224 = vmul.f32 %v4217, 1.442695
  %v4225 = vpow.pop %v4224
  %v4226 = vmul.f32 %v4219, %v4174
  %v4227 = vmul.f32 %v4221, %v4175
  %v4228 = vmul.f32 %v4223, %v4176
  %v4229 = vmul.f32 %v4225, %v4177
  %4230 = vrot.lane.b32.xlu0 %v4032, 96
  %v4231 = vpop.permute.xlu0 %4230
  %4232 = vrot.lane.b32.xlu0 %v4037, 96
  %v4233 = vpop.permute.xlu0 %4232
  %4234 = vrot.lane.b32.xlu0 %v4042, 96
  %v4235 = vpop.permute.xlu0 %4234
  %4236 = vrot.lane.b32.xlu0 %v4047, 96
  %v4237 = vpop.permute.xlu0 %4236
  %v4242 = vsub.f32 %v4032, %v4231
  %v4243 = vsub.f32 %v4037, %v4233
  %v4244 = vsub.f32 %v4042, %v4235
  %v4245 = vsub.f32 %v4047, %v4237
  %4247 = vset.pattern.permute.xlu0 64
  %4248 = vperm.xlu0 %4247, %v4226
  %v4249 = vpop.permute.xlu0 %4248
  %4252 = vset.pattern.permute.xlu0 64
  %4253 = vperm.xlu0 %4252, %v4227
  %v4254 = vpop.permute.xlu0 %4253
  %4257 = vset.pattern.permute.xlu0 64
  %4258 = vperm.xlu0 %4257, %v4228
  %v4259 = vpop.permute.xlu0 %4258
  %4262 = vset.pattern.permute.xlu0 64
  %4263 = vperm.xlu0 %4262, %v4229
  %v4264 = vpop.permute.xlu0 %4263
  %v4266 = vmul.f32 %v4249, %v4242
  %v4267 = vmul.f32 %v4254, %v4243
  %v4268 = vmul.f32 %v4259, %v4244
  %v4269 = vmul.f32 %v4264, %v4245
  %v4271 = vsel %vm241, %v4178, 0
  %v4274 = vsel %vm241, %v4179, 0
  %v4277 = vsel %vm241, %v4180, 0
  %v4280 = vsel %vm241, %v4181, 0
  %4282 = vmatprep.subr.mxu0 0.0
  %4283 = vmatpush1.msra.mxu0 %v4231
  %4284 = vmatprep.subr.mxu0 0.0
  %4285 = vmatpush1.msra.mxu0 %v4233
  %4286 = vmatprep.subr.mxu0 0.0
  %4287 = vmatpush1.msra.mxu0 %v4235
  %4288 = vmatprep.subr.mxu0 0.0
  %4289 = vmatpush1.msra.mxu0 %v4237
  %4290 = vmatprep.subr.mxu0 0.0
  %4291 = vmatpush1.msra.mxu0 0.0
  %4292 = vmatprep.subr.mxu0 0.0
  %4293 = vmatpush1.msra.mxu0 0.0
  %4294 = vmatprep.subr.mxu0 0.0
  %4295 = vmatpush1.msra.mxu0 0.0
  %4296 = vmatprep.subr.mxu0 0.0
  %4297 = vmatpush1.msra.mxu0 0.0
  %4298 = vmatprep.subr.mxu0 0.0
  %4299 = vmatpush1.msra.mxu0 0.0
  %4300 = vmatprep.subr.mxu0 0.0
  %4301 = vmatpush1.msra.mxu0 0.0
  %4302 = vmatprep.subr.mxu0 0.0
  %4303 = vmatpush1.msra.mxu0 0.0
  %4304 = vmatprep.subr.mxu0 0.0
  %4305 = vmatpush1.msra.mxu0 0.0
  %4306 = vmatprep.subr.mxu0 0.0
  %4307 = vmatpush1.msra.mxu0 0.0
  %4308 = vmatprep.subr.mxu0 0.0
  %4309 = vmatpush1.msra.mxu0 0.0
  %4310 = vmatprep.subr.mxu0 0.0
  %4311 = vmatpush1.msra.mxu0 0.0
  %4312 = vmatprep.subr.mxu0 0.0
  %4313 = vmatpush1.msra.mxu0 0.0
  %4314 = vmatprep.subr.mxu0 0.0
  %4315 = vmatpush1.msra.mxu0 0.0
  %4316 = vmatprep.subr.mxu0 0.0
  %4317 = vmatpush1.msra.mxu0 0.0
  %4318 = vmatprep.subr.mxu0 0.0
  %4319 = vmatpush1.msra.mxu0 0.0
  %4320 = vmatprep.subr.mxu0 0.0
  %4321 = vmatpush1.msra.mxu0 0.0
  %4322 = vmatprep.subr.mxu0 0.0
  %4323 = vmatpush1.msra.mxu0 0.0
  %4324 = vmatprep.subr.mxu0 0.0
  %4325 = vmatpush1.msra.mxu0 0.0
  %4326 = vmatprep.subr.mxu0 0.0
  %4327 = vmatpush1.msra.mxu0 0.0
  %4328 = vmatprep.subr.mxu0 0.0
  %4329 = vmatpush1.msra.mxu0 0.0
  %4330 = vmatprep.subr.mxu0 0.0
  %4331 = vmatpush1.msra.mxu0 0.0
  %4332 = vmatprep.subr.mxu0 0.0
  %4333 = vmatpush1.msra.mxu0 0.0
  %4334 = vmatprep.subr.mxu0 0.0
  %4335 = vmatpush1.msra.mxu0 0.0
  %4336 = vmatprep.subr.mxu0 0.0
  %4337 = vmatpush1.msra.mxu0 0.0
  %4338 = vmatprep.subr.mxu0 0.0
  %4339 = vmatpush1.msra.mxu0 0.0
  %4340 = vmatprep.subr.mxu0 0.0
  %4341 = vmatpush1.msra.mxu0 0.0
  %4342 = vmatprep.subr.mxu0 0.0
  %4343 = vmatpush1.msra.mxu0 0.0
  %4344 = vmatprep.subr.mxu0 0.0
  %4345 = vmatpush1.msra.mxu0 0.0
  %4346 = vmatprep.mubr.f32.mxu0 0.0
  %4347 = vmatmul.mubr.f32.gmra.mrb[0].mxu0 %v4271
  %v4348 = vpop.f32.mrb[0].mxu0
  %v4349 = vadd.f32 %v4266, %v4348
  %v4350 = vpop.f32.mrb[0].mxu0
  %4351 = vmatprep.mubr.f32.mxu0 0.0
  %4352 = vmatmul.mubr.f32.gmra.mrb[0].mxu0 %v4274
  %v4353 = vpop.f32.mrb[0].mxu0
  %v4354 = vadd.f32 %v4267, %v4353
  %v4355 = vpop.f32.mrb[0].mxu0
  %4356 = vmatprep.mubr.f32.mxu0 0.0
  %4357 = vmatmul.mubr.f32.gmra.mrb[0].mxu0 %v4277
  %v4358 = vpop.f32.mrb[0].mxu0
  %v4359 = vadd.f32 %v4268, %v4358
  %v4360 = vpop.f32.mrb[0].mxu0
  %4361 = vmatprep.mubr.f32.mxu0 0.0
  %4362 = vmatmul.mubr.f32.gmra.mrb[0].mxu0 %v4280
  %v4363 = vpop.f32.mrb[0].mxu0
  %v4364 = vadd.f32 %v4269, %v4363
  %v4365 = vpop.f32.mrb[0].mxu0
  %4366 = vdwg.mxu0
  %s4367 = scalar_lea.vmem %s7, 7
  %v4368 = vld [vmem:[%s4367] sm:$0x1]
  %s4369 = scalar_lea.vmem %s8, 7
  %v4370 = vld [vmem:[%s4369] sm:$0x1]
  %v4371 = vsel %vm241, %v4349, 0.0
  %v4372 = vsel %vm241, %v4354, 0.0
  %v4373 = vadd.f32 %v4371, %v4372
  %v4374 = vsel %vm241, %v4359, 0.0
  %v4375 = vadd.f32 %v4373, %v4374
  %v4376 = vsel %vm241, %v4364, 0.0
  %v4377 = vadd.f32 %v4375, %v4376
  %v4378 = vrot.slane %v4377, 4
  %v4379 = vadd.f32 %v4377, %v4378
  %v4380 = vrot.slane %v4379, 2
  %v4381 = vadd.f32 %v4379, %v4380
  %v4382 = vrot.slane %v4381, 1
  %v4383 = vadd.f32 %v4381, %v4382
  %v4384 = vmul.f32 %v4383, %v502
  %v4385 = vsub.f32 %v4349, %v4384
  %v4386 = vsub.f32 %v4354, %v4384
  %v4387 = vsub.f32 %v4359, %v4384
  %v4388 = vsub.f32 %v4364, %v4384
  %v4389 = vmul.f32 %v4385, %v4385
  %v4390 = vmul.f32 %v4386, %v4386
  %v4391 = vmul.f32 %v4387, %v4387
  %v4392 = vmul.f32 %v4388, %v4388
  %v4393 = vsel %vm241, %v4389, 0.0
  %v4394 = vsel %vm241, %v4390, 0.0
  %v4395 = vadd.f32 %v4393, %v4394
  %v4396 = vsel %vm241, %v4391, 0.0
  %v4397 = vadd.f32 %v4395, %v4396
  %v4398 = vsel %vm241, %v4392, 0.0
  %v4399 = vadd.f32 %v4397, %v4398
  %v4400 = vrot.slane %v4399, 4
  %v4401 = vadd.f32 %v4399, %v4400
  %v4402 = vrot.slane %v4401, 2
  %v4403 = vadd.f32 %v4401, %v4402
  %v4404 = vrot.slane %v4403, 1
  %v4405 = vadd.f32 %v4403, %v4404
  %v4406 = vmul.f32 %v4405, %v502
  %v4407 = vadd.f32 %v4406, 1e-05
  %v4408 = vrsqrt.pop %v4407
  %v4409 = vmul.f32 %v4408, %v4368
  %v4410 = vlaneseq
  %v4411 = vshrl.u32 %v4410, 7
  %v4412 = vsub.s32 0, %v4411
  %v4413 = vrot.slane %v4409, %v4412
  %v4414 = vmul.f32 %v4385, %v4413
  %v4415 = vmul.f32 %v4386, %v4413
  %v4416 = vmul.f32 %v4387, %v4413
  %v4417 = vmul.f32 %v4388, %v4413
  %v4419 = vlaneseq
  %v4420 = vshrl.u32 %v4419, 7
  %v4421 = vsub.s32 0, %v4420
  %v4422 = vrot.slane %v4370, %v4421
  %v4424 = vadd.f32 %v4414, %v4422
  %v4425 = vadd.f32 %v4415, %v4422
  %v4426 = vadd.f32 %v4416, %v4422
  %v4427 = vadd.f32 %v4417, %v4422
  %v4428 = vmax.f32 %v4424, 0.0
  %v4429 = vmax.f32 %v4425, 0.0
  %v4430 = vmax.f32 %v4426, 0.0
  %v4431 = vmax.f32 %v4427, 0.0
  %v4432 = vadd.f32 %v4428, %v3460
  %v4433 = vadd.f32 %v4429, %v3461
  %v4434 = vadd.f32 %v4430, %v3462
  %v4435 = vadd.f32 %v4431, %v3463
  %v4436 = vld [vmem:[%s9] sm:$0xff]
  %v4437 = vld [vmem:[%s9 + $0x8] sm:$0xff]
  %v4438 = vld [vmem:[%s9 + $0x10] sm:$0xff]
  %v4439 = vld [vmem:[%s9 + $0x18] sm:$0xff]
  %v4440 = vld [vmem:[%s10] sm:$0x1]
  %v4442 = vsel %vm241, %v4432, 0
  %v4445 = vsel %vm241, %v4433, 0
  %v4448 = vsel %vm241, %v4434, 0
  %v4451 = vsel %vm241, %v4435, 0
  %4453 = vmatprep.subr.mxu0 0.0
  %4454 = vmatpush1.msra.mxu0 %v4436
  %4455 = vmatprep.subr.mxu0 0.0
  %4456 = vmatpush1.msra.mxu0 %v4437
  %4457 = vmatprep.subr.mxu0 0.0
  %4458 = vmatpush1.msra.mxu0 %v4438
  %4459 = vmatprep.subr.mxu0 0.0
  %4460 = vmatpush1.msra.mxu0 %v4439
  %4461 = vmatprep.subr.mxu0 0.0
  %4462 = vmatpush1.msra.mxu0 0.0
  %4463 = vmatprep.subr.mxu0 0.0
  %4464 = vmatpush1.msra.mxu0 0.0
  %4465 = vmatprep.subr.mxu0 0.0
  %4466 = vmatpush1.msra.mxu0 0.0
  %4467 = vmatprep.subr.mxu0 0.0
  %4468 = vmatpush1.msra.mxu0 0.0
  %4469 = vmatprep.subr.mxu0 0.0
  %4470 = vmatpush1.msra.mxu0 0.0
  %4471 = vmatprep.subr.mxu0 0.0
  %4472 = vmatpush1.msra.mxu0 0.0
  %4473 = vmatprep.subr.mxu0 0.0
  %4474 = vmatpush1.msra.mxu0 0.0
  %4475 = vmatprep.subr.mxu0 0.0
  %4476 = vmatpush1.msra.mxu0 0.0
  %4477 = vmatprep.subr.mxu0 0.0
  %4478 = vmatpush1.msra.mxu0 0.0
  %4479 = vmatprep.subr.mxu0 0.0
  %4480 = vmatpush1.msra.mxu0 0.0
  %4481 = vmatprep.subr.mxu0 0.0
  %4482 = vmatpush1.msra.mxu0 0.0
  %4483 = vmatprep.subr.mxu0 0.0
  %4484 = vmatpush1.msra.mxu0 0.0
  %4485 = vmatprep.subr.mxu0 0.0
  %4486 = vmatpush1.msra.mxu0 0.0
  %4487 = vmatprep.subr.mxu0 0.0
  %4488 = vmatpush1.msra.mxu0 0.0
  %4489 = vmatprep.subr.mxu0 0.0
  %4490 = vmatpush1.msra.mxu0 0.0
  %4491 = vmatprep.subr.mxu0 0.0
  %4492 = vmatpush1.msra.mxu0 0.0
  %4493 = vmatprep.subr.mxu0 0.0
  %4494 = vmatpush1.msra.mxu0 0.0
  %4495 = vmatprep.subr.mxu0 0.0
  %4496 = vmatpush1.msra.mxu0 0.0
  %4497 = vmatprep.subr.mxu0 0.0
  %4498 = vmatpush1.msra.mxu0 0.0
  %4499 = vmatprep.subr.mxu0 0.0
  %4500 = vmatpush1.msra.mxu0 0.0
  %4501 = vmatprep.subr.mxu0 0.0
  %4502 = vmatpush1.msra.mxu0 0.0
  %4503 = vmatprep.subr.mxu0 0.0
  %4504 = vmatpush1.msra.mxu0 0.0
  %4505 = vmatprep.subr.mxu0 0.0
  %4506 = vmatpush1.msra.mxu0 0.0
  %4507 = vmatprep.subr.mxu0 0.0
  %4508 = vmatpush1.msra.mxu0 0.0
  %4509 = vmatprep.subr.mxu0 0.0
  %4510 = vmatpush1.msra.mxu0 0.0
  %4511 = vmatprep.subr.mxu0 0.0
  %4512 = vmatpush1.msra.mxu0 0.0
  %4513 = vmatprep.subr.mxu0 0.0
  %4514 = vmatpush1.msra.mxu0 0.0
  %4515 = vmatprep.subr.mxu0 0.0
  %4516 = vmatpush1.msra.mxu0 0.0
  %4517 = vmatprep.mubr.f32.mxu0 0.0
  %4518 = vmatmul.mubr.f32.gmra.mrb[0].mxu0 %v4442
  %v4519 = vpop.f32.mrb[0].mxu0
  %v4520 = vadd.f32 0.0, %v4519
  %v4521 = vpop.f32.mrb[0].mxu0
  %4522 = vmatprep.mubr.f32.mxu0 0.0
  %4523 = vmatmul.mubr.f32.gmra.mrb[0].mxu0 %v4445
  %v4524 = vpop.f32.mrb[0].mxu0
  %v4525 = vadd.f32 0.0, %v4524
  %v4526 = vpop.f32.mrb[0].mxu0
  %4527 = vmatprep.mubr.f32.mxu0 0.0
  %4528 = vmatmul.mubr.f32.gmra.mrb[0].mxu0 %v4448
  %v4529 = vpop.f32.mrb[0].mxu0
  %v4530 = vadd.f32 0.0, %v4529
  %v4531 = vpop.f32.mrb[0].mxu0
  %4532 = vmatprep.mubr.f32.mxu0 0.0
  %4533 = vmatmul.mubr.f32.gmra.mrb[0].mxu0 %v4451
  %v4534 = vpop.f32.mrb[0].mxu0
  %v4535 = vadd.f32 0.0, %v4534
  %v4536 = vpop.f32.mrb[0].mxu0
  %4537 = vdwg.mxu0
  %4542 = vrot.lane.b32.xlu0 %v4520, 111
  %v4543 = vpop.permute.xlu0 %4542
  %4544 = vrot.lane.b32.xlu0 %v4525, 111
  %v4545 = vpop.permute.xlu0 %4544
  %4546 = vrot.lane.b32.xlu0 %v4530, 111
  %v4547 = vpop.permute.xlu0 %4546
  %4548 = vrot.lane.b32.xlu0 %v4535, 111
  %v4549 = vpop.permute.xlu0 %4548
  %4554 = vxpose.xlu0.b32.start [1/16] %v4543, 128
  %4555 = vxpose.xlu0.b32.cont [2/16] %v4545, 128
  %4556 = vxpose.xlu0.b32.cont [3/16] %v4547, 128
  %4557 = vxpose.xlu0.b32.cont [4/16] %v4549, 128
  %4558 = vxpose.xlu0.b32.cont [5/16] 0.0, 128
  %4559 = vxpose.xlu0.b32.cont [6/16] 0.0, 128
  %4560 = vxpose.xlu0.b32.cont [7/16] 0.0, 128
  %4561 = vxpose.xlu0.b32.cont [8/16] 0.0, 128
  %4562 = vxpose.xlu0.b32.cont [9/16] 0.0, 128
  %4563 = vxpose.xlu0.b32.cont [10/16] 0.0, 128
  %4564 = vxpose.xlu0.b32.cont [11/16] 0.0, 128
  %4565 = vxpose.xlu0.b32.cont [12/16] 0.0, 128
  %4566 = vxpose.xlu0.b32.cont [13/16] 0.0, 128
  %4567 = vxpose.xlu0.b32.cont [14/16] 0.0, 128
  %4568 = vxpose.xlu0.b32.cont [15/16] 0.0, 128
  %4569 = vxpose.xlu0.b32.end [16/16] 0.0, 128
  %v4570 = vpop.trf.xlu0
  %v4571 = vpop.trf.xlu0
  %v4572 = vpop.trf.xlu0
  %v4573 = vpop.trf.xlu0
  %v4574 = vpop.trf.xlu0
  %v4575 = vpop.trf.xlu0
  %v4576 = vpop.trf.xlu0
  %v4577 = vpop.trf.xlu0
  %v4578 = vpop.trf.xlu0
  %v4579 = vpop.trf.xlu0
  %v4580 = vpop.trf.xlu0
  %v4581 = vpop.trf.xlu0
  %v4582 = vpop.trf.xlu0
  %v4583 = vpop.trf.xlu0
  %v4584 = vpop.trf.xlu0
  %v4585 = vpop.trf.xlu0
  %4586 = vset.pattern.permute.xlu0 16
  %4587 = vperm.xlu0 %4586, %v4520
  %v4588 = vpop.permute.xlu0 %4587
  %4590 = vset.pattern.permute.xlu0 16
  %4591 = vperm.xlu0 %4590, %v4525
  %v4592 = vpop.permute.xlu0 %4591
  %4594 = vset.pattern.permute.xlu0 16
  %4595 = vperm.xlu0 %4594, %v4530
  %v4596 = vpop.permute.xlu0 %4595
  %4598 = vset.pattern.permute.xlu0 16
  %4599 = vperm.xlu0 %4598, %v4535
  %v4600 = vpop.permute.xlu0 %4599
  %v4602 = vlaneseq
  %v4603 = vshrl.u32 %v4602, 7
  %v4604 = vsub.s32 0, %v4603
  %v4605 = vrot.slane %v4570, %v4604
  %v4606 = vadd.f32 %v4588, %v4605
  %v4607 = vadd.f32 %v4592, %v4605
  %v4608 = vadd.f32 %v4596, %v4605
  %v4609 = vadd.f32 %v4600, %v4605
  %vm4610 = vcmp.gt.f32.partialorder %v4606, 0.0
  %vm4611 = vcmp.gt.f32.partialorder %v4607, 0.0
  %vm4612 = vcmp.gt.f32.partialorder %v4608, 0.0
  %vm4613 = vcmp.gt.f32.partialorder %v4609, 0.0
  %v4614 = vmul.f32 %v4606, 0.2
  %v4615 = vmul.f32 %v4607, 0.2
  %v4616 = vmul.f32 %v4608, 0.2
  %v4617 = vmul.f32 %v4609, 0.2
  %v4618 = vsel %vm4610, %v4606, %v4614
  %v4619 = vsel %vm4611, %v4607, %v4615
  %v4620 = vsel %vm4612, %v4608, %v4616
  %v4621 = vsel %vm4613, %v4609, %v4617
  %v4622 = vadd.f32 %v4618, %v38
  %v4623 = vadd.f32 %v4619, %v39
  %v4624 = vadd.f32 %v4620, %v40
  %v4625 = vadd.f32 %v4621, %v41
  %v4626 = vsel %vm241, %v4622, -inf
  %4627 = vmax.xlane.f32.xlu0 %v4626
  %v4628 = vpop.xlane.xlu0 %4627
  %v4629 = vsel %vm241, %v4623, -inf
  %4630 = vmax.xlane.f32.xlu0 %v4629
  %v4631 = vpop.xlane.xlu0 %4630
  %v4632 = vsel %vm241, %v4624, -inf
  %4633 = vmax.xlane.f32.xlu0 %v4632
  %v4634 = vpop.xlane.xlu0 %4633
  %v4635 = vsel %vm241, %v4625, -inf
  %4636 = vmax.xlane.f32.xlu0 %v4635
  %v4637 = vpop.xlane.xlu0 %4636
  %v4638 = vsub.f32 %v4622, %v4628
  %v4639 = vsub.f32 %v4623, %v4631
  %v4640 = vsub.f32 %v4624, %v4634
  %v4641 = vsub.f32 %v4625, %v4637
  %v4642 = vmul.f32 %v4638, 1.442695
  %v4643 = vpow.pop %v4642
  %v4644 = vmul.f32 %v4639, 1.442695
  %v4645 = vpow.pop %v4644
  %v4646 = vmul.f32 %v4640, 1.442695
  %v4647 = vpow.pop %v4646
  %v4648 = vmul.f32 %v4641, 1.442695
  %v4649 = vpow.pop %v4648
  %v4650 = vsel %vm241, %v4643, 0.0
  %4651 = vadd.xlane.f32.xlu0 %v4650
  %v4652 = vpop.xlane.xlu0 %4651
  %v4653 = vsel %vm241, %v4645, 0.0
  %4654 = vadd.xlane.f32.xlu0 %v4653
  %v4655 = vpop.xlane.xlu0 %4654
  %v4656 = vsel %vm241, %v4647, 0.0
  %4657 = vadd.xlane.f32.xlu0 %v4656
  %v4658 = vpop.xlane.xlu0 %4657
  %v4659 = vsel %vm241, %v4649, 0.0
  %4660 = vadd.xlane.f32.xlu0 %v4659
  %v4661 = vpop.xlane.xlu0 %4660
  %v4662 = vrcp.pop %v4652
  %v4663 = vrcp.pop %v4655
  %v4664 = vrcp.pop %v4658
  %v4665 = vrcp.pop %v4661
  %v4666 = vmul.f32 %v4643, %v4662
  %v4667 = vmul.f32 %v4645, %v4663
  %v4668 = vmul.f32 %v4647, %v4664
  %v4669 = vmul.f32 %v4649, %v4665
  %4670 = vrot.lane.b32.xlu0 %v4520, 127
  %v4671 = vpop.permute.xlu0 %4670
  %4672 = vrot.lane.b32.xlu0 %v4525, 127
  %v4673 = vpop.permute.xlu0 %4672
  %4674 = vrot.lane.b32.xlu0 %v4530, 127
  %v4675 = vpop.permute.xlu0 %4674
  %4676 = vrot.lane.b32.xlu0 %v4535, 127
  %v4677 = vpop.permute.xlu0 %4676
  %v4682 = vadd.f32 %v4520, %v4671
  %v4683 = vadd.f32 %v4525, %v4673
  %v4684 = vadd.f32 %v4530, %v4675
  %v4685 = vadd.f32 %v4535, %v4677
  %vm4686 = vcmp.gt.f32.partialorder %v4682, 0.0
  %vm4687 = vcmp.gt.f32.partialorder %v4683, 0.0
  %vm4688 = vcmp.gt.f32.partialorder %v4684, 0.0
  %vm4689 = vcmp.gt.f32.partialorder %v4685, 0.0
  %v4690 = vmul.f32 %v4682, 0.2
  %v4691 = vmul.f32 %v4683, 0.2
  %v4692 = vmul.f32 %v4684, 0.2
  %v4693 = vmul.f32 %v4685, 0.2
  %v4694 = vsel %vm4686, %v4682, %v4690
  %v4695 = vsel %vm4687, %v4683, %v4691
  %v4696 = vsel %vm4688, %v4684, %v4692
  %v4697 = vsel %vm4689, %v4685, %v4693
  %4698 = vrot.lane.b32.xlu0 %v42, 16
  %v4699 = vpop.permute.xlu0 %4698
  %4700 = vrot.lane.b32.xlu0 %v43, 16
  %v4701 = vpop.permute.xlu0 %4700
  %4702 = vrot.lane.b32.xlu0 %v44, 16
  %v4703 = vpop.permute.xlu0 %4702
  %4704 = vrot.lane.b32.xlu0 %v45, 16
  %v4705 = vpop.permute.xlu0 %4704
  %v4710 = vadd.f32 %v4694, %v4699
  %v4711 = vadd.f32 %v4695, %v4701
  %v4712 = vadd.f32 %v4696, %v4703
  %v4713 = vadd.f32 %v4697, %v4705
  %v4714 = vsub.f32 %v4710, %v4628
  %v4715 = vsub.f32 %v4711, %v4631
  %v4716 = vsub.f32 %v4712, %v4634
  %v4717 = vsub.f32 %v4713, %v4637
  %v4718 = vmul.f32 %v4714, 1.442695
  %v4719 = vpow.pop %v4718
  %v4720 = vmul.f32 %v4715, 1.442695
  %v4721 = vpow.pop %v4720
  %v4722 = vmul.f32 %v4716, 1.442695
  %v4723 = vpow.pop %v4722
  %v4724 = vmul.f32 %v4717, 1.442695
  %v4725 = vpow.pop %v4724
  %v4726 = vmul.f32 %v4719, %v4662
  %v4727 = vmul.f32 %v4721, %v4663
  %v4728 = vmul.f32 %v4723, %v4664
  %v4729 = vmul.f32 %v4725, %v4665
  %4730 = vrot.lane.b32.xlu0 %v4520, 120
  %v4731 = vpop.permute.xlu0 %4730
  %4732 = vrot.lane.b32.xlu0 %v4525, 120
  %v4733 = vpop.permute.xlu0 %4732
  %4734 = vrot.lane.b32.xlu0 %v4530, 120
  %v4735 = vpop.permute.xlu0 %4734
  %4736 = vrot.lane.b32.xlu0 %v4535, 120
  %v4737 = vpop.permute.xlu0 %4736
  %v4742 = vsub.f32 %v4520, %v4731
  %v4743 = vsub.f32 %v4525, %v4733
  %v4744 = vsub.f32 %v4530, %v4735
  %v4745 = vsub.f32 %v4535, %v4737
  %4747 = vset.pattern.permute.xlu0 16
  %4748 = vperm.xlu0 %4747, %v4726
  %v4749 = vpop.permute.xlu0 %4748
  %4752 = vset.pattern.permute.xlu0 16
  %4753 = vperm.xlu0 %4752, %v4727
  %v4754 = vpop.permute.xlu0 %4753
  %4757 = vset.pattern.permute.xlu0 16
  %4758 = vperm.xlu0 %4757, %v4728
  %v4759 = vpop.permute.xlu0 %4758
  %4762 = vset.pattern.permute.xlu0 16
  %4763 = vperm.xlu0 %4762, %v4729
  %v4764 = vpop.permute.xlu0 %4763
  %v4766 = vmul.f32 %v4749, %v4742
  %v4767 = vmul.f32 %v4754, %v4743
  %v4768 = vmul.f32 %v4759, %v4744
  %v4769 = vmul.f32 %v4764, %v4745
  %v4771 = vsel %vm241, %v4666, 0
  %v4774 = vsel %vm241, %v4667, 0
  %v4777 = vsel %vm241, %v4668, 0
  %v4780 = vsel %vm241, %v4669, 0
  %4782 = vmatprep.subr.mxu0 0.0
  %4783 = vmatpush1.msra.mxu0 %v4731
  %4784 = vmatprep.subr.mxu0 0.0
  %4785 = vmatpush1.msra.mxu0 %v4733
  %4786 = vmatprep.subr.mxu0 0.0
  %4787 = vmatpush1.msra.mxu0 %v4735
  %4788 = vmatprep.subr.mxu0 0.0
  %4789 = vmatpush1.msra.mxu0 %v4737
  %4790 = vmatprep.subr.mxu0 0.0
  %4791 = vmatpush1.msra.mxu0 0.0
  %4792 = vmatprep.subr.mxu0 0.0
  %4793 = vmatpush1.msra.mxu0 0.0
  %4794 = vmatprep.subr.mxu0 0.0
  %4795 = vmatpush1.msra.mxu0 0.0
  %4796 = vmatprep.subr.mxu0 0.0
  %4797 = vmatpush1.msra.mxu0 0.0
  %4798 = vmatprep.subr.mxu0 0.0
  %4799 = vmatpush1.msra.mxu0 0.0
  %4800 = vmatprep.subr.mxu0 0.0
  %4801 = vmatpush1.msra.mxu0 0.0
  %4802 = vmatprep.subr.mxu0 0.0
  %4803 = vmatpush1.msra.mxu0 0.0
  %4804 = vmatprep.subr.mxu0 0.0
  %4805 = vmatpush1.msra.mxu0 0.0
  %4806 = vmatprep.subr.mxu0 0.0
  %4807 = vmatpush1.msra.mxu0 0.0
  %4808 = vmatprep.subr.mxu0 0.0
  %4809 = vmatpush1.msra.mxu0 0.0
  %4810 = vmatprep.subr.mxu0 0.0
  %4811 = vmatpush1.msra.mxu0 0.0
  %4812 = vmatprep.subr.mxu0 0.0
  %4813 = vmatpush1.msra.mxu0 0.0
  %4814 = vmatprep.subr.mxu0 0.0
  %4815 = vmatpush1.msra.mxu0 0.0
  %4816 = vmatprep.subr.mxu0 0.0
  %4817 = vmatpush1.msra.mxu0 0.0
  %4818 = vmatprep.subr.mxu0 0.0
  %4819 = vmatpush1.msra.mxu0 0.0
  %4820 = vmatprep.subr.mxu0 0.0
  %4821 = vmatpush1.msra.mxu0 0.0
  %4822 = vmatprep.subr.mxu0 0.0
  %4823 = vmatpush1.msra.mxu0 0.0
  %4824 = vmatprep.subr.mxu0 0.0
  %4825 = vmatpush1.msra.mxu0 0.0
  %4826 = vmatprep.subr.mxu0 0.0
  %4827 = vmatpush1.msra.mxu0 0.0
  %4828 = vmatprep.subr.mxu0 0.0
  %4829 = vmatpush1.msra.mxu0 0.0
  %4830 = vmatprep.subr.mxu0 0.0
  %4831 = vmatpush1.msra.mxu0 0.0
  %4832 = vmatprep.subr.mxu0 0.0
  %4833 = vmatpush1.msra.mxu0 0.0
  %4834 = vmatprep.subr.mxu0 0.0
  %4835 = vmatpush1.msra.mxu0 0.0
  %4836 = vmatprep.subr.mxu0 0.0
  %4837 = vmatpush1.msra.mxu0 0.0
  %4838 = vmatprep.subr.mxu0 0.0
  %4839 = vmatpush1.msra.mxu0 0.0
  %4840 = vmatprep.subr.mxu0 0.0
  %4841 = vmatpush1.msra.mxu0 0.0
  %4842 = vmatprep.subr.mxu0 0.0
  %4843 = vmatpush1.msra.mxu0 0.0
  %4844 = vmatprep.subr.mxu0 0.0
  %4845 = vmatpush1.msra.mxu0 0.0
  %4846 = vmatprep.mubr.f32.mxu0 0.0
  %4847 = vmatmul.mubr.f32.gmra.mrb[0].mxu0 %v4771
  %v4848 = vpop.f32.mrb[0].mxu0
  %v4849 = vadd.f32 %v4766, %v4848
  %v4850 = vpop.f32.mrb[0].mxu0
  %4851 = vmatprep.mubr.f32.mxu0 0.0
  %4852 = vmatmul.mubr.f32.gmra.mrb[0].mxu0 %v4774
  %v4853 = vpop.f32.mrb[0].mxu0
  %v4854 = vadd.f32 %v4767, %v4853
  %v4855 = vpop.f32.mrb[0].mxu0
  %4856 = vmatprep.mubr.f32.mxu0 0.0
  %4857 = vmatmul.mubr.f32.gmra.mrb[0].mxu0 %v4777
  %v4858 = vpop.f32.mrb[0].mxu0
  %v4859 = vadd.f32 %v4768, %v4858
  %v4860 = vpop.f32.mrb[0].mxu0
  %4861 = vmatprep.mubr.f32.mxu0 0.0
  %4862 = vmatmul.mubr.f32.gmra.mrb[0].mxu0 %v4780
  %v4863 = vpop.f32.mrb[0].mxu0
  %v4864 = vadd.f32 %v4769, %v4863
  %v4865 = vpop.f32.mrb[0].mxu0
  %4866 = vdwg.mxu0
  %v4868 = vlaneseq
  %v4869 = vshrl.u32 %v4868, 7
  %v4870 = vsub.s32 0, %v4869
  %v4871 = vrot.slane %v4440, %v4870
  %v4873 = vadd.f32 %v4849, %v4871
  %v4874 = vadd.f32 %v4854, %v4871
  %v4875 = vadd.f32 %v4859, %v4871
  %v4876 = vadd.f32 %v4864, %v4871
  %vm4877 = vcmask 64512
  %4878 = vst.msk [vmem:[%s11] sm:$0xff] %vm4877, %v4873
  %4879 = vst.msk [vmem:[%s11 + $0x8] sm:$0xff] %vm4877, %v4874
  %4880 = vst.msk [vmem:[%s11 + $0x10] sm:$0xff] %vm4877, %v4875
  %4881 = vst.msk [vmem:[%s11 + $0x18] sm:$0xff] %vm4877, %v4876
  // Predicated region
  $region46: #{_lambda_.1} parent=0 // pred_check
    _
  $region47: #{_lambda_.1} parent=0 // pred_check_branch
    %4883 = sbr.rel (0) target = $region49
  $region48: #{_lambda_.1} parent=0 // pred_region
    _
  $region49: #{_lambda_.1} parent=0 // pred_fallthru
    _
  // Predicated region
  $region50: #{_lambda_.1} parent=0 // pred_check
    _
  $region51: #{_lambda_.1} parent=0 // pred_check_branch
    %4885 = sbr.rel (0) target = $region53
  $region52: #{_lambda_.1} parent=0 // pred_region
    _
  $region53: #{_lambda_.1} parent=0 // pred_fallthru
    _

</llo_original>
